<compile_context>
chip_gen: v6e
topology: v6e:2x2x1
jax: 0.10.0
libtpu: 0.0.40
codegen_flags: <defaults>
</compile_context>

<pallas_src>
import functools

import jax
import jax.numpy as jnp
from jax import lax
from jax.experimental import pallas as pl
from jax.experimental.pallas import tpu as pltpu

_LANE = 128
_SUBLANE = 8


def _round_up(x, m):
    return ((x + m - 1) // m) * m


# -----------------------------------------------------------------------------
# Kernel
# -----------------------------------------------------------------------------
def make_lstm_kernel(n_layers, seq_len, hidden_pad, mxu_dtype):
    T, Hp = seq_len, hidden_pad
    G = 4 * Hp

    def kernel(x_ref, h0_ref, c0_ref, *rest):
        # rest layout:
        #   per layer l: w_ih_t (in_p,4Hp), w_hh_t (Hp,4Hp), bias (1,4Hp)
        #   fc_wt (Hp,Op), fc_b (1,Op)
        #   outputs: out (Bt,Op), hn (L,Bt,Hp), cn (L,Bt,Hp)
        #   scratch: seq (T,Bt,Hp) f32, xw (T,Bt,4Hp) f32
        nl3 = 3 * n_layers
        fc_wt_ref, fc_b_ref = rest[nl3], rest[nl3 + 1]
        out_ref, hn_ref, cn_ref = rest[nl3 + 2], rest[nl3 + 3], rest[nl3 + 4]
        seq_ref, xw_ref = rest[nl3 + 5], rest[nl3 + 6]
        Bt = out_ref.shape[0]

        h_last = None
        for l in range(n_layers):
            w_ih_ref, w_hh_ref, b_ref = rest[3 * l], rest[3 * l + 1], rest[3 * l + 2]

            # ---- hoisted input projection (one big matmul, bias folded in) ----
            if l == 0:
                x_all = x_ref[...]                       # (T, Bt, Dp) f32
            else:
                x_all = seq_ref[...]                     # (T, Bt, Hp) f32
            in_dim = x_all.shape[-1]
            xw = jnp.dot(
                x_all.reshape(T * Bt, in_dim).astype(mxu_dtype),
                w_ih_ref[...],
                preferred_element_type=jnp.float32,
            ) + b_ref[...]
            xw_ref[...] = xw.reshape(T, Bt, G)

            write_seq = l < n_layers - 1  # final layer skips sequence stores

            def step(t, carry, _w_hh_ref=w_hh_ref, _write_seq=write_seq):
                h, c = carry
                # only the h @ W_hh matmul remains on the serial critical path
                gates = xw_ref[t] + jnp.dot(
                    h.astype(mxu_dtype), _w_hh_ref[...],
                    preferred_element_type=jnp.float32)
                # gate slices are whole 128-lane tiles (Hp % 128 == 0)
                i_g = jax.nn.sigmoid(gates[:, 0 * Hp:1 * Hp])
                f_g = jax.nn.sigmoid(gates[:, 1 * Hp:2 * Hp])
                g_g = jnp.tanh(gates[:, 2 * Hp:3 * Hp])
                o_g = jax.nn.sigmoid(gates[:, 3 * Hp:4 * Hp])
                c_new = f_g * c + i_g * g_g
                h_new = o_g * jnp.tanh(c_new)
                if _write_seq:
                    seq_ref[t] = h_new   # in-place OK: slot t already consumed
                return (h_new, c_new)

            h_fin, c_fin = lax.fori_loop(0, T, step, (h0_ref[l], c0_ref[l]),
                                         unroll=True)
            hn_ref[l] = h_fin
            cn_ref[l] = c_fin
            h_last = h_fin

        # out = fc(relu(h_T of last layer)) — no seq reload needed.
        relu_out = jnp.maximum(h_last, 0.0)
        out_ref[...] = (
            jnp.dot(relu_out.astype(mxu_dtype), fc_wt_ref[...],
                    preferred_element_type=jnp.float32)
            + fc_b_ref[...])

    return kernel


# -----------------------------------------------------------------------------
# pallas_call builder
# -----------------------------------------------------------------------------
def _build_forward(n_layers, T, Bp, Bt, Dp, Hp, Op, mxu_dtype):
    L = n_layers
    G = 4 * Hp

    in_specs = [
        pl.BlockSpec((T, Bt, Dp), lambda b: (0, b, 0)),   # x (time-major, padded)
        pl.BlockSpec((L, Bt, Hp), lambda b: (0, b, 0)),   # h0
        pl.BlockSpec((L, Bt, Hp), lambda b: (0, b, 0)),   # c0
    ]
    for l in range(n_layers):
        in_p = Dp if l == 0 else Hp
        in_specs += [
            pl.BlockSpec((in_p, G), lambda b: (0, 0)),    # W_ih^T (gate-padded)
            pl.BlockSpec((Hp, G), lambda b: (0, 0)),      # W_hh^T (gate-padded)
            pl.BlockSpec((1, G), lambda b: (0, 0)),       # b_ih + b_hh
        ]
    in_specs += [
        pl.BlockSpec((Hp, Op), lambda b: (0, 0)),         # fc_w^T
        pl.BlockSpec((1, Op), lambda b: (0, 0)),          # fc_b
    ]
    out_specs = (
        pl.BlockSpec((Bt, Op), lambda b: (b, 0)),
        pl.BlockSpec((L, Bt, Hp), lambda b: (0, b, 0)),
        pl.BlockSpec((L, Bt, Hp), lambda b: (0, b, 0)),
    )
    out_shape = (
        jax.ShapeDtypeStruct((Bp, Op), jnp.float32),
        jax.ShapeDtypeStruct((L, Bp, Hp), jnp.float32),
        jax.ShapeDtypeStruct((L, Bp, Hp), jnp.float32),
    )
    scratch_shapes = [
        pltpu.VMEM((T, Bt, Hp), jnp.float32),   # seq: layer output sequence
        pltpu.VMEM((T, Bt, G), jnp.float32),    # xw: hoisted X @ W_ih + bias
    ]
    return pl.pallas_call(
        make_lstm_kernel(n_layers, T, Hp, mxu_dtype),
        out_shape=out_shape,
        grid_spec=pltpu.PrefetchScalarGridSpec(
            num_scalar_prefetch=0,
            grid=(Bp // Bt,),
            in_specs=in_specs,
            out_specs=out_specs,
            scratch_shapes=scratch_shapes,
        ),
        compiler_params=pltpu.CompilerParams(
            dimension_semantics=("parallel",),
            vmem_limit_bytes=32 * 1024 * 1024,
        ),
    )


# -----------------------------------------------------------------------------
# Parameter packing (done ONCE, outside the jitted hot path)
# -----------------------------------------------------------------------------
def _pack_gate_weight(w, in_p, H, Hp, dtype):
    """w: (4H, in) torch layout -> transposed, per-gate lane-padded (in_p, 4*Hp)."""
    in_dim = w.shape[1]
    w3 = w.T.reshape(in_dim, 4, H)
    w3 = jnp.pad(w3, ((0, in_p - in_dim), (0, 0), (0, Hp - H)))
    return w3.reshape(in_p, 4 * Hp).astype(dtype)


def _pack_gate_bias(b_ih, b_hh, H, Hp):
    b = (b_ih + b_hh).reshape(4, H)
    b = jnp.pad(b, ((0, 0), (0, Hp - H)))
    return b.reshape(1, 4 * Hp).astype(jnp.float32)


def pack_params(params, input_dim, hidden_dim, output_dim, n_layers,
                mxu_dtype=jnp.bfloat16):
    H, O = hidden_dim, output_dim
    Hp = _round_up(H, _LANE)
    Op = _round_up(O, _LANE)
    Dp = _round_up(input_dim, _LANE)
    packed = []
    for l in range(n_layers):
        in_p = Dp if l == 0 else Hp
        packed.append(_pack_gate_weight(params[f"w_ih_{l}"], in_p, H, Hp, mxu_dtype))
        packed.append(_pack_gate_weight(params[f"w_hh_{l}"], Hp, H, Hp, mxu_dtype))
        packed.append(_pack_gate_bias(params[f"b_ih_{l}"], params[f"b_hh_{l}"], H, Hp))
    packed.append(
        jnp.pad(params["fc_w"].T, ((0, Hp - H), (0, Op - O))).astype(mxu_dtype))
    packed.append(
        jnp.pad(params["fc_b"], (0, Op - O)).reshape(1, Op).astype(jnp.float32))
    return packed


# -----------------------------------------------------------------------------
# Public forward (jitted)
# -----------------------------------------------------------------------------
@functools.partial(jax.jit, static_argnames=(
    "n_layers", "hidden_dim", "output_dim", "mxu_dtype", "batch_tile"))
def lstm_net_forward(x, h, packed_params, *, n_layers, hidden_dim, output_dim,
                     mxu_dtype=jnp.bfloat16, batch_tile=8):
    """x: (B, T, input_dim) batch_first (PyTorch convention). h = (h0, c0)."""
    h0, c0 = h
    B, T, D = x.shape
    H, O = hidden_dim, output_dim
    Hp = _round_up(H, _LANE)
    Op = _round_up(O, _LANE)
    Dp = _round_up(D, _LANE)
    Bp = _round_up(B, batch_tile)

    x_tm = jnp.transpose(x, (1, 0, 2)).astype(jnp.float32)          # (T, B, D)
    x_tm = jnp.pad(x_tm, ((0, 0), (0, Bp - B), (0, Dp - D)))
    h0p = jnp.pad(h0.astype(jnp.float32), ((0, 0), (0, Bp - B), (0, Hp - H)))
    c0p = jnp.pad(c0.astype(jnp.float32), ((0, 0), (0, Bp - B), (0, Hp - H)))

    fwd = _build_forward(n_layers, T, Bp, batch_tile, Dp, Hp, Op, mxu_dtype)
    out_p, hn_p, cn_p = fwd(x_tm, h0p, c0p, *packed_params)

    out = out_p[:B, :O]
    hn = hn_p[:, :B, :H]
    cn = cn_p[:, :B, :H]
    return out, (hn, cn)


# -----------------------------------------------------------------------------
# Pure-JAX reference (same math as torch.nn.LSTM eval + Linear)
# -----------------------------------------------------------------------------
def reference_forward(x, h, params, n_layers, hidden_dim, output_dim):
    h0, c0 = h
    B, T, _ = x.shape
    H = hidden_dim
    layer_in = x.astype(jnp.float32)
    hn_list, cn_list = [], []
    for l in range(n_layers):
        w_ih = params[f"w_ih_{l}"].T
        w_hh = params[f"w_hh_{l}"].T
        b = (params[f"b_ih_{l}"] + params[f"b_hh_{l}"])[None, :]
        hcur, ccur = h0[l], c0[l]
        outs = []
        for t in range(T):
            gates = layer_in[:, t, :] @ w_ih + hcur @ w_hh + b
            i_g = jax.nn.sigmoid(gates[:, 0:H])
            f_g = jax.nn.sigmoid(gates[:, H:2 * H])
            g_g = jnp.tanh(gates[:, 2 * H:3 * H])
            o_g = jax.nn.sigmoid(gates[:, 3 * H:4 * H])
            ccur = f_g * ccur + i_g * g_g
            hcur = o_g * jnp.tanh(ccur)
            outs.append(hcur)
        layer_in = jnp.stack(outs, axis=1)
        hn_list.append(hcur)
        cn_list.append(ccur)
    last = jnp.maximum(layer_in[:, -1], 0.0)
    out = last @ params["fc_w"].T + params["fc_b"]
    return out, (jnp.stack(hn_list), jnp.stack(cn_list))


def init_params(key, input_dim, hidden_dim, output_dim, n_layers):
    """Deterministic PyTorch-style uniform(-1/sqrt(H), 1/sqrt(H)) init."""
    H = hidden_dim
    bound = 1.0 / jnp.sqrt(H)
    params = {}
    for l in range(n_layers):
        in_dim = input_dim if l == 0 else H
        key, k1, k2, k3, k4 = jax.random.split(key, 5)
        params[f"w_ih_{l}"] = jax.random.uniform(k1, (4 * H, in_dim), jnp.float32, -bound, bound)
        params[f"w_hh_{l}"] = jax.random.uniform(k2, (4 * H, H), jnp.float32, -bound, bound)
        params[f"b_ih_{l}"] = jax.random.uniform(k3, (4 * H,), jnp.float32, -bound, bound)
        params[f"b_hh_{l}"] = jax.random.uniform(k4, (4 * H,), jnp.float32, -bound, bound)
    key, k1, k2 = jax.random.split(key, 3)
    fc_bound = 1.0 / jnp.sqrt(H)
    params["fc_w"] = jax.random.uniform(k1, (output_dim, H), jnp.float32, -fc_bound, fc_bound)
    params["fc_b"] = jax.random.uniform(k2, (output_dim,), jnp.float32, -fc_bound, fc_bound)
    return params


if __name__ == "__main__":
    input_dim, hidden_dim, output_dim, n_layers = 16, 32, 4, 2
    batch, seq = 2, 8

    key = jax.random.PRNGKey(0)
    key, kx = jax.random.split(key)
    x = jax.random.normal(kx, (batch, seq, input_dim), jnp.float32)
    # init_hidden: zeros
    h0 = jnp.zeros((n_layers, batch, hidden_dim), jnp.float32)
    c0 = jnp.zeros((n_layers, batch, hidden_dim), jnp.float32)
    params = init_params(key, input_dim, hidden_dim, output_dim, n_layers)

    ref_out, (ref_hn, ref_cn) = reference_forward(
        x, (h0, c0), params, n_layers, hidden_dim, output_dim)

    # ---- f32 MXU path: must match the f32 reference tightly ----
    packed_f32 = pack_params(params, input_dim, hidden_dim, output_dim, n_layers,
                             mxu_dtype=jnp.float32)
    out32, (hn32, cn32) = lstm_net_forward(
        x, (h0, c0), packed_f32, n_layers=n_layers, hidden_dim=hidden_dim,
        output_dim=output_dim, mxu_dtype=jnp.float32)
    jax.block_until_ready((out32, hn32, cn32))
    assert jnp.allclose(out32, ref_out, atol=1e-4, rtol=1e-4)
    assert jnp.allclose(hn32, ref_hn, atol=1e-4, rtol=1e-4)
    assert jnp.allclose(cn32, ref_cn, atol=1e-4, rtol=1e-4)

    # ---- bf16 MXU path (default; f32 accumulation): looser tolerance ----
    packed_bf16 = pack_params(params, input_dim, hidden_dim, output_dim, n_layers,
                              mxu_dtype=jnp.bfloat16)
    out16, (hn16, cn16) = lstm_net_forward(
        x, (h0, c0), packed_bf16, n_layers=n_layers, hidden_dim=hidden_dim,
        output_dim=output_dim, mxu_dtype=jnp.bfloat16)
    jax.block_until_ready((out16, hn16, cn16))
    assert jnp.allclose(out16, ref_out, atol=5e-2, rtol=5e-2)
    assert jnp.allclose(hn16, ref_hn, atol=5e-2, rtol=5e-2)
    assert jnp.allclose(cn16, ref_cn, atol=5e-2, rtol=5e-2)

    print("KERNEL_OK")
</pallas_src>

<mosaic_0001>
module attributes {stable_mosaic.version = 11 : i64} {
  func.func @kernel(%arg0: i32, %arg1: memref<8x8x128xf32, #tpu.memory_space<vmem>>, %arg2: memref<2x8x128xf32, #tpu.memory_space<vmem>>, %arg3: memref<2x8x128xf32, #tpu.memory_space<vmem>>, %arg4: memref<128x512xf32, #tpu.memory_space<vmem>>, %arg5: memref<128x512xf32, #tpu.memory_space<vmem>>, %arg6: memref<1x512xf32, #tpu.memory_space<vmem>>, %arg7: memref<128x512xf32, #tpu.memory_space<vmem>>, %arg8: memref<128x512xf32, #tpu.memory_space<vmem>>, %arg9: memref<1x512xf32, #tpu.memory_space<vmem>>, %arg10: memref<128x128xf32, #tpu.memory_space<vmem>>, %arg11: memref<1x128xf32, #tpu.memory_space<vmem>>, %arg12: memref<8x128xf32, #tpu.memory_space<vmem>>, %arg13: memref<2x8x128xf32, #tpu.memory_space<vmem>>, %arg14: memref<2x8x128xf32, #tpu.memory_space<vmem>>, %arg15: memref<8x8x128xf32, #tpu.memory_space<vmem>>, %arg16: memref<8x8x512xf32, #tpu.memory_space<vmem>>) attributes {dimension_semantics = [#tpu.dimension_semantics<parallel>], iteration_bounds = array<i64: 1>, scalar_prefetch = 0 : i64, scratch_operands = 2 : i64, tpu.core_type = #tpu.core_type<tc>, window_params = [{transform_indices = @transform_0, window_bounds = array<i64: 8, 8, 128>}, {transform_indices = @transform_1, window_bounds = array<i64: 2, 8, 128>}, {transform_indices = @transform_2, window_bounds = array<i64: 2, 8, 128>}, {pipeline_mode = #tpu.pipeline_mode<synchronous>, transform_indices = @transform_3, window_bounds = array<i64: 128, 512>}, {pipeline_mode = #tpu.pipeline_mode<synchronous>, transform_indices = @transform_4, window_bounds = array<i64: 128, 512>}, {pipeline_mode = #tpu.pipeline_mode<synchronous>, transform_indices = @transform_5, window_bounds = array<i64: 1, 512>}, {pipeline_mode = #tpu.pipeline_mode<synchronous>, transform_indices = @transform_6, window_bounds = array<i64: 128, 512>}, {pipeline_mode = #tpu.pipeline_mode<synchronous>, transform_indices = @transform_7, window_bounds = array<i64: 128, 512>}, {pipeline_mode = #tpu.pipeline_mode<synchronous>, transform_indices = @transform_8, window_bounds = array<i64: 1, 512>}, {pipeline_mode = #tpu.pipeline_mode<synchronous>, transform_indices = @transform_9, window_bounds = array<i64: 128, 128>}, {pipeline_mode = #tpu.pipeline_mode<synchronous>, transform_indices = @transform_10, window_bounds = array<i64: 1, 128>}, {transform_indices = @transform_11, window_bounds = array<i64: 8, 128>}, {transform_indices = @transform_12, window_bounds = array<i64: 2, 8, 128>}, {transform_indices = @transform_13, window_bounds = array<i64: 2, 8, 128>}]} {
    %c0 = arith.constant 0 : index
    %c0_0 = arith.constant 0 : index
    %c0_1 = arith.constant 0 : index
    %0 = vector.load %arg1[%c0, %c0_0, %c0_1] : memref<8x8x128xf32, #tpu.memory_space<vmem>>, vector<8x8x128xf32>
    %1 = vector.shape_cast %0 : vector<8x8x128xf32> to vector<64x128xf32>
    %c0_2 = arith.constant 0 : index
    %c0_3 = arith.constant 0 : index
    %2 = vector.load %arg4[%c0_2, %c0_3] : memref<128x512xf32, #tpu.memory_space<vmem>>, vector<128x512xf32>
    %cst = arith.constant dense<0.000000e+00> : vector<64x512xf32>
    %3 = tpu.matmul %1, %2, %cst {dimension_numbers = #tpu.dot_dimension_numbers<[1], [0], [0], [1], [0, 0, 1, 1], [], []>} : vector<64x128xf32>, vector<128x512xf32>, vector<64x512xf32> -> vector<64x512xf32>
    %c0_4 = arith.constant 0 : index
    %c0_5 = arith.constant 0 : index
    %4 = vector.load %arg6[%c0_4, %c0_5] : memref<1x512xf32, #tpu.memory_space<vmem>>, vector<1x512xf32>
    %5 = vector.broadcast %4 : vector<1x512xf32> to vector<64x512xf32>
    %6 = arith.addf %3, %5 : vector<64x512xf32>
    %7 = vector.shape_cast %6 : vector<64x512xf32> to vector<8x8x512xf32>
    %c0_6 = arith.constant 0 : index
    %c0_7 = arith.constant 0 : index
    %c0_8 = arith.constant 0 : index
    %8 = vector.load %arg16[%c0_6, %c0_7, %c0_8] : memref<8x8x512xf32, #tpu.memory_space<vmem>>, vector<8x8x512xf32>
    tpu.vector_store %arg16[%c0_6, %c0_7, %c0_8], %7 {strides = array<i32>} : memref<8x8x512xf32, #tpu.memory_space<vmem>>, vector<8x8x512xf32>,
    %c0_9 = arith.constant 0 : index
    %c0_10 = arith.constant 0 : index
    %c0_11 = arith.constant 0 : index
    %9 = vector.load %arg2[%c0_9, %c0_10, %c0_11] : memref<2x8x128xf32, #tpu.memory_space<vmem>>, vector<1x8x128xf32>
    %10 = vector.shape_cast %9 : vector<1x8x128xf32> to vector<8x128xf32>
    %c0_12 = arith.constant 0 : index
    %c0_13 = arith.constant 0 : index
    %c0_14 = arith.constant 0 : index
    %11 = vector.load %arg3[%c0_12, %c0_13, %c0_14] : memref<2x8x128xf32, #tpu.memory_space<vmem>>, vector<1x8x128xf32>
    %12 = vector.shape_cast %11 : vector<1x8x128xf32> to vector<8x128xf32>
    %c0_i32 = arith.constant 0 : i32
    %13 = arith.index_cast %c0_i32 : i32 to index
    %c0_15 = arith.constant 0 : index
    %c0_16 = arith.constant 0 : index
    %14 = vector.load %arg16[%13, %c0_15, %c0_16] : memref<8x8x512xf32, #tpu.memory_space<vmem>>, vector<1x8x512xf32>
    %15 = vector.shape_cast %14 : vector<1x8x512xf32> to vector<8x512xf32>
    %c0_17 = arith.constant 0 : index
    %c0_18 = arith.constant 0 : index
    %16 = vector.load %arg5[%c0_17, %c0_18] : memref<128x512xf32, #tpu.memory_space<vmem>>, vector<128x512xf32>
    %cst_19 = arith.constant dense<0.000000e+00> : vector<8x512xf32>
    %17 = tpu.matmul %10, %16, %cst_19 {dimension_numbers = #tpu.dot_dimension_numbers<[1], [0], [0], [1], [0, 0, 1, 1], [], []>} : vector<8x128xf32>, vector<128x512xf32>, vector<8x512xf32> -> vector<8x512xf32>
    %18 = arith.addf %15, %17 : vector<8x512xf32>
    %19 = vector.extract_strided_slice %18 {offsets = [0, 0], sizes = [8, 128], strides = [1, 1]} : vector<8x512xf32> to vector<8x128xf32>
    %20 = arith.negf %19 : vector<8x128xf32>
    %21 = math.exp %20 : vector<8x128xf32>
    %cst_20 = arith.constant 1.000000e+00 : f32
    %22 = vector.broadcast %cst_20 : f32 to vector<8x128xf32>
    %23 = arith.addf %22, %21 : vector<8x128xf32>
    %24 = arith.divf %22, %23 : vector<8x128xf32>
    %25 = vector.extract_strided_slice %18 {offsets = [0, 128], sizes = [8, 128], strides = [1, 1]} : vector<8x512xf32> to vector<8x128xf32>
    %26 = arith.negf %25 : vector<8x128xf32>
    %27 = math.exp %26 : vector<8x128xf32>
    %cst_21 = arith.constant 1.000000e+00 : f32
    %28 = vector.broadcast %cst_21 : f32 to vector<8x128xf32>
    %29 = arith.addf %28, %27 : vector<8x128xf32>
    %30 = arith.divf %28, %29 : vector<8x128xf32>
    %31 = vector.extract_strided_slice %18 {offsets = [0, 256], sizes = [8, 128], strides = [1, 1]} : vector<8x512xf32> to vector<8x128xf32>
    %32 = math.tanh %31 : vector<8x128xf32>
    %33 = vector.extract_strided_slice %18 {offsets = [0, 384], sizes = [8, 128], strides = [1, 1]} : vector<8x512xf32> to vector<8x128xf32>
    %34 = arith.negf %33 : vector<8x128xf32>
    %35 = math.exp %34 : vector<8x128xf32>
    %cst_22 = arith.constant 1.000000e+00 : f32
    %36 = vector.broadcast %cst_22 : f32 to vector<8x128xf32>
    %37 = arith.addf %36, %35 : vector<8x128xf32>
    %38 = arith.divf %36, %37 : vector<8x128xf32>
    %39 = arith.mulf %30, %12 : vector<8x128xf32>
    %40 = arith.mulf %24, %32 : vector<8x128xf32>
    %41 = arith.addf %39, %40 : vector<8x128xf32>
    %42 = math.tanh %41 : vector<8x128xf32>
    %43 = arith.mulf %38, %42 : vector<8x128xf32>
    %44 = arith.index_cast %c0_i32 : i32 to index
    %c0_23 = arith.constant 0 : index
    %c0_24 = arith.constant 0 : index
    %45 = vector.load %arg15[%44, %c0_23, %c0_24] : memref<8x8x128xf32, #tpu.memory_space<vmem>>, vector<1x8x128xf32>
    %46 = vector.shape_cast %45 : vector<1x8x128xf32> to vector<8x128xf32>
    %47 = vector.shape_cast %43 : vector<8x128xf32> to vector<1x8x128xf32>
    tpu.vector_store %arg15[%44, %c0_23, %c0_24], %47 {strides = array<i32>} : memref<8x8x128xf32, #tpu.memory_space<vmem>>, vector<1x8x128xf32>,
    %c1_i32 = arith.constant 1 : i32
    %48 = arith.index_cast %c1_i32 : i32 to index
    %c0_25 = arith.constant 0 : index
    %c0_26 = arith.constant 0 : index
    %49 = vector.load %arg16[%48, %c0_25, %c0_26] : memref<8x8x512xf32, #tpu.memory_space<vmem>>, vector<1x8x512xf32>
    %50 = vector.shape_cast %49 : vector<1x8x512xf32> to vector<8x512xf32>
    %c0_27 = arith.constant 0 : index
    %c0_28 = arith.constant 0 : index
    %51 = vector.load %arg5[%c0_27, %c0_28] : memref<128x512xf32, #tpu.memory_space<vmem>>, vector<128x512xf32>
    %cst_29 = arith.constant dense<0.000000e+00> : vector<8x512xf32>
    %52 = tpu.matmul %43, %51, %cst_29 {dimension_numbers = #tpu.dot_dimension_numbers<[1], [0], [0], [1], [0, 0, 1, 1], [], []>} : vector<8x128xf32>, vector<128x512xf32>, vector<8x512xf32> -> vector<8x512xf32>
    %53 = arith.addf %50, %52 : vector<8x512xf32>
    %54 = vector.extract_strided_slice %53 {offsets = [0, 0], sizes = [8, 128], strides = [1, 1]} : vector<8x512xf32> to vector<8x128xf32>
    %55 = arith.negf %54 : vector<8x128xf32>
    %56 = math.exp %55 : vector<8x128xf32>
    %cst_30 = arith.constant 1.000000e+00 : f32
    %57 = vector.broadcast %cst_30 : f32 to vector<8x128xf32>
    %58 = arith.addf %57, %56 : vector<8x128xf32>
    %59 = arith.divf %57, %58 : vector<8x128xf32>
    %60 = vector.extract_strided_slice %53 {offsets = [0, 128], sizes = [8, 128], strides = [1, 1]} : vector<8x512xf32> to vector<8x128xf32>
    %61 = arith.negf %60 : vector<8x128xf32>
    %62 = math.exp %61 : vector<8x128xf32>
    %cst_31 = arith.constant 1.000000e+00 : f32
    %63 = vector.broadcast %cst_31 : f32 to vector<8x128xf32>
    %64 = arith.addf %63, %62 : vector<8x128xf32>
    %65 = arith.divf %63, %64 : vector<8x128xf32>
    %66 = vector.extract_strided_slice %53 {offsets = [0, 256], sizes = [8, 128], strides = [1, 1]} : vector<8x512xf32> to vector<8x128xf32>
    %67 = math.tanh %66 : vector<8x128xf32>
    %68 = vector.extract_strided_slice %53 {offsets = [0, 384], sizes = [8, 128], strides = [1, 1]} : vector<8x512xf32> to vector<8x128xf32>
    %69 = arith.negf %68 : vector<8x128xf32>
    %70 = math.exp %69 : vector<8x128xf32>
    %cst_32 = arith.constant 1.000000e+00 : f32
    %71 = vector.broadcast %cst_32 : f32 to vector<8x128xf32>
    %72 = arith.addf %71, %70 : vector<8x128xf32>
    %73 = arith.divf %71, %72 : vector<8x128xf32>
    %74 = arith.mulf %65, %41 : vector<8x128xf32>
    %75 = arith.mulf %59, %67 : vector<8x128xf32>
    %76 = arith.addf %74, %75 : vector<8x128xf32>
    %77 = math.tanh %76 : vector<8x128xf32>
    %78 = arith.mulf %73, %77 : vector<8x128xf32>
    %79 = arith.index_cast %c1_i32 : i32 to index
    %c0_33 = arith.constant 0 : index
    %c0_34 = arith.constant 0 : index
    %80 = vector.load %arg15[%79, %c0_33, %c0_34] : memref<8x8x128xf32, #tpu.memory_space<vmem>>, vector<1x8x128xf32>
    %81 = vector.shape_cast %80 : vector<1x8x128xf32> to vector<8x128xf32>
    %82 = vector.shape_cast %78 : vector<8x128xf32> to vector<1x8x128xf32>
    tpu.vector_store %arg15[%79, %c0_33, %c0_34], %82 {strides = array<i32>} : memref<8x8x128xf32, #tpu.memory_space<vmem>>, vector<1x8x128xf32>,
    %c2_i32 = arith.constant 2 : i32
    %83 = arith.index_cast %c2_i32 : i32 to index
    %c0_35 = arith.constant 0 : index
    %c0_36 = arith.constant 0 : index
    %84 = vector.load %arg16[%83, %c0_35, %c0_36] : memref<8x8x512xf32, #tpu.memory_space<vmem>>, vector<1x8x512xf32>
    %85 = vector.shape_cast %84 : vector<1x8x512xf32> to vector<8x512xf32>
    %c0_37 = arith.constant 0 : index
    %c0_38 = arith.constant 0 : index
    %86 = vector.load %arg5[%c0_37, %c0_38] : memref<128x512xf32, #tpu.memory_space<vmem>>, vector<128x512xf32>
    %cst_39 = arith.constant dense<0.000000e+00> : vector<8x512xf32>
    %87 = tpu.matmul %78, %86, %cst_39 {dimension_numbers = #tpu.dot_dimension_numbers<[1], [0], [0], [1], [0, 0, 1, 1], [], []>} : vector<8x128xf32>, vector<128x512xf32>, vector<8x512xf32> -> vector<8x512xf32>
    %88 = arith.addf %85, %87 : vector<8x512xf32>
    %89 = vector.extract_strided_slice %88 {offsets = [0, 0], sizes = [8, 128], strides = [1, 1]} : vector<8x512xf32> to vector<8x128xf32>
    %90 = arith.negf %89 : vector<8x128xf32>
    %91 = math.exp %90 : vector<8x128xf32>
    %cst_40 = arith.constant 1.000000e+00 : f32
    %92 = vector.broadcast %cst_40 : f32 to vector<8x128xf32>
    %93 = arith.addf %92, %91 : vector<8x128xf32>
    %94 = arith.divf %92, %93 : vector<8x128xf32>
    %95 = vector.extract_strided_slice %88 {offsets = [0, 128], sizes = [8, 128], strides = [1, 1]} : vector<8x512xf32> to vector<8x128xf32>
    %96 = arith.negf %95 : vector<8x128xf32>
    %97 = math.exp %96 : vector<8x128xf32>
    %cst_41 = arith.constant 1.000000e+00 : f32
    %98 = vector.broadcast %cst_41 : f32 to vector<8x128xf32>
    %99 = arith.addf %98, %97 : vector<8x128xf32>
    %100 = arith.divf %98, %99 : vector<8x128xf32>
    %101 = vector.extract_strided_slice %88 {offsets = [0, 256], sizes = [8, 128], strides = [1, 1]} : vector<8x512xf32> to vector<8x128xf32>
    %102 = math.tanh %101 : vector<8x128xf32>
    %103 = vector.extract_strided_slice %88 {offsets = [0, 384], sizes = [8, 128], strides = [1, 1]} : vector<8x512xf32> to vector<8x128xf32>
    %104 = arith.negf %103 : vector<8x128xf32>
    %105 = math.exp %104 : vector<8x128xf32>
    %cst_42 = arith.constant 1.000000e+00 : f32
    %106 = vector.broadcast %cst_42 : f32 to vector<8x128xf32>
    %107 = arith.addf %106, %105 : vector<8x128xf32>
    %108 = arith.divf %106, %107 : vector<8x128xf32>
    %109 = arith.mulf %100, %76 : vector<8x128xf32>
    %110 = arith.mulf %94, %102 : vector<8x128xf32>
    %111 = arith.addf %109, %110 : vector<8x128xf32>
    %112 = math.tanh %111 : vector<8x128xf32>
    %113 = arith.mulf %108, %112 : vector<8x128xf32>
    %114 = arith.index_cast %c2_i32 : i32 to index
    %c0_43 = arith.constant 0 : index
    %c0_44 = arith.constant 0 : index
    %115 = vector.load %arg15[%114, %c0_43, %c0_44] : memref<8x8x128xf32, #tpu.memory_space<vmem>>, vector<1x8x128xf32>
    %116 = vector.shape_cast %115 : vector<1x8x128xf32> to vector<8x128xf32>
    %117 = vector.shape_cast %113 : vector<8x128xf32> to vector<1x8x128xf32>
    tpu.vector_store %arg15[%114, %c0_43, %c0_44], %117 {strides = array<i32>} : memref<8x8x128xf32, #tpu.memory_space<vmem>>, vector<1x8x128xf32>,
    %c3_i32 = arith.constant 3 : i32
    %118 = arith.index_cast %c3_i32 : i32 to index
    %c0_45 = arith.constant 0 : index
    %c0_46 = arith.constant 0 : index
    %119 = vector.load %arg16[%118, %c0_45, %c0_46] : memref<8x8x512xf32, #tpu.memory_space<vmem>>, vector<1x8x512xf32>
    %120 = vector.shape_cast %119 : vector<1x8x512xf32> to vector<8x512xf32>
    %c0_47 = arith.constant 0 : index
    %c0_48 = arith.constant 0 : index
    %121 = vector.load %arg5[%c0_47, %c0_48] : memref<128x512xf32, #tpu.memory_space<vmem>>, vector<128x512xf32>
    %cst_49 = arith.constant dense<0.000000e+00> : vector<8x512xf32>
    %122 = tpu.matmul %113, %121, %cst_49 {dimension_numbers = #tpu.dot_dimension_numbers<[1], [0], [0], [1], [0, 0, 1, 1], [], []>} : vector<8x128xf32>, vector<128x512xf32>, vector<8x512xf32> -> vector<8x512xf32>
    %123 = arith.addf %120, %122 : vector<8x512xf32>
    %124 = vector.extract_strided_slice %123 {offsets = [0, 0], sizes = [8, 128], strides = [1, 1]} : vector<8x512xf32> to vector<8x128xf32>
    %125 = arith.negf %124 : vector<8x128xf32>
    %126 = math.exp %125 : vector<8x128xf32>
    %cst_50 = arith.constant 1.000000e+00 : f32
    %127 = vector.broadcast %cst_50 : f32 to vector<8x128xf32>
    %128 = arith.addf %127, %126 : vector<8x128xf32>
    %129 = arith.divf %127, %128 : vector<8x128xf32>
    %130 = vector.extract_strided_slice %123 {offsets = [0, 128], sizes = [8, 128], strides = [1, 1]} : vector<8x512xf32> to vector<8x128xf32>
    %131 = arith.negf %130 : vector<8x128xf32>
    %132 = math.exp %131 : vector<8x128xf32>
    %cst_51 = arith.constant 1.000000e+00 : f32
    %133 = vector.broadcast %cst_51 : f32 to vector<8x128xf32>
    %134 = arith.addf %133, %132 : vector<8x128xf32>
    %135 = arith.divf %133, %134 : vector<8x128xf32>
    %136 = vector.extract_strided_slice %123 {offsets = [0, 256], sizes = [8, 128], strides = [1, 1]} : vector<8x512xf32> to vector<8x128xf32>
    %137 = math.tanh %136 : vector<8x128xf32>
    %138 = vector.extract_strided_slice %123 {offsets = [0, 384], sizes = [8, 128], strides = [1, 1]} : vector<8x512xf32> to vector<8x128xf32>
    %139 = arith.negf %138 : vector<8x128xf32>
    %140 = math.exp %139 : vector<8x128xf32>
    %cst_52 = arith.constant 1.000000e+00 : f32
    %141 = vector.broadcast %cst_52 : f32 to vector<8x128xf32>
    %142 = arith.addf %141, %140 : vector<8x128xf32>
    %143 = arith.divf %141, %142 : vector<8x128xf32>
    %144 = arith.mulf %135, %111 : vector<8x128xf32>
    %145 = arith.mulf %129, %137 : vector<8x128xf32>
    %146 = arith.addf %144, %145 : vector<8x128xf32>
    %147 = math.tanh %146 : vector<8x128xf32>
    %148 = arith.mulf %143, %147 : vector<8x128xf32>
    %149 = arith.index_cast %c3_i32 : i32 to index
    %c0_53 = arith.constant 0 : index
    %c0_54 = arith.constant 0 : index
    %150 = vector.load %arg15[%149, %c0_53, %c0_54] : memref<8x8x128xf32, #tpu.memory_space<vmem>>, vector<1x8x128xf32>
    %151 = vector.shape_cast %150 : vector<1x8x128xf32> to vector<8x128xf32>
    %152 = vector.shape_cast %148 : vector<8x128xf32> to vector<1x8x128xf32>
    tpu.vector_store %arg15[%149, %c0_53, %c0_54], %152 {strides = array<i32>} : memref<8x8x128xf32, #tpu.memory_space<vmem>>, vector<1x8x128xf32>,
    %c4_i32 = arith.constant 4 : i32
    %153 = arith.index_cast %c4_i32 : i32 to index
    %c0_55 = arith.constant 0 : index
    %c0_56 = arith.constant 0 : index
    %154 = vector.load %arg16[%153, %c0_55, %c0_56] : memref<8x8x512xf32, #tpu.memory_space<vmem>>, vector<1x8x512xf32>
    %155 = vector.shape_cast %154 : vector<1x8x512xf32> to vector<8x512xf32>
    %c0_57 = arith.constant 0 : index
    %c0_58 = arith.constant 0 : index
    %156 = vector.load %arg5[%c0_57, %c0_58] : memref<128x512xf32, #tpu.memory_space<vmem>>, vector<128x512xf32>
    %cst_59 = arith.constant dense<0.000000e+00> : vector<8x512xf32>
    %157 = tpu.matmul %148, %156, %cst_59 {dimension_numbers = #tpu.dot_dimension_numbers<[1], [0], [0], [1], [0, 0, 1, 1], [], []>} : vector<8x128xf32>, vector<128x512xf32>, vector<8x512xf32> -> vector<8x512xf32>
    %158 = arith.addf %155, %157 : vector<8x512xf32>
    %159 = vector.extract_strided_slice %158 {offsets = [0, 0], sizes = [8, 128], strides = [1, 1]} : vector<8x512xf32> to vector<8x128xf32>
    %160 = arith.negf %159 : vector<8x128xf32>
    %161 = math.exp %160 : vector<8x128xf32>
    %cst_60 = arith.constant 1.000000e+00 : f32
    %162 = vector.broadcast %cst_60 : f32 to vector<8x128xf32>
    %163 = arith.addf %162, %161 : vector<8x128xf32>
    %164 = arith.divf %162, %163 : vector<8x128xf32>
    %165 = vector.extract_strided_slice %158 {offsets = [0, 128], sizes = [8, 128], strides = [1, 1]} : vector<8x512xf32> to vector<8x128xf32>
    %166 = arith.negf %165 : vector<8x128xf32>
    %167 = math.exp %166 : vector<8x128xf32>
    %cst_61 = arith.constant 1.000000e+00 : f32
    %168 = vector.broadcast %cst_61 : f32 to vector<8x128xf32>
    %169 = arith.addf %168, %167 : vector<8x128xf32>
    %170 = arith.divf %168, %169 : vector<8x128xf32>
    %171 = vector.extract_strided_slice %158 {offsets = [0, 256], sizes = [8, 128], strides = [1, 1]} : vector<8x512xf32> to vector<8x128xf32>
    %172 = math.tanh %171 : vector<8x128xf32>
    %173 = vector.extract_strided_slice %158 {offsets = [0, 384], sizes = [8, 128], strides = [1, 1]} : vector<8x512xf32> to vector<8x128xf32>
    %174 = arith.negf %173 : vector<8x128xf32>
    %175 = math.exp %174 : vector<8x128xf32>
    %cst_62 = arith.constant 1.000000e+00 : f32
    %176 = vector.broadcast %cst_62 : f32 to vector<8x128xf32>
    %177 = arith.addf %176, %175 : vector<8x128xf32>
    %178 = arith.divf %176, %177 : vector<8x128xf32>
    %179 = arith.mulf %170, %146 : vector<8x128xf32>
    %180 = arith.mulf %164, %172 : vector<8x128xf32>
    %181 = arith.addf %179, %180 : vector<8x128xf32>
    %182 = math.tanh %181 : vector<8x128xf32>
    %183 = arith.mulf %178, %182 : vector<8x128xf32>
    %184 = arith.index_cast %c4_i32 : i32 to index
    %c0_63 = arith.constant 0 : index
    %c0_64 = arith.constant 0 : index
    %185 = vector.load %arg15[%184, %c0_63, %c0_64] : memref<8x8x128xf32, #tpu.memory_space<vmem>>, vector<1x8x128xf32>
    %186 = vector.shape_cast %185 : vector<1x8x128xf32> to vector<8x128xf32>
    %187 = vector.shape_cast %183 : vector<8x128xf32> to vector<1x8x128xf32>
    tpu.vector_store %arg15[%184, %c0_63, %c0_64], %187 {strides = array<i32>} : memref<8x8x128xf32, #tpu.memory_space<vmem>>, vector<1x8x128xf32>,
    %c5_i32 = arith.constant 5 : i32
    %188 = arith.index_cast %c5_i32 : i32 to index
    %c0_65 = arith.constant 0 : index
    %c0_66 = arith.constant 0 : index
    %189 = vector.load %arg16[%188, %c0_65, %c0_66] : memref<8x8x512xf32, #tpu.memory_space<vmem>>, vector<1x8x512xf32>
    %190 = vector.shape_cast %189 : vector<1x8x512xf32> to vector<8x512xf32>
    %c0_67 = arith.constant 0 : index
    %c0_68 = arith.constant 0 : index
    %191 = vector.load %arg5[%c0_67, %c0_68] : memref<128x512xf32, #tpu.memory_space<vmem>>, vector<128x512xf32>
    %cst_69 = arith.constant dense<0.000000e+00> : vector<8x512xf32>
    %192 = tpu.matmul %183, %191, %cst_69 {dimension_numbers = #tpu.dot_dimension_numbers<[1], [0], [0], [1], [0, 0, 1, 1], [], []>} : vector<8x128xf32>, vector<128x512xf32>, vector<8x512xf32> -> vector<8x512xf32>
    %193 = arith.addf %190, %192 : vector<8x512xf32>
    %194 = vector.extract_strided_slice %193 {offsets = [0, 0], sizes = [8, 128], strides = [1, 1]} : vector<8x512xf32> to vector<8x128xf32>
    %195 = arith.negf %194 : vector<8x128xf32>
    %196 = math.exp %195 : vector<8x128xf32>
    %cst_70 = arith.constant 1.000000e+00 : f32
    %197 = vector.broadcast %cst_70 : f32 to vector<8x128xf32>
    %198 = arith.addf %197, %196 : vector<8x128xf32>
    %199 = arith.divf %197, %198 : vector<8x128xf32>
    %200 = vector.extract_strided_slice %193 {offsets = [0, 128], sizes = [8, 128], strides = [1, 1]} : vector<8x512xf32> to vector<8x128xf32>
    %201 = arith.negf %200 : vector<8x128xf32>
    %202 = math.exp %201 : vector<8x128xf32>
    %cst_71 = arith.constant 1.000000e+00 : f32
    %203 = vector.broadcast %cst_71 : f32 to vector<8x128xf32>
    %204 = arith.addf %203, %202 : vector<8x128xf32>
    %205 = arith.divf %203, %204 : vector<8x128xf32>
    %206 = vector.extract_strided_slice %193 {offsets = [0, 256], sizes = [8, 128], strides = [1, 1]} : vector<8x512xf32> to vector<8x128xf32>
    %207 = math.tanh %206 : vector<8x128xf32>
    %208 = vector.extract_strided_slice %193 {offsets = [0, 384], sizes = [8, 128], strides = [1, 1]} : vector<8x512xf32> to vector<8x128xf32>
    %209 = arith.negf %208 : vector<8x128xf32>
    %210 = math.exp %209 : vector<8x128xf32>
    %cst_72 = arith.constant 1.000000e+00 : f32
    %211 = vector.broadcast %cst_72 : f32 to vector<8x128xf32>
    %212 = arith.addf %211, %210 : vector<8x128xf32>
    %213 = arith.divf %211, %212 : vector<8x128xf32>
    %214 = arith.mulf %205, %181 : vector<8x128xf32>
    %215 = arith.mulf %199, %207 : vector<8x128xf32>
    %216 = arith.addf %214, %215 : vector<8x128xf32>
    %217 = math.tanh %216 : vector<8x128xf32>
    %218 = arith.mulf %213, %217 : vector<8x128xf32>
    %219 = arith.index_cast %c5_i32 : i32 to index
    %c0_73 = arith.constant 0 : index
    %c0_74 = arith.constant 0 : index
    %220 = vector.load %arg15[%219, %c0_73, %c0_74] : memref<8x8x128xf32, #tpu.memory_space<vmem>>, vector<1x8x128xf32>
    %221 = vector.shape_cast %220 : vector<1x8x128xf32> to vector<8x128xf32>
    %222 = vector.shape_cast %218 : vector<8x128xf32> to vector<1x8x128xf32>
    tpu.vector_store %arg15[%219, %c0_73, %c0_74], %222 {strides = array<i32>} : memref<8x8x128xf32, #tpu.memory_space<vmem>>, vector<1x8x128xf32>,
    %c6_i32 = arith.constant 6 : i32
    %223 = arith.index_cast %c6_i32 : i32 to index
    %c0_75 = arith.constant 0 : index
    %c0_76 = arith.constant 0 : index
    %224 = vector.load %arg16[%223, %c0_75, %c0_76] : memref<8x8x512xf32, #tpu.memory_space<vmem>>, vector<1x8x512xf32>
    %225 = vector.shape_cast %224 : vector<1x8x512xf32> to vector<8x512xf32>
    %c0_77 = arith.constant 0 : index
    %c0_78 = arith.constant 0 : index
    %226 = vector.load %arg5[%c0_77, %c0_78] : memref<128x512xf32, #tpu.memory_space<vmem>>, vector<128x512xf32>
    %cst_79 = arith.constant dense<0.000000e+00> : vector<8x512xf32>
    %227 = tpu.matmul %218, %226, %cst_79 {dimension_numbers = #tpu.dot_dimension_numbers<[1], [0], [0], [1], [0, 0, 1, 1], [], []>} : vector<8x128xf32>, vector<128x512xf32>, vector<8x512xf32> -> vector<8x512xf32>
    %228 = arith.addf %225, %227 : vector<8x512xf32>
    %229 = vector.extract_strided_slice %228 {offsets = [0, 0], sizes = [8, 128], strides = [1, 1]} : vector<8x512xf32> to vector<8x128xf32>
    %230 = arith.negf %229 : vector<8x128xf32>
    %231 = math.exp %230 : vector<8x128xf32>
    %cst_80 = arith.constant 1.000000e+00 : f32
    %232 = vector.broadcast %cst_80 : f32 to vector<8x128xf32>
    %233 = arith.addf %232, %231 : vector<8x128xf32>
    %234 = arith.divf %232, %233 : vector<8x128xf32>
    %235 = vector.extract_strided_slice %228 {offsets = [0, 128], sizes = [8, 128], strides = [1, 1]} : vector<8x512xf32> to vector<8x128xf32>
    %236 = arith.negf %235 : vector<8x128xf32>
    %237 = math.exp %236 : vector<8x128xf32>
    %cst_81 = arith.constant 1.000000e+00 : f32
    %238 = vector.broadcast %cst_81 : f32 to vector<8x128xf32>
    %239 = arith.addf %238, %237 : vector<8x128xf32>
    %240 = arith.divf %238, %239 : vector<8x128xf32>
    %241 = vector.extract_strided_slice %228 {offsets = [0, 256], sizes = [8, 128], strides = [1, 1]} : vector<8x512xf32> to vector<8x128xf32>
    %242 = math.tanh %241 : vector<8x128xf32>
    %243 = vector.extract_strided_slice %228 {offsets = [0, 384], sizes = [8, 128], strides = [1, 1]} : vector<8x512xf32> to vector<8x128xf32>
    %244 = arith.negf %243 : vector<8x128xf32>
    %245 = math.exp %244 : vector<8x128xf32>
    %cst_82 = arith.constant 1.000000e+00 : f32
    %246 = vector.broadcast %cst_82 : f32 to vector<8x128xf32>
    %247 = arith.addf %246, %245 : vector<8x128xf32>
    %248 = arith.divf %246, %247 : vector<8x128xf32>
    %249 = arith.mulf %240, %216 : vector<8x128xf32>
    %250 = arith.mulf %234, %242 : vector<8x128xf32>
    %251 = arith.addf %249, %250 : vector<8x128xf32>
    %252 = math.tanh %251 : vector<8x128xf32>
    %253 = arith.mulf %248, %252 : vector<8x128xf32>
    %254 = arith.index_cast %c6_i32 : i32 to index
    %c0_83 = arith.constant 0 : index
    %c0_84 = arith.constant 0 : index
    %255 = vector.load %arg15[%254, %c0_83, %c0_84] : memref<8x8x128xf32, #tpu.memory_space<vmem>>, vector<1x8x128xf32>
    %256 = vector.shape_cast %255 : vector<1x8x128xf32> to vector<8x128xf32>
    %257 = vector.shape_cast %253 : vector<8x128xf32> to vector<1x8x128xf32>
    tpu.vector_store %arg15[%254, %c0_83, %c0_84], %257 {strides = array<i32>} : memref<8x8x128xf32, #tpu.memory_space<vmem>>, vector<1x8x128xf32>,
    %c7_i32 = arith.constant 7 : i32
    %258 = arith.index_cast %c7_i32 : i32 to index
    %c0_85 = arith.constant 0 : index
    %c0_86 = arith.constant 0 : index
    %259 = vector.load %arg16[%258, %c0_85, %c0_86] : memref<8x8x512xf32, #tpu.memory_space<vmem>>, vector<1x8x512xf32>
    %260 = vector.shape_cast %259 : vector<1x8x512xf32> to vector<8x512xf32>
    %c0_87 = arith.constant 0 : index
    %c0_88 = arith.constant 0 : index
    %261 = vector.load %arg5[%c0_87, %c0_88] : memref<128x512xf32, #tpu.memory_space<vmem>>, vector<128x512xf32>
    %cst_89 = arith.constant dense<0.000000e+00> : vector<8x512xf32>
    %262 = tpu.matmul %253, %261, %cst_89 {dimension_numbers = #tpu.dot_dimension_numbers<[1], [0], [0], [1], [0, 0, 1, 1], [], []>} : vector<8x128xf32>, vector<128x512xf32>, vector<8x512xf32> -> vector<8x512xf32>
    %263 = arith.addf %260, %262 : vector<8x512xf32>
    %264 = vector.extract_strided_slice %263 {offsets = [0, 0], sizes = [8, 128], strides = [1, 1]} : vector<8x512xf32> to vector<8x128xf32>
    %265 = arith.negf %264 : vector<8x128xf32>
    %266 = math.exp %265 : vector<8x128xf32>
    %cst_90 = arith.constant 1.000000e+00 : f32
    %267 = vector.broadcast %cst_90 : f32 to vector<8x128xf32>
    %268 = arith.addf %267, %266 : vector<8x128xf32>
    %269 = arith.divf %267, %268 : vector<8x128xf32>
    %270 = vector.extract_strided_slice %263 {offsets = [0, 128], sizes = [8, 128], strides = [1, 1]} : vector<8x512xf32> to vector<8x128xf32>
    %271 = arith.negf %270 : vector<8x128xf32>
    %272 = math.exp %271 : vector<8x128xf32>
    %cst_91 = arith.constant 1.000000e+00 : f32
    %273 = vector.broadcast %cst_91 : f32 to vector<8x128xf32>
    %274 = arith.addf %273, %272 : vector<8x128xf32>
    %275 = arith.divf %273, %274 : vector<8x128xf32>
    %276 = vector.extract_strided_slice %263 {offsets = [0, 256], sizes = [8, 128], strides = [1, 1]} : vector<8x512xf32> to vector<8x128xf32>
    %277 = math.tanh %276 : vector<8x128xf32>
    %278 = vector.extract_strided_slice %263 {offsets = [0, 384], sizes = [8, 128], strides = [1, 1]} : vector<8x512xf32> to vector<8x128xf32>
    %279 = arith.negf %278 : vector<8x128xf32>
    %280 = math.exp %279 : vector<8x128xf32>
    %cst_92 = arith.constant 1.000000e+00 : f32
    %281 = vector.broadcast %cst_92 : f32 to vector<8x128xf32>
    %282 = arith.addf %281, %280 : vector<8x128xf32>
    %283 = arith.divf %281, %282 : vector<8x128xf32>
    %284 = arith.mulf %275, %251 : vector<8x128xf32>
    %285 = arith.mulf %269, %277 : vector<8x128xf32>
    %286 = arith.addf %284, %285 : vector<8x128xf32>
    %287 = math.tanh %286 : vector<8x128xf32>
    %288 = arith.mulf %283, %287 : vector<8x128xf32>
    %289 = arith.index_cast %c7_i32 : i32 to index
    %c0_93 = arith.constant 0 : index
    %c0_94 = arith.constant 0 : index
    %290 = vector.load %arg15[%289, %c0_93, %c0_94] : memref<8x8x128xf32, #tpu.memory_space<vmem>>, vector<1x8x128xf32>
    %291 = vector.shape_cast %290 : vector<1x8x128xf32> to vector<8x128xf32>
    %292 = vector.shape_cast %288 : vector<8x128xf32> to vector<1x8x128xf32>
    tpu.vector_store %arg15[%289, %c0_93, %c0_94], %292 {strides = array<i32>} : memref<8x8x128xf32, #tpu.memory_space<vmem>>, vector<1x8x128xf32>,
    %c8_i32 = arith.constant 8 : i32
    %c0_95 = arith.constant 0 : index
    %c0_96 = arith.constant 0 : index
    %c0_97 = arith.constant 0 : index
    %293 = vector.load %arg13[%c0_95, %c0_96, %c0_97] : memref<2x8x128xf32, #tpu.memory_space<vmem>>, vector<1x8x128xf32>
    %294 = vector.shape_cast %293 : vector<1x8x128xf32> to vector<8x128xf32>
    %295 = vector.shape_cast %288 : vector<8x128xf32> to vector<1x8x128xf32>
    tpu.vector_store %arg13[%c0_95, %c0_96, %c0_97], %295 {strides = array<i32>} : memref<2x8x128xf32, #tpu.memory_space<vmem>>, vector<1x8x128xf32>,
    %c0_98 = arith.constant 0 : index
    %c0_99 = arith.constant 0 : index
    %c0_100 = arith.constant 0 : index
    %296 = vector.load %arg14[%c0_98, %c0_99, %c0_100] : memref<2x8x128xf32, #tpu.memory_space<vmem>>, vector<1x8x128xf32>
    %297 = vector.shape_cast %296 : vector<1x8x128xf32> to vector<8x128xf32>
    %298 = vector.shape_cast %286 : vector<8x128xf32> to vector<1x8x128xf32>
    tpu.vector_store %arg14[%c0_98, %c0_99, %c0_100], %298 {strides = array<i32>} : memref<2x8x128xf32, #tpu.memory_space<vmem>>, vector<1x8x128xf32>,
    %c0_101 = arith.constant 0 : index
    %c0_102 = arith.constant 0 : index
    %c0_103 = arith.constant 0 : index
    %299 = vector.load %arg15[%c0_101, %c0_102, %c0_103] : memref<8x8x128xf32, #tpu.memory_space<vmem>>, vector<8x8x128xf32>
    %300 = vector.shape_cast %299 : vector<8x8x128xf32> to vector<64x128xf32>
    %c0_104 = arith.constant 0 : index
    %c0_105 = arith.constant 0 : index
    %301 = vector.load %arg7[%c0_104, %c0_105] : memref<128x512xf32, #tpu.memory_space<vmem>>, vector<128x512xf32>
    %cst_106 = arith.constant dense<0.000000e+00> : vector<64x512xf32>
    %302 = tpu.matmul %300, %301, %cst_106 {dimension_numbers = #tpu.dot_dimension_numbers<[1], [0], [0], [1], [0, 0, 1, 1], [], []>} : vector<64x128xf32>, vector<128x512xf32>, vector<64x512xf32> -> vector<64x512xf32>
    %c0_107 = arith.constant 0 : index
    %c0_108 = arith.constant 0 : index
    %303 = vector.load %arg9[%c0_107, %c0_108] : memref<1x512xf32, #tpu.memory_space<vmem>>, vector<1x512xf32>
    %304 = vector.broadcast %303 : vector<1x512xf32> to vector<64x512xf32>
    %305 = arith.addf %302, %304 : vector<64x512xf32>
    %306 = vector.shape_cast %305 : vector<64x512xf32> to vector<8x8x512xf32>
    %c0_109 = arith.constant 0 : index
    %c0_110 = arith.constant 0 : index
    %c0_111 = arith.constant 0 : index
    %307 = vector.load %arg16[%c0_109, %c0_110, %c0_111] : memref<8x8x512xf32, #tpu.memory_space<vmem>>, vector<8x8x512xf32>
    tpu.vector_store %arg16[%c0_109, %c0_110, %c0_111], %306 {strides = array<i32>} : memref<8x8x512xf32, #tpu.memory_space<vmem>>, vector<8x8x512xf32>,
    %c1 = arith.constant 1 : index
    %c0_112 = arith.constant 0 : index
    %c0_113 = arith.constant 0 : index
    %308 = vector.load %arg2[%c1, %c0_112, %c0_113] : memref<2x8x128xf32, #tpu.memory_space<vmem>>, vector<1x8x128xf32>
    %309 = vector.shape_cast %308 : vector<1x8x128xf32> to vector<8x128xf32>
    %c1_114 = arith.constant 1 : index
    %c0_115 = arith.constant 0 : index
    %c0_116 = arith.constant 0 : index
    %310 = vector.load %arg3[%c1_114, %c0_115, %c0_116] : memref<2x8x128xf32, #tpu.memory_space<vmem>>, vector<1x8x128xf32>
    %311 = vector.shape_cast %310 : vector<1x8x128xf32> to vector<8x128xf32>
    %c0_i32_117 = arith.constant 0 : i32
    %312 = arith.index_cast %c0_i32_117 : i32 to index
    %c0_118 = arith.constant 0 : index
    %c0_119 = arith.constant 0 : index
    %313 = vector.load %arg16[%312, %c0_118, %c0_119] : memref<8x8x512xf32, #tpu.memory_space<vmem>>, vector<1x8x512xf32>
    %314 = vector.shape_cast %313 : vector<1x8x512xf32> to vector<8x512xf32>
    %c0_120 = arith.constant 0 : index
    %c0_121 = arith.constant 0 : index
    %315 = vector.load %arg8[%c0_120, %c0_121] : memref<128x512xf32, #tpu.memory_space<vmem>>, vector<128x512xf32>
    %cst_122 = arith.constant dense<0.000000e+00> : vector<8x512xf32>
    %316 = tpu.matmul %309, %315, %cst_122 {dimension_numbers = #tpu.dot_dimension_numbers<[1], [0], [0], [1], [0, 0, 1, 1], [], []>} : vector<8x128xf32>, vector<128x512xf32>, vector<8x512xf32> -> vector<8x512xf32>
    %317 = arith.addf %314, %316 : vector<8x512xf32>
    %318 = vector.extract_strided_slice %317 {offsets = [0, 0], sizes = [8, 128], strides = [1, 1]} : vector<8x512xf32> to vector<8x128xf32>
    %319 = arith.negf %318 : vector<8x128xf32>
    %320 = math.exp %319 : vector<8x128xf32>
    %cst_123 = arith.constant 1.000000e+00 : f32
    %321 = vector.broadcast %cst_123 : f32 to vector<8x128xf32>
    %322 = arith.addf %321, %320 : vector<8x128xf32>
    %323 = arith.divf %321, %322 : vector<8x128xf32>
    %324 = vector.extract_strided_slice %317 {offsets = [0, 128], sizes = [8, 128], strides = [1, 1]} : vector<8x512xf32> to vector<8x128xf32>
    %325 = arith.negf %324 : vector<8x128xf32>
    %326 = math.exp %325 : vector<8x128xf32>
    %cst_124 = arith.constant 1.000000e+00 : f32
    %327 = vector.broadcast %cst_124 : f32 to vector<8x128xf32>
    %328 = arith.addf %327, %326 : vector<8x128xf32>
    %329 = arith.divf %327, %328 : vector<8x128xf32>
    %330 = vector.extract_strided_slice %317 {offsets = [0, 256], sizes = [8, 128], strides = [1, 1]} : vector<8x512xf32> to vector<8x128xf32>
    %331 = math.tanh %330 : vector<8x128xf32>
    %332 = vector.extract_strided_slice %317 {offsets = [0, 384], sizes = [8, 128], strides = [1, 1]} : vector<8x512xf32> to vector<8x128xf32>
    %333 = arith.negf %332 : vector<8x128xf32>
    %334 = math.exp %333 : vector<8x128xf32>
    %cst_125 = arith.constant 1.000000e+00 : f32
    %335 = vector.broadcast %cst_125 : f32 to vector<8x128xf32>
    %336 = arith.addf %335, %334 : vector<8x128xf32>
    %337 = arith.divf %335, %336 : vector<8x128xf32>
    %338 = arith.mulf %329, %311 : vector<8x128xf32>
    %339 = arith.mulf %323, %331 : vector<8x128xf32>
    %340 = arith.addf %338, %339 : vector<8x128xf32>
    %341 = math.tanh %340 : vector<8x128xf32>
    %342 = arith.mulf %337, %341 : vector<8x128xf32>
    %c1_i32_126 = arith.constant 1 : i32
    %343 = arith.index_cast %c1_i32_126 : i32 to index
    %c0_127 = arith.constant 0 : index
    %c0_128 = arith.constant 0 : index
    %344 = vector.load %arg16[%343, %c0_127, %c0_128] : memref<8x8x512xf32, #tpu.memory_space<vmem>>, vector<1x8x512xf32>
    %345 = vector.shape_cast %344 : vector<1x8x512xf32> to vector<8x512xf32>
    %c0_129 = arith.constant 0 : index
    %c0_130 = arith.constant 0 : index
    %346 = vector.load %arg8[%c0_129, %c0_130] : memref<128x512xf32, #tpu.memory_space<vmem>>, vector<128x512xf32>
    %cst_131 = arith.constant dense<0.000000e+00> : vector<8x512xf32>
    %347 = tpu.matmul %342, %346, %cst_131 {dimension_numbers = #tpu.dot_dimension_numbers<[1], [0], [0], [1], [0, 0, 1, 1], [], []>} : vector<8x128xf32>, vector<128x512xf32>, vector<8x512xf32> -> vector<8x512xf32>
    %348 = arith.addf %345, %347 : vector<8x512xf32>
    %349 = vector.extract_strided_slice %348 {offsets = [0, 0], sizes = [8, 128], strides = [1, 1]} : vector<8x512xf32> to vector<8x128xf32>
    %350 = arith.negf %349 : vector<8x128xf32>
    %351 = math.exp %350 : vector<8x128xf32>
    %cst_132 = arith.constant 1.000000e+00 : f32
    %352 = vector.broadcast %cst_132 : f32 to vector<8x128xf32>
    %353 = arith.addf %352, %351 : vector<8x128xf32>
    %354 = arith.divf %352, %353 : vector<8x128xf32>
    %355 = vector.extract_strided_slice %348 {offsets = [0, 128], sizes = [8, 128], strides = [1, 1]} : vector<8x512xf32> to vector<8x128xf32>
    %356 = arith.negf %355 : vector<8x128xf32>
    %357 = math.exp %356 : vector<8x128xf32>
    %cst_133 = arith.constant 1.000000e+00 : f32
    %358 = vector.broadcast %cst_133 : f32 to vector<8x128xf32>
    %359 = arith.addf %358, %357 : vector<8x128xf32>
    %360 = arith.divf %358, %359 : vector<8x128xf32>
    %361 = vector.extract_strided_slice %348 {offsets = [0, 256], sizes = [8, 128], strides = [1, 1]} : vector<8x512xf32> to vector<8x128xf32>
    %362 = math.tanh %361 : vector<8x128xf32>
    %363 = vector.extract_strided_slice %348 {offsets = [0, 384], sizes = [8, 128], strides = [1, 1]} : vector<8x512xf32> to vector<8x128xf32>
    %364 = arith.negf %363 : vector<8x128xf32>
    %365 = math.exp %364 : vector<8x128xf32>
    %cst_134 = arith.constant 1.000000e+00 : f32
    %366 = vector.broadcast %cst_134 : f32 to vector<8x128xf32>
    %367 = arith.addf %366, %365 : vector<8x128xf32>
    %368 = arith.divf %366, %367 : vector<8x128xf32>
    %369 = arith.mulf %360, %340 : vector<8x128xf32>
    %370 = arith.mulf %354, %362 : vector<8x128xf32>
    %371 = arith.addf %369, %370 : vector<8x128xf32>
    %372 = math.tanh %371 : vector<8x128xf32>
    %373 = arith.mulf %368, %372 : vector<8x128xf32>
    %c2_i32_135 = arith.constant 2 : i32
    %374 = arith.index_cast %c2_i32_135 : i32 to index
    %c0_136 = arith.constant 0 : index
    %c0_137 = arith.constant 0 : index
    %375 = vector.load %arg16[%374, %c0_136, %c0_137] : memref<8x8x512xf32, #tpu.memory_space<vmem>>, vector<1x8x512xf32>
    %376 = vector.shape_cast %375 : vector<1x8x512xf32> to vector<8x512xf32>
    %c0_138 = arith.constant 0 : index
    %c0_139 = arith.constant 0 : index
    %377 = vector.load %arg8[%c0_138, %c0_139] : memref<128x512xf32, #tpu.memory_space<vmem>>, vector<128x512xf32>
    %cst_140 = arith.constant dense<0.000000e+00> : vector<8x512xf32>
    %378 = tpu.matmul %373, %377, %cst_140 {dimension_numbers = #tpu.dot_dimension_numbers<[1], [0], [0], [1], [0, 0, 1, 1], [], []>} : vector<8x128xf32>, vector<128x512xf32>, vector<8x512xf32> -> vector<8x512xf32>
    %379 = arith.addf %376, %378 : vector<8x512xf32>
    %380 = vector.extract_strided_slice %379 {offsets = [0, 0], sizes = [8, 128], strides = [1, 1]} : vector<8x512xf32> to vector<8x128xf32>
    %381 = arith.negf %380 : vector<8x128xf32>
    %382 = math.exp %381 : vector<8x128xf32>
    %cst_141 = arith.constant 1.000000e+00 : f32
    %383 = vector.broadcast %cst_141 : f32 to vector<8x128xf32>
    %384 = arith.addf %383, %382 : vector<8x128xf32>
    %385 = arith.divf %383, %384 : vector<8x128xf32>
    %386 = vector.extract_strided_slice %379 {offsets = [0, 128], sizes = [8, 128], strides = [1, 1]} : vector<8x512xf32> to vector<8x128xf32>
    %387 = arith.negf %386 : vector<8x128xf32>
    %388 = math.exp %387 : vector<8x128xf32>
    %cst_142 = arith.constant 1.000000e+00 : f32
    %389 = vector.broadcast %cst_142 : f32 to vector<8x128xf32>
    %390 = arith.addf %389, %388 : vector<8x128xf32>
    %391 = arith.divf %389, %390 : vector<8x128xf32>
    %392 = vector.extract_strided_slice %379 {offsets = [0, 256], sizes = [8, 128], strides = [1, 1]} : vector<8x512xf32> to vector<8x128xf32>
    %393 = math.tanh %392 : vector<8x128xf32>
    %394 = vector.extract_strided_slice %379 {offsets = [0, 384], sizes = [8, 128], strides = [1, 1]} : vector<8x512xf32> to vector<8x128xf32>
    %395 = arith.negf %394 : vector<8x128xf32>
    %396 = math.exp %395 : vector<8x128xf32>
    %cst_143 = arith.constant 1.000000e+00 : f32
    %397 = vector.broadcast %cst_143 : f32 to vector<8x128xf32>
    %398 = arith.addf %397, %396 : vector<8x128xf32>
    %399 = arith.divf %397, %398 : vector<8x128xf32>
    %400 = arith.mulf %391, %371 : vector<8x128xf32>
    %401 = arith.mulf %385, %393 : vector<8x128xf32>
    %402 = arith.addf %400, %401 : vector<8x128xf32>
    %403 = math.tanh %402 : vector<8x128xf32>
    %404 = arith.mulf %399, %403 : vector<8x128xf32>
    %c3_i32_144 = arith.constant 3 : i32
    %405 = arith.index_cast %c3_i32_144 : i32 to index
    %c0_145 = arith.constant 0 : index
    %c0_146 = arith.constant 0 : index
    %406 = vector.load %arg16[%405, %c0_145, %c0_146] : memref<8x8x512xf32, #tpu.memory_space<vmem>>, vector<1x8x512xf32>
    %407 = vector.shape_cast %406 : vector<1x8x512xf32> to vector<8x512xf32>
    %c0_147 = arith.constant 0 : index
    %c0_148 = arith.constant 0 : index
    %408 = vector.load %arg8[%c0_147, %c0_148] : memref<128x512xf32, #tpu.memory_space<vmem>>, vector<128x512xf32>
    %cst_149 = arith.constant dense<0.000000e+00> : vector<8x512xf32>
    %409 = tpu.matmul %404, %408, %cst_149 {dimension_numbers = #tpu.dot_dimension_numbers<[1], [0], [0], [1], [0, 0, 1, 1], [], []>} : vector<8x128xf32>, vector<128x512xf32>, vector<8x512xf32> -> vector<8x512xf32>
    %410 = arith.addf %407, %409 : vector<8x512xf32>
    %411 = vector.extract_strided_slice %410 {offsets = [0, 0], sizes = [8, 128], strides = [1, 1]} : vector<8x512xf32> to vector<8x128xf32>
    %412 = arith.negf %411 : vector<8x128xf32>
    %413 = math.exp %412 : vector<8x128xf32>
    %cst_150 = arith.constant 1.000000e+00 : f32
    %414 = vector.broadcast %cst_150 : f32 to vector<8x128xf32>
    %415 = arith.addf %414, %413 : vector<8x128xf32>
    %416 = arith.divf %414, %415 : vector<8x128xf32>
    %417 = vector.extract_strided_slice %410 {offsets = [0, 128], sizes = [8, 128], strides = [1, 1]} : vector<8x512xf32> to vector<8x128xf32>
    %418 = arith.negf %417 : vector<8x128xf32>
    %419 = math.exp %418 : vector<8x128xf32>
    %cst_151 = arith.constant 1.000000e+00 : f32
    %420 = vector.broadcast %cst_151 : f32 to vector<8x128xf32>
    %421 = arith.addf %420, %419 : vector<8x128xf32>
    %422 = arith.divf %420, %421 : vector<8x128xf32>
    %423 = vector.extract_strided_slice %410 {offsets = [0, 256], sizes = [8, 128], strides = [1, 1]} : vector<8x512xf32> to vector<8x128xf32>
    %424 = math.tanh %423 : vector<8x128xf32>
    %425 = vector.extract_strided_slice %410 {offsets = [0, 384], sizes = [8, 128], strides = [1, 1]} : vector<8x512xf32> to vector<8x128xf32>
    %426 = arith.negf %425 : vector<8x128xf32>
    %427 = math.exp %426 : vector<8x128xf32>
    %cst_152 = arith.constant 1.000000e+00 : f32
    %428 = vector.broadcast %cst_152 : f32 to vector<8x128xf32>
    %429 = arith.addf %428, %427 : vector<8x128xf32>
    %430 = arith.divf %428, %429 : vector<8x128xf32>
    %431 = arith.mulf %422, %402 : vector<8x128xf32>
    %432 = arith.mulf %416, %424 : vector<8x128xf32>
    %433 = arith.addf %431, %432 : vector<8x128xf32>
    %434 = math.tanh %433 : vector<8x128xf32>
    %435 = arith.mulf %430, %434 : vector<8x128xf32>
    %c4_i32_153 = arith.constant 4 : i32
    %436 = arith.index_cast %c4_i32_153 : i32 to index
    %c0_154 = arith.constant 0 : index
    %c0_155 = arith.constant 0 : index
    %437 = vector.load %arg16[%436, %c0_154, %c0_155] : memref<8x8x512xf32, #tpu.memory_space<vmem>>, vector<1x8x512xf32>
    %438 = vector.shape_cast %437 : vector<1x8x512xf32> to vector<8x512xf32>
    %c0_156 = arith.constant 0 : index
    %c0_157 = arith.constant 0 : index
    %439 = vector.load %arg8[%c0_156, %c0_157] : memref<128x512xf32, #tpu.memory_space<vmem>>, vector<128x512xf32>
    %cst_158 = arith.constant dense<0.000000e+00> : vector<8x512xf32>
    %440 = tpu.matmul %435, %439, %cst_158 {dimension_numbers = #tpu.dot_dimension_numbers<[1], [0], [0], [1], [0, 0, 1, 1], [], []>} : vector<8x128xf32>, vector<128x512xf32>, vector<8x512xf32> -> vector<8x512xf32>
    %441 = arith.addf %438, %440 : vector<8x512xf32>
    %442 = vector.extract_strided_slice %441 {offsets = [0, 0], sizes = [8, 128], strides = [1, 1]} : vector<8x512xf32> to vector<8x128xf32>
    %443 = arith.negf %442 : vector<8x128xf32>
    %444 = math.exp %443 : vector<8x128xf32>
    %cst_159 = arith.constant 1.000000e+00 : f32
    %445 = vector.broadcast %cst_159 : f32 to vector<8x128xf32>
    %446 = arith.addf %445, %444 : vector<8x128xf32>
    %447 = arith.divf %445, %446 : vector<8x128xf32>
    %448 = vector.extract_strided_slice %441 {offsets = [0, 128], sizes = [8, 128], strides = [1, 1]} : vector<8x512xf32> to vector<8x128xf32>
    %449 = arith.negf %448 : vector<8x128xf32>
    %450 = math.exp %449 : vector<8x128xf32>
    %cst_160 = arith.constant 1.000000e+00 : f32
    %451 = vector.broadcast %cst_160 : f32 to vector<8x128xf32>
    %452 = arith.addf %451, %450 : vector<8x128xf32>
    %453 = arith.divf %451, %452 : vector<8x128xf32>
    %454 = vector.extract_strided_slice %441 {offsets = [0, 256], sizes = [8, 128], strides = [1, 1]} : vector<8x512xf32> to vector<8x128xf32>
    %455 = math.tanh %454 : vector<8x128xf32>
    %456 = vector.extract_strided_slice %441 {offsets = [0, 384], sizes = [8, 128], strides = [1, 1]} : vector<8x512xf32> to vector<8x128xf32>
    %457 = arith.negf %456 : vector<8x128xf32>
    %458 = math.exp %457 : vector<8x128xf32>
    %cst_161 = arith.constant 1.000000e+00 : f32
    %459 = vector.broadcast %cst_161 : f32 to vector<8x128xf32>
    %460 = arith.addf %459, %458 : vector<8x128xf32>
    %461 = arith.divf %459, %460 : vector<8x128xf32>
    %462 = arith.mulf %453, %433 : vector<8x128xf32>
    %463 = arith.mulf %447, %455 : vector<8x128xf32>
    %464 = arith.addf %462, %463 : vector<8x128xf32>
    %465 = math.tanh %464 : vector<8x128xf32>
    %466 = arith.mulf %461, %465 : vector<8x128xf32>
    %c5_i32_162 = arith.constant 5 : i32
    %467 = arith.index_cast %c5_i32_162 : i32 to index
    %c0_163 = arith.constant 0 : index
    %c0_164 = arith.constant 0 : index
    %468 = vector.load %arg16[%467, %c0_163, %c0_164] : memref<8x8x512xf32, #tpu.memory_space<vmem>>, vector<1x8x512xf32>
    %469 = vector.shape_cast %468 : vector<1x8x512xf32> to vector<8x512xf32>
    %c0_165 = arith.constant 0 : index
    %c0_166 = arith.constant 0 : index
    %470 = vector.load %arg8[%c0_165, %c0_166] : memref<128x512xf32, #tpu.memory_space<vmem>>, vector<128x512xf32>
    %cst_167 = arith.constant dense<0.000000e+00> : vector<8x512xf32>
    %471 = tpu.matmul %466, %470, %cst_167 {dimension_numbers = #tpu.dot_dimension_numbers<[1], [0], [0], [1], [0, 0, 1, 1], [], []>} : vector<8x128xf32>, vector<128x512xf32>, vector<8x512xf32> -> vector<8x512xf32>
    %472 = arith.addf %469, %471 : vector<8x512xf32>
    %473 = vector.extract_strided_slice %472 {offsets = [0, 0], sizes = [8, 128], strides = [1, 1]} : vector<8x512xf32> to vector<8x128xf32>
    %474 = arith.negf %473 : vector<8x128xf32>
    %475 = math.exp %474 : vector<8x128xf32>
    %cst_168 = arith.constant 1.000000e+00 : f32
    %476 = vector.broadcast %cst_168 : f32 to vector<8x128xf32>
    %477 = arith.addf %476, %475 : vector<8x128xf32>
    %478 = arith.divf %476, %477 : vector<8x128xf32>
    %479 = vector.extract_strided_slice %472 {offsets = [0, 128], sizes = [8, 128], strides = [1, 1]} : vector<8x512xf32> to vector<8x128xf32>
    %480 = arith.negf %479 : vector<8x128xf32>
    %481 = math.exp %480 : vector<8x128xf32>
    %cst_169 = arith.constant 1.000000e+00 : f32
    %482 = vector.broadcast %cst_169 : f32 to vector<8x128xf32>
    %483 = arith.addf %482, %481 : vector<8x128xf32>
    %484 = arith.divf %482, %483 : vector<8x128xf32>
    %485 = vector.extract_strided_slice %472 {offsets = [0, 256], sizes = [8, 128], strides = [1, 1]} : vector<8x512xf32> to vector<8x128xf32>
    %486 = math.tanh %485 : vector<8x128xf32>
    %487 = vector.extract_strided_slice %472 {offsets = [0, 384], sizes = [8, 128], strides = [1, 1]} : vector<8x512xf32> to vector<8x128xf32>
    %488 = arith.negf %487 : vector<8x128xf32>
    %489 = math.exp %488 : vector<8x128xf32>
    %cst_170 = arith.constant 1.000000e+00 : f32
    %490 = vector.broadcast %cst_170 : f32 to vector<8x128xf32>
    %491 = arith.addf %490, %489 : vector<8x128xf32>
    %492 = arith.divf %490, %491 : vector<8x128xf32>
    %493 = arith.mulf %484, %464 : vector<8x128xf32>
    %494 = arith.mulf %478, %486 : vector<8x128xf32>
    %495 = arith.addf %493, %494 : vector<8x128xf32>
    %496 = math.tanh %495 : vector<8x128xf32>
    %497 = arith.mulf %492, %496 : vector<8x128xf32>
    %c6_i32_171 = arith.constant 6 : i32
    %498 = arith.index_cast %c6_i32_171 : i32 to index
    %c0_172 = arith.constant 0 : index
    %c0_173 = arith.constant 0 : index
    %499 = vector.load %arg16[%498, %c0_172, %c0_173] : memref<8x8x512xf32, #tpu.memory_space<vmem>>, vector<1x8x512xf32>
    %500 = vector.shape_cast %499 : vector<1x8x512xf32> to vector<8x512xf32>
    %c0_174 = arith.constant 0 : index
    %c0_175 = arith.constant 0 : index
    %501 = vector.load %arg8[%c0_174, %c0_175] : memref<128x512xf32, #tpu.memory_space<vmem>>, vector<128x512xf32>
    %cst_176 = arith.constant dense<0.000000e+00> : vector<8x512xf32>
    %502 = tpu.matmul %497, %501, %cst_176 {dimension_numbers = #tpu.dot_dimension_numbers<[1], [0], [0], [1], [0, 0, 1, 1], [], []>} : vector<8x128xf32>, vector<128x512xf32>, vector<8x512xf32> -> vector<8x512xf32>
    %503 = arith.addf %500, %502 : vector<8x512xf32>
    %504 = vector.extract_strided_slice %503 {offsets = [0, 0], sizes = [8, 128], strides = [1, 1]} : vector<8x512xf32> to vector<8x128xf32>
    %505 = arith.negf %504 : vector<8x128xf32>
    %506 = math.exp %505 : vector<8x128xf32>
    %cst_177 = arith.constant 1.000000e+00 : f32
    %507 = vector.broadcast %cst_177 : f32 to vector<8x128xf32>
    %508 = arith.addf %507, %506 : vector<8x128xf32>
    %509 = arith.divf %507, %508 : vector<8x128xf32>
    %510 = vector.extract_strided_slice %503 {offsets = [0, 128], sizes = [8, 128], strides = [1, 1]} : vector<8x512xf32> to vector<8x128xf32>
    %511 = arith.negf %510 : vector<8x128xf32>
    %512 = math.exp %511 : vector<8x128xf32>
    %cst_178 = arith.constant 1.000000e+00 : f32
    %513 = vector.broadcast %cst_178 : f32 to vector<8x128xf32>
    %514 = arith.addf %513, %512 : vector<8x128xf32>
    %515 = arith.divf %513, %514 : vector<8x128xf32>
    %516 = vector.extract_strided_slice %503 {offsets = [0, 256], sizes = [8, 128], strides = [1, 1]} : vector<8x512xf32> to vector<8x128xf32>
    %517 = math.tanh %516 : vector<8x128xf32>
    %518 = vector.extract_strided_slice %503 {offsets = [0, 384], sizes = [8, 128], strides = [1, 1]} : vector<8x512xf32> to vector<8x128xf32>
    %519 = arith.negf %518 : vector<8x128xf32>
    %520 = math.exp %519 : vector<8x128xf32>
    %cst_179 = arith.constant 1.000000e+00 : f32
    %521 = vector.broadcast %cst_179 : f32 to vector<8x128xf32>
    %522 = arith.addf %521, %520 : vector<8x128xf32>
    %523 = arith.divf %521, %522 : vector<8x128xf32>
    %524 = arith.mulf %515, %495 : vector<8x128xf32>
    %525 = arith.mulf %509, %517 : vector<8x128xf32>
    %526 = arith.addf %524, %525 : vector<8x128xf32>
    %527 = math.tanh %526 : vector<8x128xf32>
    %528 = arith.mulf %523, %527 : vector<8x128xf32>
    %c7_i32_180 = arith.constant 7 : i32
    %529 = arith.index_cast %c7_i32_180 : i32 to index
    %c0_181 = arith.constant 0 : index
    %c0_182 = arith.constant 0 : index
    %530 = vector.load %arg16[%529, %c0_181, %c0_182] : memref<8x8x512xf32, #tpu.memory_space<vmem>>, vector<1x8x512xf32>
    %531 = vector.shape_cast %530 : vector<1x8x512xf32> to vector<8x512xf32>
    %c0_183 = arith.constant 0 : index
    %c0_184 = arith.constant 0 : index
    %532 = vector.load %arg8[%c0_183, %c0_184] : memref<128x512xf32, #tpu.memory_space<vmem>>, vector<128x512xf32>
    %cst_185 = arith.constant dense<0.000000e+00> : vector<8x512xf32>
    %533 = tpu.matmul %528, %532, %cst_185 {dimension_numbers = #tpu.dot_dimension_numbers<[1], [0], [0], [1], [0, 0, 1, 1], [], []>} : vector<8x128xf32>, vector<128x512xf32>, vector<8x512xf32> -> vector<8x512xf32>
    %534 = arith.addf %531, %533 : vector<8x512xf32>
    %535 = vector.extract_strided_slice %534 {offsets = [0, 0], sizes = [8, 128], strides = [1, 1]} : vector<8x512xf32> to vector<8x128xf32>
    %536 = arith.negf %535 : vector<8x128xf32>
    %537 = math.exp %536 : vector<8x128xf32>
    %cst_186 = arith.constant 1.000000e+00 : f32
    %538 = vector.broadcast %cst_186 : f32 to vector<8x128xf32>
    %539 = arith.addf %538, %537 : vector<8x128xf32>
    %540 = arith.divf %538, %539 : vector<8x128xf32>
    %541 = vector.extract_strided_slice %534 {offsets = [0, 128], sizes = [8, 128], strides = [1, 1]} : vector<8x512xf32> to vector<8x128xf32>
    %542 = arith.negf %541 : vector<8x128xf32>
    %543 = math.exp %542 : vector<8x128xf32>
    %cst_187 = arith.constant 1.000000e+00 : f32
    %544 = vector.broadcast %cst_187 : f32 to vector<8x128xf32>
    %545 = arith.addf %544, %543 : vector<8x128xf32>
    %546 = arith.divf %544, %545 : vector<8x128xf32>
    %547 = vector.extract_strided_slice %534 {offsets = [0, 256], sizes = [8, 128], strides = [1, 1]} : vector<8x512xf32> to vector<8x128xf32>
    %548 = math.tanh %547 : vector<8x128xf32>
    %549 = vector.extract_strided_slice %534 {offsets = [0, 384], sizes = [8, 128], strides = [1, 1]} : vector<8x512xf32> to vector<8x128xf32>
    %550 = arith.negf %549 : vector<8x128xf32>
    %551 = math.exp %550 : vector<8x128xf32>
    %cst_188 = arith.constant 1.000000e+00 : f32
    %552 = vector.broadcast %cst_188 : f32 to vector<8x128xf32>
    %553 = arith.addf %552, %551 : vector<8x128xf32>
    %554 = arith.divf %552, %553 : vector<8x128xf32>
    %555 = arith.mulf %546, %526 : vector<8x128xf32>
    %556 = arith.mulf %540, %548 : vector<8x128xf32>
    %557 = arith.addf %555, %556 : vector<8x128xf32>
    %558 = math.tanh %557 : vector<8x128xf32>
    %559 = arith.mulf %554, %558 : vector<8x128xf32>
    %c8_i32_189 = arith.constant 8 : i32
    %c1_190 = arith.constant 1 : index
    %c0_191 = arith.constant 0 : index
    %c0_192 = arith.constant 0 : index
    %560 = vector.load %arg13[%c1_190, %c0_191, %c0_192] : memref<2x8x128xf32, #tpu.memory_space<vmem>>, vector<1x8x128xf32>
    %561 = vector.shape_cast %560 : vector<1x8x128xf32> to vector<8x128xf32>
    %562 = vector.shape_cast %559 : vector<8x128xf32> to vector<1x8x128xf32>
    tpu.vector_store %arg13[%c1_190, %c0_191, %c0_192], %562 {strides = array<i32>} : memref<2x8x128xf32, #tpu.memory_space<vmem>>, vector<1x8x128xf32>,
    %c1_193 = arith.constant 1 : index
    %c0_194 = arith.constant 0 : index
    %c0_195 = arith.constant 0 : index
    %563 = vector.load %arg14[%c1_193, %c0_194, %c0_195] : memref<2x8x128xf32, #tpu.memory_space<vmem>>, vector<1x8x128xf32>
    %564 = vector.shape_cast %563 : vector<1x8x128xf32> to vector<8x128xf32>
    %565 = vector.shape_cast %557 : vector<8x128xf32> to vector<1x8x128xf32>
    tpu.vector_store %arg14[%c1_193, %c0_194, %c0_195], %565 {strides = array<i32>} : memref<2x8x128xf32, #tpu.memory_space<vmem>>, vector<1x8x128xf32>,
    %cst_196 = arith.constant 0.000000e+00 : f32
    %566 = vector.broadcast %cst_196 : f32 to vector<8x128xf32>
    %567 = arith.maximumf %559, %566 : vector<8x128xf32>
    %c0_197 = arith.constant 0 : index
    %c0_198 = arith.constant 0 : index
    %568 = vector.load %arg10[%c0_197, %c0_198] : memref<128x128xf32, #tpu.memory_space<vmem>>, vector<128x128xf32>
    %cst_199 = arith.constant dense<0.000000e+00> : vector<8x128xf32>
    %569 = tpu.matmul %567, %568, %cst_199 {dimension_numbers = #tpu.dot_dimension_numbers<[1], [0], [0], [1], [0, 0, 1, 1], [], []>} : vector<8x128xf32>, vector<128x128xf32>, vector<8x128xf32> -> vector<8x128xf32>
    %c0_200 = arith.constant 0 : index
    %c0_201 = arith.constant 0 : index
    %570 = vector.load %arg11[%c0_200, %c0_201] : memref<1x128xf32, #tpu.memory_space<vmem>>, vector<1x128xf32>
    %571 = vector.broadcast %570 : vector<1x128xf32> to vector<8x128xf32>
    %572 = arith.addf %569, %571 : vector<8x128xf32>
    %c0_202 = arith.constant 0 : index
    %c0_203 = arith.constant 0 : index
    %573 = vector.load %arg12[%c0_202, %c0_203] : memref<8x128xf32, #tpu.memory_space<vmem>>, vector<8x128xf32>
    tpu.vector_store %arg12[%c0_202, %c0_203], %572 {strides = array<i32>} : memref<8x128xf32, #tpu.memory_space<vmem>>, vector<8x128xf32>,
    return
  }
  func.func @transform_0(%arg0: i32) -> (i32, i32, i32) {
    %c0_i32 = arith.constant 0 : i32
    %c0_i32_0 = arith.constant 0 : i32
    %c0_i32_1 = arith.constant 0 : i32
    return %c0_i32, %arg0, %c0_i32_0 : i32, i32, i32
  }
  func.func @transform_1(%arg0: i32) -> (i32, i32, i32) {
    %c0_i32 = arith.constant 0 : i32
    %c0_i32_0 = arith.constant 0 : i32
    %c0_i32_1 = arith.constant 0 : i32
    return %c0_i32, %arg0, %c0_i32_0 : i32, i32, i32
  }
  func.func @transform_2(%arg0: i32) -> (i32, i32, i32) {
    %c0_i32 = arith.constant 0 : i32
    %c0_i32_0 = arith.constant 0 : i32
    %c0_i32_1 = arith.constant 0 : i32
    return %c0_i32, %arg0, %c0_i32_0 : i32, i32, i32
  }
  func.func @transform_3(%arg0: i32) -> (i32, i32) {
    %c0_i32 = arith.constant 0 : i32
    %c0_i32_0 = arith.constant 0 : i32
    %c0_i32_1 = arith.constant 0 : i32
    return %c0_i32, %c0_i32_0 : i32, i32
  }
  func.func @transform_4(%arg0: i32) -> (i32, i32) {
    %c0_i32 = arith.constant 0 : i32
    %c0_i32_0 = arith.constant 0 : i32
    %c0_i32_1 = arith.constant 0 : i32
    return %c0_i32, %c0_i32_0 : i32, i32
  }
  func.func @transform_5(%arg0: i32) -> (i32, i32) {
    %c0_i32 = arith.constant 0 : i32
    %c0_i32_0 = arith.constant 0 : i32
    %c0_i32_1 = arith.constant 0 : i32
    return %c0_i32, %c0_i32_0 : i32, i32
  }
  func.func @transform_6(%arg0: i32) -> (i32, i32) {
    %c0_i32 = arith.constant 0 : i32
    %c0_i32_0 = arith.constant 0 : i32
    %c0_i32_1 = arith.constant 0 : i32
    return %c0_i32, %c0_i32_0 : i32, i32
  }
  func.func @transform_7(%arg0: i32) -> (i32, i32) {
    %c0_i32 = arith.constant 0 : i32
    %c0_i32_0 = arith.constant 0 : i32
    %c0_i32_1 = arith.constant 0 : i32
    return %c0_i32, %c0_i32_0 : i32, i32
  }
  func.func @transform_8(%arg0: i32) -> (i32, i32) {
    %c0_i32 = arith.constant 0 : i32
    %c0_i32_0 = arith.constant 0 : i32
    %c0_i32_1 = arith.constant 0 : i32
    return %c0_i32, %c0_i32_0 : i32, i32
  }
  func.func @transform_9(%arg0: i32) -> (i32, i32) {
    %c0_i32 = arith.constant 0 : i32
    %c0_i32_0 = arith.constant 0 : i32
    %c0_i32_1 = arith.constant 0 : i32
    return %c0_i32, %c0_i32_0 : i32, i32
  }
  func.func @transform_10(%arg0: i32) -> (i32, i32) {
    %c0_i32 = arith.constant 0 : i32
    %c0_i32_0 = arith.constant 0 : i32
    %c0_i32_1 = arith.constant 0 : i32
    return %c0_i32, %c0_i32_0 : i32, i32
  }
  func.func @transform_11(%arg0: i32) -> (i32, i32) {
    %c0_i32 = arith.constant 0 : i32
    %c0_i32_0 = arith.constant 0 : i32
    return %arg0, %c0_i32 : i32, i32
  }
  func.func @transform_12(%arg0: i32) -> (i32, i32, i32) {
    %c0_i32 = arith.constant 0 : i32
    %c0_i32_0 = arith.constant 0 : i32
    %c0_i32_1 = arith.constant 0 : i32
    return %c0_i32, %arg0, %c0_i32_0 : i32, i32, i32
  }
  func.func @transform_13(%arg0: i32) -> (i32, i32, i32) {
    %c0_i32 = arith.constant 0 : i32
    %c0_i32_0 = arith.constant 0 : i32
    %c0_i32_1 = arith.constant 0 : i32
    return %c0_i32, %arg0, %c0_i32_0 : i32, i32, i32
  }
}

</mosaic_0001>

<llo_original>
// kernel: lstm_net_forward.1
$region0: #{lstm_net_forward.1}
  #allocation0 [shape = 'u32[]', space=smem, size = 0x4, offset = 0x4, fixed_abs, tag = 'smem constant byte address 0x4 - core index']
  #allocation1 [shape = 'u32[144,128]{1,0:T(1,128)}', space=vmem, size = 0x12000, scoped, tag = 'internal scratch']
  #allocation2 [shape = 'f32[8,8,128]{2,1,0:T(8,128)}', space=vmem, size = 0x8000, scoped, tag = 'scratch operand']
  #allocation3 [shape = 'f32[8,8,512]{2,1,0:T(8,128)}', space=vmem, size = 0x20000, scoped, tag = 'scratch operand']
  %s0 = inlined_call_operand.vmem [shape: f32[8,8,128], index: 0, kind: input, shape index: {}]
  %s1 = inlined_call_operand.vmem [shape: f32[2,8,128], index: 1, kind: input, shape index: {}]
  %s2 = inlined_call_operand.vmem [shape: f32[2,8,128], index: 2, kind: input, shape index: {}]
  %s3 = inlined_call_operand.hbm [shape: f32[128,512], index: 3, kind: input, shape index: {}]
  %s4 = inlined_call_operand.hbm [shape: f32[128,512], index: 4, kind: input, shape index: {}]
  %s5 = inlined_call_operand.vmem [shape: f32[1,512], index: 5, kind: input, shape index: {}]
  %s6 = inlined_call_operand.hbm [shape: f32[128,512], index: 6, kind: input, shape index: {}]
  %s7 = inlined_call_operand.hbm [shape: f32[128,512], index: 7, kind: input, shape index: {}]
  %s8 = inlined_call_operand.vmem [shape: f32[1,512], index: 8, kind: input, shape index: {}]
  %s9 = inlined_call_operand.vmem [shape: f32[128,128], index: 9, kind: input, shape index: {}]
  %s10 = inlined_call_operand.vmem [shape: f32[1,128], index: 10, kind: input, shape index: {}]
  %s11 = inlined_call_operand.vmem [shape: f32[8,128], index: 11, kind: output, shape index: {0}]
  %s12 = inlined_call_operand.vmem [shape: f32[2,8,128], index: 12, kind: output, shape index: {1}]
  %s13 = inlined_call_operand.vmem [shape: f32[2,8,128], index: 13, kind: output, shape index: {2}]
  %14 = xla_tuple %s11, %s12, %s13
  %s15 = sld [smem:[#allocation0]]
  $region86: #{lstm_net_forward.1} parent=0
    _
  %s17 = ssub.s32 1, %s15
  %s18 = scalar_select 0, %s17, %s15
  $region1: #{lstm_net_forward.1} parent=0
    #allocation4 [shape = 'u8[262144]{0}', space=vmem, size = 0x40000, scoped, tag = 'input window, operand 3, single buffered']
    #allocation5 [shape = 's32[1]{0}', space=sflag, size = 0x4, scoped, tag = 'scoped memory for lstm_net_forward.1']
    #allocation6 [shape = 'u8[262144]{0}', space=vmem, size = 0x40000, scoped, tag = 'input window, operand 4, single buffered']
    #allocation7 [shape = 's32[1]{0}', space=sflag, size = 0x4, scoped, tag = 'scoped memory for lstm_net_forward.1']
    #allocation8 [shape = 'u8[262144]{0}', space=vmem, size = 0x40000, scoped, tag = 'input window, operand 6, single buffered']
    #allocation9 [shape = 'u8[262144]{0}', space=vmem, size = 0x40000, scoped, tag = 'input window, operand 7, single buffered']
    #allocation10 [shape = 's32[1]{0}', space=sflag, size = 0x4, scoped, tag = 'scoped memory for lstm_net_forward.1']
    %19 = vsyncpa [#allocation5], 0
    %20 = vsyncpa [#allocation7], 0
    %21 = vsyncpa [#allocation10], 0
    // Predicated region
    $region2: #{lstm_net_forward.1} parent=1 // pred_check
      _
    $region3: #{lstm_net_forward.1} parent=1 // pred_check_branch
      %23 = sbr.rel (0) target = $region5
    $region4: #{lstm_net_forward.1} parent=1 // pred_region
      _
    $region5: #{lstm_net_forward.1} parent=1 // pred_fallthru
      _
    // Predicated region
    $region6: #{lstm_net_forward.1} parent=1 // pred_check
      _
    $region7: #{lstm_net_forward.1} parent=1 // pred_check_branch
      %25 = sbr.rel (0) target = $region9
    $region8: #{lstm_net_forward.1} parent=1 // pred_region
      _
    $region9: #{lstm_net_forward.1} parent=1 // pred_fallthru
      _
    // Predicated region
    $region10: #{lstm_net_forward.1} parent=1 // pred_check
      _
    $region11: #{lstm_net_forward.1} parent=1 // pred_check_branch
      %27 = sbr.rel (0) target = $region13
    $region12: #{lstm_net_forward.1} parent=1 // pred_region
      _
    $region13: #{lstm_net_forward.1} parent=1 // pred_fallthru
      _
    // Predicated region
    $region14: #{lstm_net_forward.1} parent=1 // pred_check
      _
    $region15: #{lstm_net_forward.1} parent=1 // pred_check_branch
      %29 = sbr.rel (0) target = $region17
    $region16: #{lstm_net_forward.1} parent=1 // pred_region
      %s31 = ssub.s32 8192, 8192
      %32 = vsyncadd [#allocation5], %s31
      %s33 = sshll.u32 [#allocation4], 4
      %s34 = int_to_ptr.vmem [resolvable:$true] %s33
      %39 = dma.hbm_to_vmem [thread:$0]  %s3, 8192, %s34, [#allocation5], 512, 512, 32
    $region17: #{lstm_net_forward.1} parent=1 // pred_fallthru
      _
    // Predicated region
    $region18: #{lstm_net_forward.1} parent=1 // pred_check
      _
    $region19: #{lstm_net_forward.1} parent=1 // pred_check_branch
      %41 = sbr.rel (0) target = $region21
    $region20: #{lstm_net_forward.1} parent=1 // pred_region
      %s43 = ssub.s32 8192, 8192
      %44 = vsyncadd [#allocation7], %s43
      %s45 = sshll.u32 [#allocation6], 4
      %s46 = int_to_ptr.vmem [resolvable:$true] %s45
      %51 = dma.hbm_to_vmem [thread:$0]  %s4, 8192, %s46, [#allocation7], 512, 512, 32
    $region21: #{lstm_net_forward.1} parent=1 // pred_fallthru
      _
    // Predicated region
    $region22: #{lstm_net_forward.1} parent=1 // pred_check
      _
    $region23: #{lstm_net_forward.1} parent=1 // pred_check_branch
      %53 = sbr.rel (0) target = $region25
    $region24: #{lstm_net_forward.1} parent=1 // pred_region
      _
    $region25: #{lstm_net_forward.1} parent=1 // pred_fallthru
      _
    // Predicated region
    $region26: #{lstm_net_forward.1} parent=1 // pred_check
      _
    $region27: #{lstm_net_forward.1} parent=1 // pred_check_branch
      %55 = sbr.rel (0) target = $region29
    $region28: #{lstm_net_forward.1} parent=1 // pred_region
      %s57 = ssub.s32 8192, 8192
      %58 = vsyncadd [#allocation7], %s57
      %s59 = sshll.u32 [#allocation8], 4
      %s60 = int_to_ptr.vmem [resolvable:$true] %s59
      %65 = dma.hbm_to_vmem [thread:$0]  %s6, 8192, %s60, [#allocation7], 512, 512, 32
    $region29: #{lstm_net_forward.1} parent=1 // pred_fallthru
      _
    // Predicated region
    $region30: #{lstm_net_forward.1} parent=1 // pred_check
      _
    $region31: #{lstm_net_forward.1} parent=1 // pred_check_branch
      %67 = sbr.rel (0) target = $region33
    $region32: #{lstm_net_forward.1} parent=1 // pred_region
      %s69 = ssub.s32 8192, 8192
      %70 = vsyncadd [#allocation10], %s69
      %s71 = sshll.u32 [#allocation9], 4
      %s72 = int_to_ptr.vmem [resolvable:$true] %s71
      %77 = dma.hbm_to_vmem [thread:$0]  %s7, 8192, %s72, [#allocation10], 512, 512, 32
    $region33: #{lstm_net_forward.1} parent=1 // pred_fallthru
      _
    // Predicated region
    $region34: #{lstm_net_forward.1} parent=1 // pred_check
      _
    $region35: #{lstm_net_forward.1} parent=1 // pred_check_branch
      %79 = sbr.rel (0) target = $region37
    $region36: #{lstm_net_forward.1} parent=1 // pred_region
      _
    $region37: #{lstm_net_forward.1} parent=1 // pred_fallthru
      _
    // Predicated region
    $region38: #{lstm_net_forward.1} parent=1 // pred_check
      _
    $region39: #{lstm_net_forward.1} parent=1 // pred_check_branch
      %81 = sbr.rel (0) target = $region41
    $region40: #{lstm_net_forward.1} parent=1 // pred_region
      _
    $region41: #{lstm_net_forward.1} parent=1 // pred_fallthru
      _
    // Predicated region
    $region42: #{lstm_net_forward.1} parent=1 // pred_check
      _
    $region43: #{lstm_net_forward.1} parent=1 // pred_check_branch
      %83 = sbr.rel (0) target = $region45
    $region44: #{lstm_net_forward.1} parent=1 // pred_region
      _
    $region45: #{lstm_net_forward.1} parent=1 // pred_fallthru
      _
    // Predicated region
    $region46: #{lstm_net_forward.1} parent=1 // pred_check
      _
    $region47: #{lstm_net_forward.1} parent=1 // pred_check_branch
      %85 = sbr.rel (0) target = $region49
    $region48: #{lstm_net_forward.1} parent=1 // pred_region
      %86 = dma.done [#allocation5], 8192
    $region49: #{lstm_net_forward.1} parent=1 // pred_fallthru
      _
    // Predicated region
    $region50: #{lstm_net_forward.1} parent=1 // pred_check
      _
    $region51: #{lstm_net_forward.1} parent=1 // pred_check_branch
      %88 = sbr.rel (0) target = $region53
    $region52: #{lstm_net_forward.1} parent=1 // pred_region
      %89 = dma.done [#allocation7], 8192
    $region53: #{lstm_net_forward.1} parent=1 // pred_fallthru
      _
    // Predicated region
    $region54: #{lstm_net_forward.1} parent=1 // pred_check
      _
    $region55: #{lstm_net_forward.1} parent=1 // pred_check_branch
      %91 = sbr.rel (0) target = $region57
    $region56: #{lstm_net_forward.1} parent=1 // pred_region
      %92 = dma.done [#allocation7], 8192
    $region57: #{lstm_net_forward.1} parent=1 // pred_fallthru
      _
    // Predicated region
    $region58: #{lstm_net_forward.1} parent=1 // pred_check
      _
    $region59: #{lstm_net_forward.1} parent=1 // pred_check_branch
      %94 = sbr.rel (0) target = $region61
    $region60: #{lstm_net_forward.1} parent=1 // pred_region
      %95 = dma.done [#allocation10], 8192
    $region61: #{lstm_net_forward.1} parent=1 // pred_fallthru
      _
    %v96 = vld [vmem:[%s0] sm:$0xff]
    %v97 = vld [vmem:[%s0 + $0x8] sm:$0xff]
    %v98 = vld [vmem:[%s0 + $0x10] sm:$0xff]
    %v99 = vld [vmem:[%s0 + $0x18] sm:$0xff]
    %v100 = vld [vmem:[%s0 + $0x20] sm:$0xff]
    %v101 = vld [vmem:[%s0 + $0x28] sm:$0xff]
    %v102 = vld [vmem:[%s0 + $0x30] sm:$0xff]
    %v103 = vld [vmem:[%s0 + $0x38] sm:$0xff]
    %v104 = vld [vmem:[#allocation4] sm:$0xff]
    %v105 = vld [vmem:[#allocation4 + $0x8] sm:$0xff]
    %v106 = vld [vmem:[#allocation4 + $0x10] sm:$0xff]
    %v107 = vld [vmem:[#allocation4 + $0x18] sm:$0xff]
    %v108 = vld [vmem:[#allocation4 + $0x20] sm:$0xff]
    %v109 = vld [vmem:[#allocation4 + $0x28] sm:$0xff]
    %v110 = vld [vmem:[#allocation4 + $0x30] sm:$0xff]
    %v111 = vld [vmem:[#allocation4 + $0x38] sm:$0xff]
    %v112 = vld [vmem:[#allocation4 + $0x40] sm:$0xff]
    %v113 = vld [vmem:[#allocation4 + $0x48] sm:$0xff]
    %v114 = vld [vmem:[#allocation4 + $0x50] sm:$0xff]
    %v115 = vld [vmem:[#allocation4 + $0x58] sm:$0xff]
    %v116 = vld [vmem:[#allocation4 + $0x60] sm:$0xff]
    %v117 = vld [vmem:[#allocation4 + $0x68] sm:$0xff]
    %v118 = vld [vmem:[#allocation4 + $0x70] sm:$0xff]
    %v119 = vld [vmem:[#allocation4 + $0x78] sm:$0xff]
    %v120 = vld [vmem:[#allocation4 + $0x80] sm:$0xff]
    %v121 = vld [vmem:[#allocation4 + $0x88] sm:$0xff]
    %v122 = vld [vmem:[#allocation4 + $0x90] sm:$0xff]
    %v123 = vld [vmem:[#allocation4 + $0x98] sm:$0xff]
    %v124 = vld [vmem:[#allocation4 + $0xa0] sm:$0xff]
    %v125 = vld [vmem:[#allocation4 + $0xa8] sm:$0xff]
    %v126 = vld [vmem:[#allocation4 + $0xb0] sm:$0xff]
    %v127 = vld [vmem:[#allocation4 + $0xb8] sm:$0xff]
    %v128 = vld [vmem:[#allocation4 + $0xc0] sm:$0xff]
    %v129 = vld [vmem:[#allocation4 + $0xc8] sm:$0xff]
    %v130 = vld [vmem:[#allocation4 + $0xd0] sm:$0xff]
    %v131 = vld [vmem:[#allocation4 + $0xd8] sm:$0xff]
    %v132 = vld [vmem:[#allocation4 + $0xe0] sm:$0xff]
    %v133 = vld [vmem:[#allocation4 + $0xe8] sm:$0xff]
    %v134 = vld [vmem:[#allocation4 + $0xf0] sm:$0xff]
    %v135 = vld [vmem:[#allocation4 + $0xf8] sm:$0xff]
    %v136 = vld [vmem:[#allocation4 + $0x100] sm:$0xff]
    %v137 = vld [vmem:[#allocation4 + $0x108] sm:$0xff]
    %v138 = vld [vmem:[#allocation4 + $0x110] sm:$0xff]
    %v139 = vld [vmem:[#allocation4 + $0x118] sm:$0xff]
    %v140 = vld [vmem:[#allocation4 + $0x120] sm:$0xff]
    %v141 = vld [vmem:[#allocation4 + $0x128] sm:$0xff]
    %v142 = vld [vmem:[#allocation4 + $0x130] sm:$0xff]
    %v143 = vld [vmem:[#allocation4 + $0x138] sm:$0xff]
    %v144 = vld [vmem:[#allocation4 + $0x140] sm:$0xff]
    %v145 = vld [vmem:[#allocation4 + $0x148] sm:$0xff]
    %v146 = vld [vmem:[#allocation4 + $0x150] sm:$0xff]
    %v147 = vld [vmem:[#allocation4 + $0x158] sm:$0xff]
    %v148 = vld [vmem:[#allocation4 + $0x160] sm:$0xff]
    %v149 = vld [vmem:[#allocation4 + $0x168] sm:$0xff]
    %v150 = vld [vmem:[#allocation4 + $0x170] sm:$0xff]
    %v151 = vld [vmem:[#allocation4 + $0x178] sm:$0xff]
    %v152 = vld [vmem:[#allocation4 + $0x180] sm:$0xff]
    %v153 = vld [vmem:[#allocation4 + $0x188] sm:$0xff]
    %v154 = vld [vmem:[#allocation4 + $0x190] sm:$0xff]
    %v155 = vld [vmem:[#allocation4 + $0x198] sm:$0xff]
    %v156 = vld [vmem:[#allocation4 + $0x1a0] sm:$0xff]
    %v157 = vld [vmem:[#allocation4 + $0x1a8] sm:$0xff]
    %v158 = vld [vmem:[#allocation4 + $0x1b0] sm:$0xff]
    %v159 = vld [vmem:[#allocation4 + $0x1b8] sm:$0xff]
    %v160 = vld [vmem:[#allocation4 + $0x1c0] sm:$0xff]
    %v161 = vld [vmem:[#allocation4 + $0x1c8] sm:$0xff]
    %v162 = vld [vmem:[#allocation4 + $0x1d0] sm:$0xff]
    %v163 = vld [vmem:[#allocation4 + $0x1d8] sm:$0xff]
    %v164 = vld [vmem:[#allocation4 + $0x1e0] sm:$0xff]
    %v165 = vld [vmem:[#allocation4 + $0x1e8] sm:$0xff]
    %v166 = vld [vmem:[#allocation4 + $0x1f0] sm:$0xff]
    %v167 = vld [vmem:[#allocation4 + $0x1f8] sm:$0xff]
    %v168 = vld [vmem:[%s5] sm:$0xf]
    %v170 = vlaneseq
    %v171 = vshrl.u32 %v170, 7
    %v172 = vsub.s32 0, %v171
    %v173 = vrot.slane %v168, %v172
    %v174 = vlaneseq
    %v175 = vshrl.u32 %v174, 7
    %v176 = vsub.s32 1, %v175
    %v177 = vrot.slane %v168, %v176
    %v178 = vlaneseq
    %v179 = vshrl.u32 %v178, 7
    %v180 = vsub.s32 2, %v179
    %v181 = vrot.slane %v168, %v180
    %v182 = vlaneseq
    %v183 = vshrl.u32 %v182, 7
    %v184 = vsub.s32 3, %v183
    %v185 = vrot.slane %v168, %v184
    %190 = vmatprep.subr.mxu0 %v165
    %191 = vmatpush1.msra.mxu0 %v164
    %192 = vmatprep.subr.mxu0 %v161
    %193 = vmatpush1.msra.mxu0 %v160
    %194 = vmatprep.subr.mxu0 %v157
    %195 = vmatpush1.msra.mxu0 %v156
    %196 = vmatprep.subr.mxu0 %v153
    %197 = vmatpush1.msra.mxu0 %v152
    %198 = vmatprep.subr.mxu0 %v149
    %199 = vmatpush1.msra.mxu0 %v148
    %200 = vmatprep.subr.mxu0 %v145
    %201 = vmatpush1.msra.mxu0 %v144
    %202 = vmatprep.subr.mxu0 %v141
    %203 = vmatpush1.msra.mxu0 %v140
    %204 = vmatprep.subr.mxu0 %v137
    %205 = vmatpush1.msra.mxu0 %v136
    %206 = vmatprep.subr.mxu0 %v133
    %207 = vmatpush1.msra.mxu0 %v132
    %208 = vmatprep.subr.mxu0 %v129
    %209 = vmatpush1.msra.mxu0 %v128
    %210 = vmatprep.subr.mxu0 %v125
    %211 = vmatpush1.msra.mxu0 %v124
    %212 = vmatprep.subr.mxu0 %v121
    %213 = vmatpush1.msra.mxu0 %v120
    %214 = vmatprep.subr.mxu0 %v117
    %215 = vmatpush1.msra.mxu0 %v116
    %216 = vmatprep.subr.mxu0 %v113
    %217 = vmatpush1.msra.mxu0 %v112
    %218 = vmatprep.subr.mxu0 %v109
    %219 = vmatpush1.msra.mxu0 %v108
    %220 = vmatprep.subr.mxu0 %v105
    %221 = vmatpush1.msra.mxu0 %v104
    %222 = vmatprep.subr.mxu0 0.0
    %223 = vmatpush2.msra.mxu0 0.0
    %224 = vmatprep.subr.mxu0 0.0
    %225 = vmatpush2.msra.mxu0 0.0
    %226 = vmatprep.subr.mxu0 0.0
    %227 = vmatpush2.msra.mxu0 0.0
    %228 = vmatprep.subr.mxu0 0.0
    %229 = vmatpush2.msra.mxu0 0.0
    %230 = vmatprep.subr.mxu0 0.0
    %231 = vmatpush2.msra.mxu0 0.0
    %232 = vmatprep.subr.mxu0 0.0
    %233 = vmatpush2.msra.mxu0 0.0
    %234 = vmatprep.subr.mxu0 0.0
    %235 = vmatpush2.msra.mxu0 0.0
    %236 = vmatprep.subr.mxu0 0.0
    %237 = vmatpush2.msra.mxu0 0.0
    %238 = vmatprep.subr.mxu0 0.0
    %239 = vmatpush2.msra.mxu0 0.0
    %240 = vmatprep.subr.mxu0 0.0
    %241 = vmatpush2.msra.mxu0 0.0
    %242 = vmatprep.subr.mxu0 0.0
    %243 = vmatpush2.msra.mxu0 0.0
    %244 = vmatprep.subr.mxu0 0.0
    %245 = vmatpush2.msra.mxu0 0.0
    %246 = vmatprep.subr.mxu0 0.0
    %247 = vmatpush2.msra.mxu0 0.0
    %248 = vmatprep.subr.mxu0 0.0
    %249 = vmatpush2.msra.mxu0 0.0
    %250 = vmatprep.subr.mxu0 0.0
    %251 = vmatpush2.msra.mxu0 0.0
    %252 = vmatprep.subr.mxu0 0.0
    %253 = vmatpush2.msra.mxu0 0.0
    %254 = vmatprep.mubr.f32.mxu0 0.0
    %255 = vmatmul.mubr.f32.gmra.mxu0 %v96
    %v256 = vpop.f32.mrf.mxu0
    %v257 = vadd.f32 %v173, %v256
    %v258 = vpop.f32.mrf.mxu0
    %v259 = vadd.f32 %v177, %v258
    %260 = vmatprep.mubr.f32.mxu0 0.0
    %261 = vmatmul.mubr.f32.gmra.mxu0 %v97
    %v262 = vpop.f32.mrf.mxu0
    %v263 = vadd.f32 %v173, %v262
    %v264 = vpop.f32.mrf.mxu0
    %v265 = vadd.f32 %v177, %v264
    %266 = vmatprep.mubr.f32.mxu0 0.0
    %267 = vmatmul.mubr.f32.gmra.mxu0 %v98
    %v268 = vpop.f32.mrf.mxu0
    %v269 = vadd.f32 %v173, %v268
    %v270 = vpop.f32.mrf.mxu0
    %v271 = vadd.f32 %v177, %v270
    %272 = vmatprep.mubr.f32.mxu0 0.0
    %273 = vmatmul.mubr.f32.gmra.mxu0 %v99
    %v274 = vpop.f32.mrf.mxu0
    %v275 = vadd.f32 %v173, %v274
    %v276 = vpop.f32.mrf.mxu0
    %v277 = vadd.f32 %v177, %v276
    %278 = vmatprep.mubr.f32.mxu0 0.0
    %279 = vmatmul.mubr.f32.gmra.mxu0 %v100
    %v280 = vpop.f32.mrf.mxu0
    %v281 = vadd.f32 %v173, %v280
    %v282 = vpop.f32.mrf.mxu0
    %v283 = vadd.f32 %v177, %v282
    %284 = vmatprep.mubr.f32.mxu0 0.0
    %285 = vmatmul.mubr.f32.gmra.mxu0 %v101
    %v286 = vpop.f32.mrf.mxu0
    %v287 = vadd.f32 %v173, %v286
    %v288 = vpop.f32.mrf.mxu0
    %v289 = vadd.f32 %v177, %v288
    %290 = vmatprep.mubr.f32.mxu0 0.0
    %291 = vmatmul.mubr.f32.gmra.mxu0 %v102
    %v292 = vpop.f32.mrf.mxu0
    %v293 = vadd.f32 %v173, %v292
    %v294 = vpop.f32.mrf.mxu0
    %v295 = vadd.f32 %v177, %v294
    %296 = vmatprep.mubr.f32.mxu0 0.0
    %297 = vmatmul.mubr.f32.gmra.mxu0 %v103
    %v298 = vpop.f32.mrf.mxu0
    %v299 = vadd.f32 %v173, %v298
    %v300 = vpop.f32.mrf.mxu0
    %v301 = vadd.f32 %v177, %v300
    %302 = vdwg.mxu0
    %303 = vmatprep.subr.mxu0 %v167
    %304 = vmatpush1.msra.mxu0 %v166
    %305 = vmatprep.subr.mxu0 %v163
    %306 = vmatpush1.msra.mxu0 %v162
    %307 = vmatprep.subr.mxu0 %v159
    %308 = vmatpush1.msra.mxu0 %v158
    %309 = vmatprep.subr.mxu0 %v155
    %310 = vmatpush1.msra.mxu0 %v154
    %311 = vmatprep.subr.mxu0 %v151
    %312 = vmatpush1.msra.mxu0 %v150
    %313 = vmatprep.subr.mxu0 %v147
    %314 = vmatpush1.msra.mxu0 %v146
    %315 = vmatprep.subr.mxu0 %v143
    %316 = vmatpush1.msra.mxu0 %v142
    %317 = vmatprep.subr.mxu0 %v139
    %318 = vmatpush1.msra.mxu0 %v138
    %319 = vmatprep.subr.mxu0 %v135
    %320 = vmatpush1.msra.mxu0 %v134
    %321 = vmatprep.subr.mxu0 %v131
    %322 = vmatpush1.msra.mxu0 %v130
    %323 = vmatprep.subr.mxu0 %v127
    %324 = vmatpush1.msra.mxu0 %v126
    %325 = vmatprep.subr.mxu0 %v123
    %326 = vmatpush1.msra.mxu0 %v122
    %327 = vmatprep.subr.mxu0 %v119
    %328 = vmatpush1.msra.mxu0 %v118
    %329 = vmatprep.subr.mxu0 %v115
    %330 = vmatpush1.msra.mxu0 %v114
    %331 = vmatprep.subr.mxu0 %v111
    %332 = vmatpush1.msra.mxu0 %v110
    %333 = vmatprep.subr.mxu0 %v107
    %334 = vmatpush1.msra.mxu0 %v106
    %335 = vmatprep.subr.mxu0 0.0
    %336 = vmatpush2.msra.mxu0 0.0
    %337 = vmatprep.subr.mxu0 0.0
    %338 = vmatpush2.msra.mxu0 0.0
    %339 = vmatprep.subr.mxu0 0.0
    %340 = vmatpush2.msra.mxu0 0.0
    %341 = vmatprep.subr.mxu0 0.0
    %342 = vmatpush2.msra.mxu0 0.0
    %343 = vmatprep.subr.mxu0 0.0
    %344 = vmatpush2.msra.mxu0 0.0
    %345 = vmatprep.subr.mxu0 0.0
    %346 = vmatpush2.msra.mxu0 0.0
    %347 = vmatprep.subr.mxu0 0.0
    %348 = vmatpush2.msra.mxu0 0.0
    %349 = vmatprep.subr.mxu0 0.0
    %350 = vmatpush2.msra.mxu0 0.0
    %351 = vmatprep.subr.mxu0 0.0
    %352 = vmatpush2.msra.mxu0 0.0
    %353 = vmatprep.subr.mxu0 0.0
    %354 = vmatpush2.msra.mxu0 0.0
    %355 = vmatprep.subr.mxu0 0.0
    %356 = vmatpush2.msra.mxu0 0.0
    %357 = vmatprep.subr.mxu0 0.0
    %358 = vmatpush2.msra.mxu0 0.0
    %359 = vmatprep.subr.mxu0 0.0
    %360 = vmatpush2.msra.mxu0 0.0
    %361 = vmatprep.subr.mxu0 0.0
    %362 = vmatpush2.msra.mxu0 0.0
    %363 = vmatprep.subr.mxu0 0.0
    %364 = vmatpush2.msra.mxu0 0.0
    %365 = vmatprep.subr.mxu0 0.0
    %366 = vmatpush2.msra.mxu0 0.0
    %367 = vmatprep.mubr.f32.mxu0 0.0
    %368 = vmatmul.mubr.f32.gmra.mxu0 %v96
    %v369 = vpop.f32.mrf.mxu0
    %v370 = vadd.f32 %v181, %v369
    %v371 = vpop.f32.mrf.mxu0
    %v372 = vadd.f32 %v185, %v371
    %373 = vmatprep.mubr.f32.mxu0 0.0
    %374 = vmatmul.mubr.f32.gmra.mxu0 %v97
    %v375 = vpop.f32.mrf.mxu0
    %v376 = vadd.f32 %v181, %v375
    %v377 = vpop.f32.mrf.mxu0
    %v378 = vadd.f32 %v185, %v377
    %379 = vmatprep.mubr.f32.mxu0 0.0
    %380 = vmatmul.mubr.f32.gmra.mxu0 %v98
    %v381 = vpop.f32.mrf.mxu0
    %v382 = vadd.f32 %v181, %v381
    %v383 = vpop.f32.mrf.mxu0
    %v384 = vadd.f32 %v185, %v383
    %385 = vmatprep.mubr.f32.mxu0 0.0
    %386 = vmatmul.mubr.f32.gmra.mxu0 %v99
    %v387 = vpop.f32.mrf.mxu0
    %v388 = vadd.f32 %v181, %v387
    %v389 = vpop.f32.mrf.mxu0
    %v390 = vadd.f32 %v185, %v389
    %391 = vmatprep.mubr.f32.mxu0 0.0
    %392 = vmatmul.mubr.f32.gmra.mxu0 %v100
    %v393 = vpop.f32.mrf.mxu0
    %v394 = vadd.f32 %v181, %v393
    %v395 = vpop.f32.mrf.mxu0
    %v396 = vadd.f32 %v185, %v395
    %397 = vmatprep.mubr.f32.mxu0 0.0
    %398 = vmatmul.mubr.f32.gmra.mxu0 %v101
    %v399 = vpop.f32.mrf.mxu0
    %v400 = vadd.f32 %v181, %v399
    %v401 = vpop.f32.mrf.mxu0
    %v402 = vadd.f32 %v185, %v401
    %403 = vmatprep.mubr.f32.mxu0 0.0
    %404 = vmatmul.mubr.f32.gmra.mxu0 %v102
    %v405 = vpop.f32.mrf.mxu0
    %v406 = vadd.f32 %v181, %v405
    %v407 = vpop.f32.mrf.mxu0
    %v408 = vadd.f32 %v185, %v407
    %409 = vmatprep.mubr.f32.mxu0 0.0
    %410 = vmatmul.mubr.f32.gmra.mxu0 %v103
    %v411 = vpop.f32.mrf.mxu0
    %v412 = vadd.f32 %v181, %v411
    %v413 = vpop.f32.mrf.mxu0
    %v414 = vadd.f32 %v185, %v413
    %415 = vdwg.mxu0
    %416 = vst [vmem:[#allocation3] sm:$0xff] %v257
    %417 = vst [vmem:[#allocation3 + $0x8] sm:$0xff] %v259
    %418 = vst [vmem:[#allocation3 + $0x10] sm:$0xff] %v370
    %419 = vst [vmem:[#allocation3 + $0x18] sm:$0xff] %v372
    %420 = vst [vmem:[#allocation3 + $0x20] sm:$0xff] %v263
    %421 = vst [vmem:[#allocation3 + $0x28] sm:$0xff] %v265
    %422 = vst [vmem:[#allocation3 + $0x30] sm:$0xff] %v376
    %423 = vst [vmem:[#allocation3 + $0x38] sm:$0xff] %v378
    %424 = vst [vmem:[#allocation3 + $0x40] sm:$0xff] %v269
    %425 = vst [vmem:[#allocation3 + $0x48] sm:$0xff] %v271
    %426 = vst [vmem:[#allocation3 + $0x50] sm:$0xff] %v382
    %427 = vst [vmem:[#allocation3 + $0x58] sm:$0xff] %v384
    %428 = vst [vmem:[#allocation3 + $0x60] sm:$0xff] %v275
    %429 = vst [vmem:[#allocation3 + $0x68] sm:$0xff] %v277
    %430 = vst [vmem:[#allocation3 + $0x70] sm:$0xff] %v388
    %431 = vst [vmem:[#allocation3 + $0x78] sm:$0xff] %v390
    %432 = vst [vmem:[#allocation3 + $0x80] sm:$0xff] %v281
    %433 = vst [vmem:[#allocation3 + $0x88] sm:$0xff] %v283
    %434 = vst [vmem:[#allocation3 + $0x90] sm:$0xff] %v394
    %435 = vst [vmem:[#allocation3 + $0x98] sm:$0xff] %v396
    %436 = vst [vmem:[#allocation3 + $0xa0] sm:$0xff] %v287
    %437 = vst [vmem:[#allocation3 + $0xa8] sm:$0xff] %v289
    %438 = vst [vmem:[#allocation3 + $0xb0] sm:$0xff] %v400
    %439 = vst [vmem:[#allocation3 + $0xb8] sm:$0xff] %v402
    %440 = vst [vmem:[#allocation3 + $0xc0] sm:$0xff] %v293
    %441 = vst [vmem:[#allocation3 + $0xc8] sm:$0xff] %v295
    %442 = vst [vmem:[#allocation3 + $0xd0] sm:$0xff] %v406
    %443 = vst [vmem:[#allocation3 + $0xd8] sm:$0xff] %v408
    %444 = vst [vmem:[#allocation3 + $0xe0] sm:$0xff] %v299
    %445 = vst [vmem:[#allocation3 + $0xe8] sm:$0xff] %v301
    %446 = vst [vmem:[#allocation3 + $0xf0] sm:$0xff] %v412
    %447 = vst [vmem:[#allocation3 + $0xf8] sm:$0xff] %v414
    %v448 = vld [vmem:[%s1] sm:$0xff]
    %v449 = vld [vmem:[%s2] sm:$0xff]
    %v450 = vld [vmem:[#allocation3] sm:$0xff]
    %v451 = vld [vmem:[#allocation3 + $0x8] sm:$0xff]
    %v452 = vld [vmem:[#allocation3 + $0x10] sm:$0xff]
    %v453 = vld [vmem:[#allocation3 + $0x18] sm:$0xff]
    %v454 = vld [vmem:[#allocation6] sm:$0xff]
    %v455 = vld [vmem:[#allocation6 + $0x8] sm:$0xff]
    %v456 = vld [vmem:[#allocation6 + $0x10] sm:$0xff]
    %v457 = vld [vmem:[#allocation6 + $0x18] sm:$0xff]
    %v458 = vld [vmem:[#allocation6 + $0x20] sm:$0xff]
    %v459 = vld [vmem:[#allocation6 + $0x28] sm:$0xff]
    %v460 = vld [vmem:[#allocation6 + $0x30] sm:$0xff]
    %v461 = vld [vmem:[#allocation6 + $0x38] sm:$0xff]
    %v462 = vld [vmem:[#allocation6 + $0x40] sm:$0xff]
    %v463 = vld [vmem:[#allocation6 + $0x48] sm:$0xff]
    %v464 = vld [vmem:[#allocation6 + $0x50] sm:$0xff]
    %v465 = vld [vmem:[#allocation6 + $0x58] sm:$0xff]
    %v466 = vld [vmem:[#allocation6 + $0x60] sm:$0xff]
    %v467 = vld [vmem:[#allocation6 + $0x68] sm:$0xff]
    %v468 = vld [vmem:[#allocation6 + $0x70] sm:$0xff]
    %v469 = vld [vmem:[#allocation6 + $0x78] sm:$0xff]
    %v470 = vld [vmem:[#allocation6 + $0x80] sm:$0xff]
    %v471 = vld [vmem:[#allocation6 + $0x88] sm:$0xff]
    %v472 = vld [vmem:[#allocation6 + $0x90] sm:$0xff]
    %v473 = vld [vmem:[#allocation6 + $0x98] sm:$0xff]
    %v474 = vld [vmem:[#allocation6 + $0xa0] sm:$0xff]
    %v475 = vld [vmem:[#allocation6 + $0xa8] sm:$0xff]
    %v476 = vld [vmem:[#allocation6 + $0xb0] sm:$0xff]
    %v477 = vld [vmem:[#allocation6 + $0xb8] sm:$0xff]
    %v478 = vld [vmem:[#allocation6 + $0xc0] sm:$0xff]
    %v479 = vld [vmem:[#allocation6 + $0xc8] sm:$0xff]
    %v480 = vld [vmem:[#allocation6 + $0xd0] sm:$0xff]
    %v481 = vld [vmem:[#allocation6 + $0xd8] sm:$0xff]
    %v482 = vld [vmem:[#allocation6 + $0xe0] sm:$0xff]
    %v483 = vld [vmem:[#allocation6 + $0xe8] sm:$0xff]
    %v484 = vld [vmem:[#allocation6 + $0xf0] sm:$0xff]
    %v485 = vld [vmem:[#allocation6 + $0xf8] sm:$0xff]
    %v486 = vld [vmem:[#allocation6 + $0x100] sm:$0xff]
    %v487 = vld [vmem:[#allocation6 + $0x108] sm:$0xff]
    %v488 = vld [vmem:[#allocation6 + $0x110] sm:$0xff]
    %v489 = vld [vmem:[#allocation6 + $0x118] sm:$0xff]
    %v490 = vld [vmem:[#allocation6 + $0x120] sm:$0xff]
    %v491 = vld [vmem:[#allocation6 + $0x128] sm:$0xff]
    %v492 = vld [vmem:[#allocation6 + $0x130] sm:$0xff]
    %v493 = vld [vmem:[#allocation6 + $0x138] sm:$0xff]
    %v494 = vld [vmem:[#allocation6 + $0x140] sm:$0xff]
    %v495 = vld [vmem:[#allocation6 + $0x148] sm:$0xff]
    %v496 = vld [vmem:[#allocation6 + $0x150] sm:$0xff]
    %v497 = vld [vmem:[#allocation6 + $0x158] sm:$0xff]
    %v498 = vld [vmem:[#allocation6 + $0x160] sm:$0xff]
    %v499 = vld [vmem:[#allocation6 + $0x168] sm:$0xff]
    %v500 = vld [vmem:[#allocation6 + $0x170] sm:$0xff]
    %v501 = vld [vmem:[#allocation6 + $0x178] sm:$0xff]
    %v502 = vld [vmem:[#allocation6 + $0x180] sm:$0xff]
    %v503 = vld [vmem:[#allocation6 + $0x188] sm:$0xff]
    %v504 = vld [vmem:[#allocation6 + $0x190] sm:$0xff]
    %v505 = vld [vmem:[#allocation6 + $0x198] sm:$0xff]
    %v506 = vld [vmem:[#allocation6 + $0x1a0] sm:$0xff]
    %v507 = vld [vmem:[#allocation6 + $0x1a8] sm:$0xff]
    %v508 = vld [vmem:[#allocation6 + $0x1b0] sm:$0xff]
    %v509 = vld [vmem:[#allocation6 + $0x1b8] sm:$0xff]
    %v510 = vld [vmem:[#allocation6 + $0x1c0] sm:$0xff]
    %v511 = vld [vmem:[#allocation6 + $0x1c8] sm:$0xff]
    %v512 = vld [vmem:[#allocation6 + $0x1d0] sm:$0xff]
    %v513 = vld [vmem:[#allocation6 + $0x1d8] sm:$0xff]
    %v514 = vld [vmem:[#allocation6 + $0x1e0] sm:$0xff]
    %v515 = vld [vmem:[#allocation6 + $0x1e8] sm:$0xff]
    %v516 = vld [vmem:[#allocation6 + $0x1f0] sm:$0xff]
    %v517 = vld [vmem:[#allocation6 + $0x1f8] sm:$0xff]
    %518 = vmatprep.subr.mxu0 %v515
    %519 = vmatpush1.msra.mxu0 %v514
    %520 = vmatprep.subr.mxu0 %v511
    %521 = vmatpush1.msra.mxu0 %v510
    %522 = vmatprep.subr.mxu0 %v507
    %523 = vmatpush1.msra.mxu0 %v506
    %524 = vmatprep.subr.mxu0 %v503
    %525 = vmatpush1.msra.mxu0 %v502
    %526 = vmatprep.subr.mxu0 %v499
    %527 = vmatpush1.msra.mxu0 %v498
    %528 = vmatprep.subr.mxu0 %v495
    %529 = vmatpush1.msra.mxu0 %v494
    %530 = vmatprep.subr.mxu0 %v491
    %531 = vmatpush1.msra.mxu0 %v490
    %532 = vmatprep.subr.mxu0 %v487
    %533 = vmatpush1.msra.mxu0 %v486
    %534 = vmatprep.subr.mxu0 %v483
    %535 = vmatpush1.msra.mxu0 %v482
    %536 = vmatprep.subr.mxu0 %v479
    %537 = vmatpush1.msra.mxu0 %v478
    %538 = vmatprep.subr.mxu0 %v475
    %539 = vmatpush1.msra.mxu0 %v474
    %540 = vmatprep.subr.mxu0 %v471
    %541 = vmatpush1.msra.mxu0 %v470
    %542 = vmatprep.subr.mxu0 %v467
    %543 = vmatpush1.msra.mxu0 %v466
    %544 = vmatprep.subr.mxu0 %v463
    %545 = vmatpush1.msra.mxu0 %v462
    %546 = vmatprep.subr.mxu0 %v459
    %547 = vmatpush1.msra.mxu0 %v458
    %548 = vmatprep.subr.mxu0 %v455
    %549 = vmatpush1.msra.mxu0 %v454
    %550 = vmatprep.subr.mxu0 0.0
    %551 = vmatpush2.msra.mxu0 0.0
    %552 = vmatprep.subr.mxu0 0.0
    %553 = vmatpush2.msra.mxu0 0.0
    %554 = vmatprep.subr.mxu0 0.0
    %555 = vmatpush2.msra.mxu0 0.0
    %556 = vmatprep.subr.mxu0 0.0
    %557 = vmatpush2.msra.mxu0 0.0
    %558 = vmatprep.subr.mxu0 0.0
    %559 = vmatpush2.msra.mxu0 0.0
    %560 = vmatprep.subr.mxu0 0.0
    %561 = vmatpush2.msra.mxu0 0.0
    %562 = vmatprep.subr.mxu0 0.0
    %563 = vmatpush2.msra.mxu0 0.0
    %564 = vmatprep.subr.mxu0 0.0
    %565 = vmatpush2.msra.mxu0 0.0
    %566 = vmatprep.subr.mxu0 0.0
    %567 = vmatpush2.msra.mxu0 0.0
    %568 = vmatprep.subr.mxu0 0.0
    %569 = vmatpush2.msra.mxu0 0.0
    %570 = vmatprep.subr.mxu0 0.0
    %571 = vmatpush2.msra.mxu0 0.0
    %572 = vmatprep.subr.mxu0 0.0
    %573 = vmatpush2.msra.mxu0 0.0
    %574 = vmatprep.subr.mxu0 0.0
    %575 = vmatpush2.msra.mxu0 0.0
    %576 = vmatprep.subr.mxu0 0.0
    %577 = vmatpush2.msra.mxu0 0.0
    %578 = vmatprep.subr.mxu0 0.0
    %579 = vmatpush2.msra.mxu0 0.0
    %580 = vmatprep.subr.mxu0 0.0
    %581 = vmatpush2.msra.mxu0 0.0
    %582 = vmatprep.mubr.f32.mxu0 0.0
    %583 = vmatmul.mubr.f32.gmra.mxu0 %v448
    %v584 = vpop.f32.mrf.mxu0
    %v585 = vadd.f32 0.0, %v584
    %v586 = vpop.f32.mrf.mxu0
    %v587 = vadd.f32 0.0, %v586
    %588 = vdwg.mxu0
    %589 = vmatprep.subr.mxu0 %v517
    %590 = vmatpush1.msra.mxu0 %v516
    %591 = vmatprep.subr.mxu0 %v513
    %592 = vmatpush1.msra.mxu0 %v512
    %593 = vmatprep.subr.mxu0 %v509
    %594 = vmatpush1.msra.mxu0 %v508
    %595 = vmatprep.subr.mxu0 %v505
    %596 = vmatpush1.msra.mxu0 %v504
    %597 = vmatprep.subr.mxu0 %v501
    %598 = vmatpush1.msra.mxu0 %v500
    %599 = vmatprep.subr.mxu0 %v497
    %600 = vmatpush1.msra.mxu0 %v496
    %601 = vmatprep.subr.mxu0 %v493
    %602 = vmatpush1.msra.mxu0 %v492
    %603 = vmatprep.subr.mxu0 %v489
    %604 = vmatpush1.msra.mxu0 %v488
    %605 = vmatprep.subr.mxu0 %v485
    %606 = vmatpush1.msra.mxu0 %v484
    %607 = vmatprep.subr.mxu0 %v481
    %608 = vmatpush1.msra.mxu0 %v480
    %609 = vmatprep.subr.mxu0 %v477
    %610 = vmatpush1.msra.mxu0 %v476
    %611 = vmatprep.subr.mxu0 %v473
    %612 = vmatpush1.msra.mxu0 %v472
    %613 = vmatprep.subr.mxu0 %v469
    %614 = vmatpush1.msra.mxu0 %v468
    %615 = vmatprep.subr.mxu0 %v465
    %616 = vmatpush1.msra.mxu0 %v464
    %617 = vmatprep.subr.mxu0 %v461
    %618 = vmatpush1.msra.mxu0 %v460
    %619 = vmatprep.subr.mxu0 %v457
    %620 = vmatpush1.msra.mxu0 %v456
    %621 = vmatprep.subr.mxu0 0.0
    %622 = vmatpush2.msra.mxu0 0.0
    %623 = vmatprep.subr.mxu0 0.0
    %624 = vmatpush2.msra.mxu0 0.0
    %625 = vmatprep.subr.mxu0 0.0
    %626 = vmatpush2.msra.mxu0 0.0
    %627 = vmatprep.subr.mxu0 0.0
    %628 = vmatpush2.msra.mxu0 0.0
    %629 = vmatprep.subr.mxu0 0.0
    %630 = vmatpush2.msra.mxu0 0.0
    %631 = vmatprep.subr.mxu0 0.0
    %632 = vmatpush2.msra.mxu0 0.0
    %633 = vmatprep.subr.mxu0 0.0
    %634 = vmatpush2.msra.mxu0 0.0
    %635 = vmatprep.subr.mxu0 0.0
    %636 = vmatpush2.msra.mxu0 0.0
    %637 = vmatprep.subr.mxu0 0.0
    %638 = vmatpush2.msra.mxu0 0.0
    %639 = vmatprep.subr.mxu0 0.0
    %640 = vmatpush2.msra.mxu0 0.0
    %641 = vmatprep.subr.mxu0 0.0
    %642 = vmatpush2.msra.mxu0 0.0
    %643 = vmatprep.subr.mxu0 0.0
    %644 = vmatpush2.msra.mxu0 0.0
    %645 = vmatprep.subr.mxu0 0.0
    %646 = vmatpush2.msra.mxu0 0.0
    %647 = vmatprep.subr.mxu0 0.0
    %648 = vmatpush2.msra.mxu0 0.0
    %649 = vmatprep.subr.mxu0 0.0
    %650 = vmatpush2.msra.mxu0 0.0
    %651 = vmatprep.subr.mxu0 0.0
    %652 = vmatpush2.msra.mxu0 0.0
    %653 = vmatprep.mubr.f32.mxu0 0.0
    %654 = vmatmul.mubr.f32.gmra.mxu0 %v448
    %v655 = vpop.f32.mrf.mxu0
    %v656 = vadd.f32 0.0, %v655
    %v657 = vpop.f32.mrf.mxu0
    %v658 = vadd.f32 0.0, %v657
    %659 = vdwg.mxu0
    %v660 = vadd.f32 %v450, %v585
    %v661 = vadd.f32 %v451, %v587
    %v662 = vadd.f32 %v452, %v656
    %v663 = vadd.f32 %v453, %v658
    %v664 = vxor.u32 %v660, 2147483648
    %v665 = vmul.f32 %v664, 1.442695
    %v666 = vpow.pop %v665
    %v667 = vadd.f32 %v666, 1.0
    %v668 = vrcp.pop %v667
    %v669 = vmul.f32 1.0, %v668
    %v670 = vxor.u32 %v661, 2147483648
    %v671 = vmul.f32 %v670, 1.442695
    %v672 = vpow.pop %v671
    %v673 = vadd.f32 %v672, 1.0
    %v674 = vrcp.pop %v673
    %v675 = vmul.f32 1.0, %v674
    %v676 = vtanh.pop %v662
    %v677 = vxor.u32 %v663, 2147483648
    %v678 = vmul.f32 %v677, 1.442695
    %v679 = vpow.pop %v678
    %v680 = vadd.f32 %v679, 1.0
    %v681 = vrcp.pop %v680
    %v682 = vmul.f32 1.0, %v681
    %v683 = vmul.f32 %v675, %v449
    %v684 = vmul.f32 %v669, %v676
    %v685 = vadd.f32 %v683, %v684
    %v686 = vtanh.pop %v685
    %v687 = vmul.f32 %v682, %v686
    %688 = vst [vmem:[#allocation2] sm:$0xff] %v687
    %s689 = scalar_lea.vmem [#allocation3], 32
    %v690 = vld [vmem:[%s689] sm:$0xff]
    %v691 = vld [vmem:[%s689 + $0x8] sm:$0xff]
    %v692 = vld [vmem:[%s689 + $0x10] sm:$0xff]
    %v693 = vld [vmem:[%s689 + $0x18] sm:$0xff]
    %v694 = vld [vmem:[#allocation6] sm:$0xff]
    %v695 = vld [vmem:[#allocation6 + $0x8] sm:$0xff]
    %v696 = vld [vmem:[#allocation6 + $0x10] sm:$0xff]
    %v697 = vld [vmem:[#allocation6 + $0x18] sm:$0xff]
    %v698 = vld [vmem:[#allocation6 + $0x20] sm:$0xff]
    %v699 = vld [vmem:[#allocation6 + $0x28] sm:$0xff]
    %v700 = vld [vmem:[#allocation6 + $0x30] sm:$0xff]
    %v701 = vld [vmem:[#allocation6 + $0x38] sm:$0xff]
    %v702 = vld [vmem:[#allocation6 + $0x40] sm:$0xff]
    %v703 = vld [vmem:[#allocation6 + $0x48] sm:$0xff]
    %v704 = vld [vmem:[#allocation6 + $0x50] sm:$0xff]
    %v705 = vld [vmem:[#allocation6 + $0x58] sm:$0xff]
    %v706 = vld [vmem:[#allocation6 + $0x60] sm:$0xff]
    %v707 = vld [vmem:[#allocation6 + $0x68] sm:$0xff]
    %v708 = vld [vmem:[#allocation6 + $0x70] sm:$0xff]
    %v709 = vld [vmem:[#allocation6 + $0x78] sm:$0xff]
    %v710 = vld [vmem:[#allocation6 + $0x80] sm:$0xff]
    %v711 = vld [vmem:[#allocation6 + $0x88] sm:$0xff]
    %v712 = vld [vmem:[#allocation6 + $0x90] sm:$0xff]
    %v713 = vld [vmem:[#allocation6 + $0x98] sm:$0xff]
    %v714 = vld [vmem:[#allocation6 + $0xa0] sm:$0xff]
    %v715 = vld [vmem:[#allocation6 + $0xa8] sm:$0xff]
    %v716 = vld [vmem:[#allocation6 + $0xb0] sm:$0xff]
    %v717 = vld [vmem:[#allocation6 + $0xb8] sm:$0xff]
    %v718 = vld [vmem:[#allocation6 + $0xc0] sm:$0xff]
    %v719 = vld [vmem:[#allocation6 + $0xc8] sm:$0xff]
    %v720 = vld [vmem:[#allocation6 + $0xd0] sm:$0xff]
    %v721 = vld [vmem:[#allocation6 + $0xd8] sm:$0xff]
    %v722 = vld [vmem:[#allocation6 + $0xe0] sm:$0xff]
    %v723 = vld [vmem:[#allocation6 + $0xe8] sm:$0xff]
    %v724 = vld [vmem:[#allocation6 + $0xf0] sm:$0xff]
    %v725 = vld [vmem:[#allocation6 + $0xf8] sm:$0xff]
    %v726 = vld [vmem:[#allocation6 + $0x100] sm:$0xff]
    %v727 = vld [vmem:[#allocation6 + $0x108] sm:$0xff]
    %v728 = vld [vmem:[#allocation6 + $0x110] sm:$0xff]
    %v729 = vld [vmem:[#allocation6 + $0x118] sm:$0xff]
    %v730 = vld [vmem:[#allocation6 + $0x120] sm:$0xff]
    %v731 = vld [vmem:[#allocation6 + $0x128] sm:$0xff]
    %v732 = vld [vmem:[#allocation6 + $0x130] sm:$0xff]
    %v733 = vld [vmem:[#allocation6 + $0x138] sm:$0xff]
    %v734 = vld [vmem:[#allocation6 + $0x140] sm:$0xff]
    %v735 = vld [vmem:[#allocation6 + $0x148] sm:$0xff]
    %v736 = vld [vmem:[#allocation6 + $0x150] sm:$0xff]
    %v737 = vld [vmem:[#allocation6 + $0x158] sm:$0xff]
    %v738 = vld [vmem:[#allocation6 + $0x160] sm:$0xff]
    %v739 = vld [vmem:[#allocation6 + $0x168] sm:$0xff]
    %v740 = vld [vmem:[#allocation6 + $0x170] sm:$0xff]
    %v741 = vld [vmem:[#allocation6 + $0x178] sm:$0xff]
    %v742 = vld [vmem:[#allocation6 + $0x180] sm:$0xff]
    %v743 = vld [vmem:[#allocation6 + $0x188] sm:$0xff]
    %v744 = vld [vmem:[#allocation6 + $0x190] sm:$0xff]
    %v745 = vld [vmem:[#allocation6 + $0x198] sm:$0xff]
    %v746 = vld [vmem:[#allocation6 + $0x1a0] sm:$0xff]
    %v747 = vld [vmem:[#allocation6 + $0x1a8] sm:$0xff]
    %v748 = vld [vmem:[#allocation6 + $0x1b0] sm:$0xff]
    %v749 = vld [vmem:[#allocation6 + $0x1b8] sm:$0xff]
    %v750 = vld [vmem:[#allocation6 + $0x1c0] sm:$0xff]
    %v751 = vld [vmem:[#allocation6 + $0x1c8] sm:$0xff]
    %v752 = vld [vmem:[#allocation6 + $0x1d0] sm:$0xff]
    %v753 = vld [vmem:[#allocation6 + $0x1d8] sm:$0xff]
    %v754 = vld [vmem:[#allocation6 + $0x1e0] sm:$0xff]
    %v755 = vld [vmem:[#allocation6 + $0x1e8] sm:$0xff]
    %v756 = vld [vmem:[#allocation6 + $0x1f0] sm:$0xff]
    %v757 = vld [vmem:[#allocation6 + $0x1f8] sm:$0xff]
    %758 = vmatprep.subr.mxu0 %v755
    %759 = vmatpush1.msra.mxu0 %v754
    %760 = vmatprep.subr.mxu0 %v751
    %761 = vmatpush1.msra.mxu0 %v750
    %762 = vmatprep.subr.mxu0 %v747
    %763 = vmatpush1.msra.mxu0 %v746
    %764 = vmatprep.subr.mxu0 %v743
    %765 = vmatpush1.msra.mxu0 %v742
    %766 = vmatprep.subr.mxu0 %v739
    %767 = vmatpush1.msra.mxu0 %v738
    %768 = vmatprep.subr.mxu0 %v735
    %769 = vmatpush1.msra.mxu0 %v734
    %770 = vmatprep.subr.mxu0 %v731
    %771 = vmatpush1.msra.mxu0 %v730
    %772 = vmatprep.subr.mxu0 %v727
    %773 = vmatpush1.msra.mxu0 %v726
    %774 = vmatprep.subr.mxu0 %v723
    %775 = vmatpush1.msra.mxu0 %v722
    %776 = vmatprep.subr.mxu0 %v719
    %777 = vmatpush1.msra.mxu0 %v718
    %778 = vmatprep.subr.mxu0 %v715
    %779 = vmatpush1.msra.mxu0 %v714
    %780 = vmatprep.subr.mxu0 %v711
    %781 = vmatpush1.msra.mxu0 %v710
    %782 = vmatprep.subr.mxu0 %v707
    %783 = vmatpush1.msra.mxu0 %v706
    %784 = vmatprep.subr.mxu0 %v703
    %785 = vmatpush1.msra.mxu0 %v702
    %786 = vmatprep.subr.mxu0 %v699
    %787 = vmatpush1.msra.mxu0 %v698
    %788 = vmatprep.subr.mxu0 %v695
    %789 = vmatpush1.msra.mxu0 %v694
    %790 = vmatprep.subr.mxu0 0.0
    %791 = vmatpush2.msra.mxu0 0.0
    %792 = vmatprep.subr.mxu0 0.0
    %793 = vmatpush2.msra.mxu0 0.0
    %794 = vmatprep.subr.mxu0 0.0
    %795 = vmatpush2.msra.mxu0 0.0
    %796 = vmatprep.subr.mxu0 0.0
    %797 = vmatpush2.msra.mxu0 0.0
    %798 = vmatprep.subr.mxu0 0.0
    %799 = vmatpush2.msra.mxu0 0.0
    %800 = vmatprep.subr.mxu0 0.0
    %801 = vmatpush2.msra.mxu0 0.0
    %802 = vmatprep.subr.mxu0 0.0
    %803 = vmatpush2.msra.mxu0 0.0
    %804 = vmatprep.subr.mxu0 0.0
    %805 = vmatpush2.msra.mxu0 0.0
    %806 = vmatprep.subr.mxu0 0.0
    %807 = vmatpush2.msra.mxu0 0.0
    %808 = vmatprep.subr.mxu0 0.0
    %809 = vmatpush2.msra.mxu0 0.0
    %810 = vmatprep.subr.mxu0 0.0
    %811 = vmatpush2.msra.mxu0 0.0
    %812 = vmatprep.subr.mxu0 0.0
    %813 = vmatpush2.msra.mxu0 0.0
    %814 = vmatprep.subr.mxu0 0.0
    %815 = vmatpush2.msra.mxu0 0.0
    %816 = vmatprep.subr.mxu0 0.0
    %817 = vmatpush2.msra.mxu0 0.0
    %818 = vmatprep.subr.mxu0 0.0
    %819 = vmatpush2.msra.mxu0 0.0
    %820 = vmatprep.subr.mxu0 0.0
    %821 = vmatpush2.msra.mxu0 0.0
    %822 = vmatprep.mubr.f32.mxu0 0.0
    %823 = vmatmul.mubr.f32.gmra.mxu0 %v687
    %v824 = vpop.f32.mrf.mxu0
    %v825 = vadd.f32 0.0, %v824
    %v826 = vpop.f32.mrf.mxu0
    %v827 = vadd.f32 0.0, %v826
    %828 = vdwg.mxu0
    %829 = vmatprep.subr.mxu0 %v757
    %830 = vmatpush1.msra.mxu0 %v756
    %831 = vmatprep.subr.mxu0 %v753
    %832 = vmatpush1.msra.mxu0 %v752
    %833 = vmatprep.subr.mxu0 %v749
    %834 = vmatpush1.msra.mxu0 %v748
    %835 = vmatprep.subr.mxu0 %v745
    %836 = vmatpush1.msra.mxu0 %v744
    %837 = vmatprep.subr.mxu0 %v741
    %838 = vmatpush1.msra.mxu0 %v740
    %839 = vmatprep.subr.mxu0 %v737
    %840 = vmatpush1.msra.mxu0 %v736
    %841 = vmatprep.subr.mxu0 %v733
    %842 = vmatpush1.msra.mxu0 %v732
    %843 = vmatprep.subr.mxu0 %v729
    %844 = vmatpush1.msra.mxu0 %v728
    %845 = vmatprep.subr.mxu0 %v725
    %846 = vmatpush1.msra.mxu0 %v724
    %847 = vmatprep.subr.mxu0 %v721
    %848 = vmatpush1.msra.mxu0 %v720
    %849 = vmatprep.subr.mxu0 %v717
    %850 = vmatpush1.msra.mxu0 %v716
    %851 = vmatprep.subr.mxu0 %v713
    %852 = vmatpush1.msra.mxu0 %v712
    %853 = vmatprep.subr.mxu0 %v709
    %854 = vmatpush1.msra.mxu0 %v708
    %855 = vmatprep.subr.mxu0 %v705
    %856 = vmatpush1.msra.mxu0 %v704
    %857 = vmatprep.subr.mxu0 %v701
    %858 = vmatpush1.msra.mxu0 %v700
    %859 = vmatprep.subr.mxu0 %v697
    %860 = vmatpush1.msra.mxu0 %v696
    %861 = vmatprep.subr.mxu0 0.0
    %862 = vmatpush2.msra.mxu0 0.0
    %863 = vmatprep.subr.mxu0 0.0
    %864 = vmatpush2.msra.mxu0 0.0
    %865 = vmatprep.subr.mxu0 0.0
    %866 = vmatpush2.msra.mxu0 0.0
    %867 = vmatprep.subr.mxu0 0.0
    %868 = vmatpush2.msra.mxu0 0.0
    %869 = vmatprep.subr.mxu0 0.0
    %870 = vmatpush2.msra.mxu0 0.0
    %871 = vmatprep.subr.mxu0 0.0
    %872 = vmatpush2.msra.mxu0 0.0
    %873 = vmatprep.subr.mxu0 0.0
    %874 = vmatpush2.msra.mxu0 0.0
    %875 = vmatprep.subr.mxu0 0.0
    %876 = vmatpush2.msra.mxu0 0.0
    %877 = vmatprep.subr.mxu0 0.0
    %878 = vmatpush2.msra.mxu0 0.0
    %879 = vmatprep.subr.mxu0 0.0
    %880 = vmatpush2.msra.mxu0 0.0
    %881 = vmatprep.subr.mxu0 0.0
    %882 = vmatpush2.msra.mxu0 0.0
    %883 = vmatprep.subr.mxu0 0.0
    %884 = vmatpush2.msra.mxu0 0.0
    %885 = vmatprep.subr.mxu0 0.0
    %886 = vmatpush2.msra.mxu0 0.0
    %887 = vmatprep.subr.mxu0 0.0
    %888 = vmatpush2.msra.mxu0 0.0
    %889 = vmatprep.subr.mxu0 0.0
    %890 = vmatpush2.msra.mxu0 0.0
    %891 = vmatprep.subr.mxu0 0.0
    %892 = vmatpush2.msra.mxu0 0.0
    %893 = vmatprep.mubr.f32.mxu0 0.0
    %894 = vmatmul.mubr.f32.gmra.mxu0 %v687
    %v895 = vpop.f32.mrf.mxu0
    %v896 = vadd.f32 0.0, %v895
    %v897 = vpop.f32.mrf.mxu0
    %v898 = vadd.f32 0.0, %v897
    %899 = vdwg.mxu0
    %v900 = vadd.f32 %v690, %v825
    %v901 = vadd.f32 %v691, %v827
    %v902 = vadd.f32 %v692, %v896
    %v903 = vadd.f32 %v693, %v898
    %v904 = vxor.u32 %v900, 2147483648
    %v905 = vmul.f32 %v904, 1.442695
    %v906 = vpow.pop %v905
    %v907 = vadd.f32 %v906, 1.0
    %v908 = vrcp.pop %v907
    %v909 = vmul.f32 1.0, %v908
    %v910 = vxor.u32 %v901, 2147483648
    %v911 = vmul.f32 %v910, 1.442695
    %v912 = vpow.pop %v911
    %v913 = vadd.f32 %v912, 1.0
    %v914 = vrcp.pop %v913
    %v915 = vmul.f32 1.0, %v914
    %v916 = vtanh.pop %v902
    %v917 = vxor.u32 %v903, 2147483648
    %v918 = vmul.f32 %v917, 1.442695
    %v919 = vpow.pop %v918
    %v920 = vadd.f32 %v919, 1.0
    %v921 = vrcp.pop %v920
    %v922 = vmul.f32 1.0, %v921
    %v923 = vmul.f32 %v915, %v685
    %v924 = vmul.f32 %v909, %v916
    %v925 = vadd.f32 %v923, %v924
    %v926 = vtanh.pop %v925
    %v927 = vmul.f32 %v922, %v926
    %s928 = scalar_lea.vmem [#allocation2], 8
    %929 = vst [vmem:[%s928] sm:$0xff] %v927
    %s930 = scalar_lea.vmem [#allocation3], 64
    %v931 = vld [vmem:[%s930] sm:$0xff]
    %v932 = vld [vmem:[%s930 + $0x8] sm:$0xff]
    %v933 = vld [vmem:[%s930 + $0x10] sm:$0xff]
    %v934 = vld [vmem:[%s930 + $0x18] sm:$0xff]
    %v935 = vld [vmem:[#allocation6] sm:$0xff]
    %v936 = vld [vmem:[#allocation6 + $0x8] sm:$0xff]
    %v937 = vld [vmem:[#allocation6 + $0x10] sm:$0xff]
    %v938 = vld [vmem:[#allocation6 + $0x18] sm:$0xff]
    %v939 = vld [vmem:[#allocation6 + $0x20] sm:$0xff]
    %v940 = vld [vmem:[#allocation6 + $0x28] sm:$0xff]
    %v941 = vld [vmem:[#allocation6 + $0x30] sm:$0xff]
    %v942 = vld [vmem:[#allocation6 + $0x38] sm:$0xff]
    %v943 = vld [vmem:[#allocation6 + $0x40] sm:$0xff]
    %v944 = vld [vmem:[#allocation6 + $0x48] sm:$0xff]
    %v945 = vld [vmem:[#allocation6 + $0x50] sm:$0xff]
    %v946 = vld [vmem:[#allocation6 + $0x58] sm:$0xff]
    %v947 = vld [vmem:[#allocation6 + $0x60] sm:$0xff]
    %v948 = vld [vmem:[#allocation6 + $0x68] sm:$0xff]
    %v949 = vld [vmem:[#allocation6 + $0x70] sm:$0xff]
    %v950 = vld [vmem:[#allocation6 + $0x78] sm:$0xff]
    %v951 = vld [vmem:[#allocation6 + $0x80] sm:$0xff]
    %v952 = vld [vmem:[#allocation6 + $0x88] sm:$0xff]
    %v953 = vld [vmem:[#allocation6 + $0x90] sm:$0xff]
    %v954 = vld [vmem:[#allocation6 + $0x98] sm:$0xff]
    %v955 = vld [vmem:[#allocation6 + $0xa0] sm:$0xff]
    %v956 = vld [vmem:[#allocation6 + $0xa8] sm:$0xff]
    %v957 = vld [vmem:[#allocation6 + $0xb0] sm:$0xff]
    %v958 = vld [vmem:[#allocation6 + $0xb8] sm:$0xff]
    %v959 = vld [vmem:[#allocation6 + $0xc0] sm:$0xff]
    %v960 = vld [vmem:[#allocation6 + $0xc8] sm:$0xff]
    %v961 = vld [vmem:[#allocation6 + $0xd0] sm:$0xff]
    %v962 = vld [vmem:[#allocation6 + $0xd8] sm:$0xff]
    %v963 = vld [vmem:[#allocation6 + $0xe0] sm:$0xff]
    %v964 = vld [vmem:[#allocation6 + $0xe8] sm:$0xff]
    %v965 = vld [vmem:[#allocation6 + $0xf0] sm:$0xff]
    %v966 = vld [vmem:[#allocation6 + $0xf8] sm:$0xff]
    %v967 = vld [vmem:[#allocation6 + $0x100] sm:$0xff]
    %v968 = vld [vmem:[#allocation6 + $0x108] sm:$0xff]
    %v969 = vld [vmem:[#allocation6 + $0x110] sm:$0xff]
    %v970 = vld [vmem:[#allocation6 + $0x118] sm:$0xff]
    %v971 = vld [vmem:[#allocation6 + $0x120] sm:$0xff]
    %v972 = vld [vmem:[#allocation6 + $0x128] sm:$0xff]
    %v973 = vld [vmem:[#allocation6 + $0x130] sm:$0xff]
    %v974 = vld [vmem:[#allocation6 + $0x138] sm:$0xff]
    %v975 = vld [vmem:[#allocation6 + $0x140] sm:$0xff]
    %v976 = vld [vmem:[#allocation6 + $0x148] sm:$0xff]
    %v977 = vld [vmem:[#allocation6 + $0x150] sm:$0xff]
    %v978 = vld [vmem:[#allocation6 + $0x158] sm:$0xff]
    %v979 = vld [vmem:[#allocation6 + $0x160] sm:$0xff]
    %v980 = vld [vmem:[#allocation6 + $0x168] sm:$0xff]
    %v981 = vld [vmem:[#allocation6 + $0x170] sm:$0xff]
    %v982 = vld [vmem:[#allocation6 + $0x178] sm:$0xff]
    %v983 = vld [vmem:[#allocation6 + $0x180] sm:$0xff]
    %v984 = vld [vmem:[#allocation6 + $0x188] sm:$0xff]
    %v985 = vld [vmem:[#allocation6 + $0x190] sm:$0xff]
    %v986 = vld [vmem:[#allocation6 + $0x198] sm:$0xff]
    %v987 = vld [vmem:[#allocation6 + $0x1a0] sm:$0xff]
    %v988 = vld [vmem:[#allocation6 + $0x1a8] sm:$0xff]
    %v989 = vld [vmem:[#allocation6 + $0x1b0] sm:$0xff]
    %v990 = vld [vmem:[#allocation6 + $0x1b8] sm:$0xff]
    %v991 = vld [vmem:[#allocation6 + $0x1c0] sm:$0xff]
    %v992 = vld [vmem:[#allocation6 + $0x1c8] sm:$0xff]
    %v993 = vld [vmem:[#allocation6 + $0x1d0] sm:$0xff]
    %v994 = vld [vmem:[#allocation6 + $0x1d8] sm:$0xff]
    %v995 = vld [vmem:[#allocation6 + $0x1e0] sm:$0xff]
    %v996 = vld [vmem:[#allocation6 + $0x1e8] sm:$0xff]
    %v997 = vld [vmem:[#allocation6 + $0x1f0] sm:$0xff]
    %v998 = vld [vmem:[#allocation6 + $0x1f8] sm:$0xff]
    %999 = vmatprep.subr.mxu0 %v996
    %1000 = vmatpush1.msra.mxu0 %v995
    %1001 = vmatprep.subr.mxu0 %v992
    %1002 = vmatpush1.msra.mxu0 %v991
    %1003 = vmatprep.subr.mxu0 %v988
    %1004 = vmatpush1.msra.mxu0 %v987
    %1005 = vmatprep.subr.mxu0 %v984
    %1006 = vmatpush1.msra.mxu0 %v983
    %1007 = vmatprep.subr.mxu0 %v980
    %1008 = vmatpush1.msra.mxu0 %v979
    %1009 = vmatprep.subr.mxu0 %v976
    %1010 = vmatpush1.msra.mxu0 %v975
    %1011 = vmatprep.subr.mxu0 %v972
    %1012 = vmatpush1.msra.mxu0 %v971
    %1013 = vmatprep.subr.mxu0 %v968
    %1014 = vmatpush1.msra.mxu0 %v967
    %1015 = vmatprep.subr.mxu0 %v964
    %1016 = vmatpush1.msra.mxu0 %v963
    %1017 = vmatprep.subr.mxu0 %v960
    %1018 = vmatpush1.msra.mxu0 %v959
    %1019 = vmatprep.subr.mxu0 %v956
    %1020 = vmatpush1.msra.mxu0 %v955
    %1021 = vmatprep.subr.mxu0 %v952
    %1022 = vmatpush1.msra.mxu0 %v951
    %1023 = vmatprep.subr.mxu0 %v948
    %1024 = vmatpush1.msra.mxu0 %v947
    %1025 = vmatprep.subr.mxu0 %v944
    %1026 = vmatpush1.msra.mxu0 %v943
    %1027 = vmatprep.subr.mxu0 %v940
    %1028 = vmatpush1.msra.mxu0 %v939
    %1029 = vmatprep.subr.mxu0 %v936
    %1030 = vmatpush1.msra.mxu0 %v935
    %1031 = vmatprep.subr.mxu0 0.0
    %1032 = vmatpush2.msra.mxu0 0.0
    %1033 = vmatprep.subr.mxu0 0.0
    %1034 = vmatpush2.msra.mxu0 0.0
    %1035 = vmatprep.subr.mxu0 0.0
    %1036 = vmatpush2.msra.mxu0 0.0
    %1037 = vmatprep.subr.mxu0 0.0
    %1038 = vmatpush2.msra.mxu0 0.0
    %1039 = vmatprep.subr.mxu0 0.0
    %1040 = vmatpush2.msra.mxu0 0.0
    %1041 = vmatprep.subr.mxu0 0.0
    %1042 = vmatpush2.msra.mxu0 0.0
    %1043 = vmatprep.subr.mxu0 0.0
    %1044 = vmatpush2.msra.mxu0 0.0
    %1045 = vmatprep.subr.mxu0 0.0
    %1046 = vmatpush2.msra.mxu0 0.0
    %1047 = vmatprep.subr.mxu0 0.0
    %1048 = vmatpush2.msra.mxu0 0.0
    %1049 = vmatprep.subr.mxu0 0.0
    %1050 = vmatpush2.msra.mxu0 0.0
    %1051 = vmatprep.subr.mxu0 0.0
    %1052 = vmatpush2.msra.mxu0 0.0
    %1053 = vmatprep.subr.mxu0 0.0
    %1054 = vmatpush2.msra.mxu0 0.0
    %1055 = vmatprep.subr.mxu0 0.0
    %1056 = vmatpush2.msra.mxu0 0.0
    %1057 = vmatprep.subr.mxu0 0.0
    %1058 = vmatpush2.msra.mxu0 0.0
    %1059 = vmatprep.subr.mxu0 0.0
    %1060 = vmatpush2.msra.mxu0 0.0
    %1061 = vmatprep.subr.mxu0 0.0
    %1062 = vmatpush2.msra.mxu0 0.0
    %1063 = vmatprep.mubr.f32.mxu0 0.0
    %1064 = vmatmul.mubr.f32.gmra.mxu0 %v927
    %v1065 = vpop.f32.mrf.mxu0
    %v1066 = vadd.f32 0.0, %v1065
    %v1067 = vpop.f32.mrf.mxu0
    %v1068 = vadd.f32 0.0, %v1067
    %1069 = vdwg.mxu0
    %1070 = vmatprep.subr.mxu0 %v998
    %1071 = vmatpush1.msra.mxu0 %v997
    %1072 = vmatprep.subr.mxu0 %v994
    %1073 = vmatpush1.msra.mxu0 %v993
    %1074 = vmatprep.subr.mxu0 %v990
    %1075 = vmatpush1.msra.mxu0 %v989
    %1076 = vmatprep.subr.mxu0 %v986
    %1077 = vmatpush1.msra.mxu0 %v985
    %1078 = vmatprep.subr.mxu0 %v982
    %1079 = vmatpush1.msra.mxu0 %v981
    %1080 = vmatprep.subr.mxu0 %v978
    %1081 = vmatpush1.msra.mxu0 %v977
    %1082 = vmatprep.subr.mxu0 %v974
    %1083 = vmatpush1.msra.mxu0 %v973
    %1084 = vmatprep.subr.mxu0 %v970
    %1085 = vmatpush1.msra.mxu0 %v969
    %1086 = vmatprep.subr.mxu0 %v966
    %1087 = vmatpush1.msra.mxu0 %v965
    %1088 = vmatprep.subr.mxu0 %v962
    %1089 = vmatpush1.msra.mxu0 %v961
    %1090 = vmatprep.subr.mxu0 %v958
    %1091 = vmatpush1.msra.mxu0 %v957
    %1092 = vmatprep.subr.mxu0 %v954
    %1093 = vmatpush1.msra.mxu0 %v953
    %1094 = vmatprep.subr.mxu0 %v950
    %1095 = vmatpush1.msra.mxu0 %v949
    %1096 = vmatprep.subr.mxu0 %v946
    %1097 = vmatpush1.msra.mxu0 %v945
    %1098 = vmatprep.subr.mxu0 %v942
    %1099 = vmatpush1.msra.mxu0 %v941
    %1100 = vmatprep.subr.mxu0 %v938
    %1101 = vmatpush1.msra.mxu0 %v937
    %1102 = vmatprep.subr.mxu0 0.0
    %1103 = vmatpush2.msra.mxu0 0.0
    %1104 = vmatprep.subr.mxu0 0.0
    %1105 = vmatpush2.msra.mxu0 0.0
    %1106 = vmatprep.subr.mxu0 0.0
    %1107 = vmatpush2.msra.mxu0 0.0
    %1108 = vmatprep.subr.mxu0 0.0
    %1109 = vmatpush2.msra.mxu0 0.0
    %1110 = vmatprep.subr.mxu0 0.0
    %1111 = vmatpush2.msra.mxu0 0.0
    %1112 = vmatprep.subr.mxu0 0.0
    %1113 = vmatpush2.msra.mxu0 0.0
    %1114 = vmatprep.subr.mxu0 0.0
    %1115 = vmatpush2.msra.mxu0 0.0
    %1116 = vmatprep.subr.mxu0 0.0
    %1117 = vmatpush2.msra.mxu0 0.0
    %1118 = vmatprep.subr.mxu0 0.0
    %1119 = vmatpush2.msra.mxu0 0.0
    %1120 = vmatprep.subr.mxu0 0.0
    %1121 = vmatpush2.msra.mxu0 0.0
    %1122 = vmatprep.subr.mxu0 0.0
    %1123 = vmatpush2.msra.mxu0 0.0
    %1124 = vmatprep.subr.mxu0 0.0
    %1125 = vmatpush2.msra.mxu0 0.0
    %1126 = vmatprep.subr.mxu0 0.0
    %1127 = vmatpush2.msra.mxu0 0.0
    %1128 = vmatprep.subr.mxu0 0.0
    %1129 = vmatpush2.msra.mxu0 0.0
    %1130 = vmatprep.subr.mxu0 0.0
    %1131 = vmatpush2.msra.mxu0 0.0
    %1132 = vmatprep.subr.mxu0 0.0
    %1133 = vmatpush2.msra.mxu0 0.0
    %1134 = vmatprep.mubr.f32.mxu0 0.0
    %1135 = vmatmul.mubr.f32.gmra.mxu0 %v927
    %v1136 = vpop.f32.mrf.mxu0
    %v1137 = vadd.f32 0.0, %v1136
    %v1138 = vpop.f32.mrf.mxu0
    %v1139 = vadd.f32 0.0, %v1138
    %1140 = vdwg.mxu0
    %v1141 = vadd.f32 %v931, %v1066
    %v1142 = vadd.f32 %v932, %v1068
    %v1143 = vadd.f32 %v933, %v1137
    %v1144 = vadd.f32 %v934, %v1139
    %v1145 = vxor.u32 %v1141, 2147483648
    %v1146 = vmul.f32 %v1145, 1.442695
    %v1147 = vpow.pop %v1146
    %v1148 = vadd.f32 %v1147, 1.0
    %v1149 = vrcp.pop %v1148
    %v1150 = vmul.f32 1.0, %v1149
    %v1151 = vxor.u32 %v1142, 2147483648
    %v1152 = vmul.f32 %v1151, 1.442695
    %v1153 = vpow.pop %v1152
    %v1154 = vadd.f32 %v1153, 1.0
    %v1155 = vrcp.pop %v1154
    %v1156 = vmul.f32 1.0, %v1155
    %v1157 = vtanh.pop %v1143
    %v1158 = vxor.u32 %v1144, 2147483648
    %v1159 = vmul.f32 %v1158, 1.442695
    %v1160 = vpow.pop %v1159
    %v1161 = vadd.f32 %v1160, 1.0
    %v1162 = vrcp.pop %v1161
    %v1163 = vmul.f32 1.0, %v1162
    %v1164 = vmul.f32 %v1156, %v925
    %v1165 = vmul.f32 %v1150, %v1157
    %v1166 = vadd.f32 %v1164, %v1165
    %v1167 = vtanh.pop %v1166
    %v1168 = vmul.f32 %v1163, %v1167
    %s1169 = scalar_lea.vmem [#allocation2], 16
    %1170 = vst [vmem:[%s1169] sm:$0xff] %v1168
    %s1171 = scalar_lea.vmem [#allocation3], 96
    %v1172 = vld [vmem:[%s1171] sm:$0xff]
    %v1173 = vld [vmem:[%s1171 + $0x8] sm:$0xff]
    %v1174 = vld [vmem:[%s1171 + $0x10] sm:$0xff]
    %v1175 = vld [vmem:[%s1171 + $0x18] sm:$0xff]
    %v1176 = vld [vmem:[#allocation6] sm:$0xff]
    %v1177 = vld [vmem:[#allocation6 + $0x8] sm:$0xff]
    %v1178 = vld [vmem:[#allocation6 + $0x10] sm:$0xff]
    %v1179 = vld [vmem:[#allocation6 + $0x18] sm:$0xff]
    %v1180 = vld [vmem:[#allocation6 + $0x20] sm:$0xff]
    %v1181 = vld [vmem:[#allocation6 + $0x28] sm:$0xff]
    %v1182 = vld [vmem:[#allocation6 + $0x30] sm:$0xff]
    %v1183 = vld [vmem:[#allocation6 + $0x38] sm:$0xff]
    %v1184 = vld [vmem:[#allocation6 + $0x40] sm:$0xff]
    %v1185 = vld [vmem:[#allocation6 + $0x48] sm:$0xff]
    %v1186 = vld [vmem:[#allocation6 + $0x50] sm:$0xff]
    %v1187 = vld [vmem:[#allocation6 + $0x58] sm:$0xff]
    %v1188 = vld [vmem:[#allocation6 + $0x60] sm:$0xff]
    %v1189 = vld [vmem:[#allocation6 + $0x68] sm:$0xff]
    %v1190 = vld [vmem:[#allocation6 + $0x70] sm:$0xff]
    %v1191 = vld [vmem:[#allocation6 + $0x78] sm:$0xff]
    %v1192 = vld [vmem:[#allocation6 + $0x80] sm:$0xff]
    %v1193 = vld [vmem:[#allocation6 + $0x88] sm:$0xff]
    %v1194 = vld [vmem:[#allocation6 + $0x90] sm:$0xff]
    %v1195 = vld [vmem:[#allocation6 + $0x98] sm:$0xff]
    %v1196 = vld [vmem:[#allocation6 + $0xa0] sm:$0xff]
    %v1197 = vld [vmem:[#allocation6 + $0xa8] sm:$0xff]
    %v1198 = vld [vmem:[#allocation6 + $0xb0] sm:$0xff]
    %v1199 = vld [vmem:[#allocation6 + $0xb8] sm:$0xff]
    %v1200 = vld [vmem:[#allocation6 + $0xc0] sm:$0xff]
    %v1201 = vld [vmem:[#allocation6 + $0xc8] sm:$0xff]
    %v1202 = vld [vmem:[#allocation6 + $0xd0] sm:$0xff]
    %v1203 = vld [vmem:[#allocation6 + $0xd8] sm:$0xff]
    %v1204 = vld [vmem:[#allocation6 + $0xe0] sm:$0xff]
    %v1205 = vld [vmem:[#allocation6 + $0xe8] sm:$0xff]
    %v1206 = vld [vmem:[#allocation6 + $0xf0] sm:$0xff]
    %v1207 = vld [vmem:[#allocation6 + $0xf8] sm:$0xff]
    %v1208 = vld [vmem:[#allocation6 + $0x100] sm:$0xff]
    %v1209 = vld [vmem:[#allocation6 + $0x108] sm:$0xff]
    %v1210 = vld [vmem:[#allocation6 + $0x110] sm:$0xff]
    %v1211 = vld [vmem:[#allocation6 + $0x118] sm:$0xff]
    %v1212 = vld [vmem:[#allocation6 + $0x120] sm:$0xff]
    %v1213 = vld [vmem:[#allocation6 + $0x128] sm:$0xff]
    %v1214 = vld [vmem:[#allocation6 + $0x130] sm:$0xff]
    %v1215 = vld [vmem:[#allocation6 + $0x138] sm:$0xff]
    %v1216 = vld [vmem:[#allocation6 + $0x140] sm:$0xff]
    %v1217 = vld [vmem:[#allocation6 + $0x148] sm:$0xff]
    %v1218 = vld [vmem:[#allocation6 + $0x150] sm:$0xff]
    %v1219 = vld [vmem:[#allocation6 + $0x158] sm:$0xff]
    %v1220 = vld [vmem:[#allocation6 + $0x160] sm:$0xff]
    %v1221 = vld [vmem:[#allocation6 + $0x168] sm:$0xff]
    %v1222 = vld [vmem:[#allocation6 + $0x170] sm:$0xff]
    %v1223 = vld [vmem:[#allocation6 + $0x178] sm:$0xff]
    %v1224 = vld [vmem:[#allocation6 + $0x180] sm:$0xff]
    %v1225 = vld [vmem:[#allocation6 + $0x188] sm:$0xff]
    %v1226 = vld [vmem:[#allocation6 + $0x190] sm:$0xff]
    %v1227 = vld [vmem:[#allocation6 + $0x198] sm:$0xff]
    %v1228 = vld [vmem:[#allocation6 + $0x1a0] sm:$0xff]
    %v1229 = vld [vmem:[#allocation6 + $0x1a8] sm:$0xff]
    %v1230 = vld [vmem:[#allocation6 + $0x1b0] sm:$0xff]
    %v1231 = vld [vmem:[#allocation6 + $0x1b8] sm:$0xff]
    %v1232 = vld [vmem:[#allocation6 + $0x1c0] sm:$0xff]
    %v1233 = vld [vmem:[#allocation6 + $0x1c8] sm:$0xff]
    %v1234 = vld [vmem:[#allocation6 + $0x1d0] sm:$0xff]
    %v1235 = vld [vmem:[#allocation6 + $0x1d8] sm:$0xff]
    %v1236 = vld [vmem:[#allocation6 + $0x1e0] sm:$0xff]
    %v1237 = vld [vmem:[#allocation6 + $0x1e8] sm:$0xff]
    %v1238 = vld [vmem:[#allocation6 + $0x1f0] sm:$0xff]
    %v1239 = vld [vmem:[#allocation6 + $0x1f8] sm:$0xff]
    %1240 = vmatprep.subr.mxu0 %v1237
    %1241 = vmatpush1.msra.mxu0 %v1236
    %1242 = vmatprep.subr.mxu0 %v1233
    %1243 = vmatpush1.msra.mxu0 %v1232
    %1244 = vmatprep.subr.mxu0 %v1229
    %1245 = vmatpush1.msra.mxu0 %v1228
    %1246 = vmatprep.subr.mxu0 %v1225
    %1247 = vmatpush1.msra.mxu0 %v1224
    %1248 = vmatprep.subr.mxu0 %v1221
    %1249 = vmatpush1.msra.mxu0 %v1220
    %1250 = vmatprep.subr.mxu0 %v1217
    %1251 = vmatpush1.msra.mxu0 %v1216
    %1252 = vmatprep.subr.mxu0 %v1213
    %1253 = vmatpush1.msra.mxu0 %v1212
    %1254 = vmatprep.subr.mxu0 %v1209
    %1255 = vmatpush1.msra.mxu0 %v1208
    %1256 = vmatprep.subr.mxu0 %v1205
    %1257 = vmatpush1.msra.mxu0 %v1204
    %1258 = vmatprep.subr.mxu0 %v1201
    %1259 = vmatpush1.msra.mxu0 %v1200
    %1260 = vmatprep.subr.mxu0 %v1197
    %1261 = vmatpush1.msra.mxu0 %v1196
    %1262 = vmatprep.subr.mxu0 %v1193
    %1263 = vmatpush1.msra.mxu0 %v1192
    %1264 = vmatprep.subr.mxu0 %v1189
    %1265 = vmatpush1.msra.mxu0 %v1188
    %1266 = vmatprep.subr.mxu0 %v1185
    %1267 = vmatpush1.msra.mxu0 %v1184
    %1268 = vmatprep.subr.mxu0 %v1181
    %1269 = vmatpush1.msra.mxu0 %v1180
    %1270 = vmatprep.subr.mxu0 %v1177
    %1271 = vmatpush1.msra.mxu0 %v1176
    %1272 = vmatprep.subr.mxu0 0.0
    %1273 = vmatpush2.msra.mxu0 0.0
    %1274 = vmatprep.subr.mxu0 0.0
    %1275 = vmatpush2.msra.mxu0 0.0
    %1276 = vmatprep.subr.mxu0 0.0
    %1277 = vmatpush2.msra.mxu0 0.0
    %1278 = vmatprep.subr.mxu0 0.0
    %1279 = vmatpush2.msra.mxu0 0.0
    %1280 = vmatprep.subr.mxu0 0.0
    %1281 = vmatpush2.msra.mxu0 0.0
    %1282 = vmatprep.subr.mxu0 0.0
    %1283 = vmatpush2.msra.mxu0 0.0
    %1284 = vmatprep.subr.mxu0 0.0
    %1285 = vmatpush2.msra.mxu0 0.0
    %1286 = vmatprep.subr.mxu0 0.0
    %1287 = vmatpush2.msra.mxu0 0.0
    %1288 = vmatprep.subr.mxu0 0.0
    %1289 = vmatpush2.msra.mxu0 0.0
    %1290 = vmatprep.subr.mxu0 0.0
    %1291 = vmatpush2.msra.mxu0 0.0
    %1292 = vmatprep.subr.mxu0 0.0
    %1293 = vmatpush2.msra.mxu0 0.0
    %1294 = vmatprep.subr.mxu0 0.0
    %1295 = vmatpush2.msra.mxu0 0.0
    %1296 = vmatprep.subr.mxu0 0.0
    %1297 = vmatpush2.msra.mxu0 0.0
    %1298 = vmatprep.subr.mxu0 0.0
    %1299 = vmatpush2.msra.mxu0 0.0
    %1300 = vmatprep.subr.mxu0 0.0
    %1301 = vmatpush2.msra.mxu0 0.0
    %1302 = vmatprep.subr.mxu0 0.0
    %1303 = vmatpush2.msra.mxu0 0.0
    %1304 = vmatprep.mubr.f32.mxu0 0.0
    %1305 = vmatmul.mubr.f32.gmra.mxu0 %v1168
    %v1306 = vpop.f32.mrf.mxu0
    %v1307 = vadd.f32 0.0, %v1306
    %v1308 = vpop.f32.mrf.mxu0
    %v1309 = vadd.f32 0.0, %v1308
    %1310 = vdwg.mxu0
    %1311 = vmatprep.subr.mxu0 %v1239
    %1312 = vmatpush1.msra.mxu0 %v1238
    %1313 = vmatprep.subr.mxu0 %v1235
    %1314 = vmatpush1.msra.mxu0 %v1234
    %1315 = vmatprep.subr.mxu0 %v1231
    %1316 = vmatpush1.msra.mxu0 %v1230
    %1317 = vmatprep.subr.mxu0 %v1227
    %1318 = vmatpush1.msra.mxu0 %v1226
    %1319 = vmatprep.subr.mxu0 %v1223
    %1320 = vmatpush1.msra.mxu0 %v1222
    %1321 = vmatprep.subr.mxu0 %v1219
    %1322 = vmatpush1.msra.mxu0 %v1218
    %1323 = vmatprep.subr.mxu0 %v1215
    %1324 = vmatpush1.msra.mxu0 %v1214
    %1325 = vmatprep.subr.mxu0 %v1211
    %1326 = vmatpush1.msra.mxu0 %v1210
    %1327 = vmatprep.subr.mxu0 %v1207
    %1328 = vmatpush1.msra.mxu0 %v1206
    %1329 = vmatprep.subr.mxu0 %v1203
    %1330 = vmatpush1.msra.mxu0 %v1202
    %1331 = vmatprep.subr.mxu0 %v1199
    %1332 = vmatpush1.msra.mxu0 %v1198
    %1333 = vmatprep.subr.mxu0 %v1195
    %1334 = vmatpush1.msra.mxu0 %v1194
    %1335 = vmatprep.subr.mxu0 %v1191
    %1336 = vmatpush1.msra.mxu0 %v1190
    %1337 = vmatprep.subr.mxu0 %v1187
    %1338 = vmatpush1.msra.mxu0 %v1186
    %1339 = vmatprep.subr.mxu0 %v1183
    %1340 = vmatpush1.msra.mxu0 %v1182
    %1341 = vmatprep.subr.mxu0 %v1179
    %1342 = vmatpush1.msra.mxu0 %v1178
    %1343 = vmatprep.subr.mxu0 0.0
    %1344 = vmatpush2.msra.mxu0 0.0
    %1345 = vmatprep.subr.mxu0 0.0
    %1346 = vmatpush2.msra.mxu0 0.0
    %1347 = vmatprep.subr.mxu0 0.0
    %1348 = vmatpush2.msra.mxu0 0.0
    %1349 = vmatprep.subr.mxu0 0.0
    %1350 = vmatpush2.msra.mxu0 0.0
    %1351 = vmatprep.subr.mxu0 0.0
    %1352 = vmatpush2.msra.mxu0 0.0
    %1353 = vmatprep.subr.mxu0 0.0
    %1354 = vmatpush2.msra.mxu0 0.0
    %1355 = vmatprep.subr.mxu0 0.0
    %1356 = vmatpush2.msra.mxu0 0.0
    %1357 = vmatprep.subr.mxu0 0.0
    %1358 = vmatpush2.msra.mxu0 0.0
    %1359 = vmatprep.subr.mxu0 0.0
    %1360 = vmatpush2.msra.mxu0 0.0
    %1361 = vmatprep.subr.mxu0 0.0
    %1362 = vmatpush2.msra.mxu0 0.0
    %1363 = vmatprep.subr.mxu0 0.0
    %1364 = vmatpush2.msra.mxu0 0.0
    %1365 = vmatprep.subr.mxu0 0.0
    %1366 = vmatpush2.msra.mxu0 0.0
    %1367 = vmatprep.subr.mxu0 0.0
    %1368 = vmatpush2.msra.mxu0 0.0
    %1369 = vmatprep.subr.mxu0 0.0
    %1370 = vmatpush2.msra.mxu0 0.0
    %1371 = vmatprep.subr.mxu0 0.0
    %1372 = vmatpush2.msra.mxu0 0.0
    %1373 = vmatprep.subr.mxu0 0.0
    %1374 = vmatpush2.msra.mxu0 0.0
    %1375 = vmatprep.mubr.f32.mxu0 0.0
    %1376 = vmatmul.mubr.f32.gmra.mxu0 %v1168
    %v1377 = vpop.f32.mrf.mxu0
    %v1378 = vadd.f32 0.0, %v1377
    %v1379 = vpop.f32.mrf.mxu0
    %v1380 = vadd.f32 0.0, %v1379
    %1381 = vdwg.mxu0
    %v1382 = vadd.f32 %v1172, %v1307
    %v1383 = vadd.f32 %v1173, %v1309
    %v1384 = vadd.f32 %v1174, %v1378
    %v1385 = vadd.f32 %v1175, %v1380
    %v1386 = vxor.u32 %v1382, 2147483648
    %v1387 = vmul.f32 %v1386, 1.442695
    %v1388 = vpow.pop %v1387
    %v1389 = vadd.f32 %v1388, 1.0
    %v1390 = vrcp.pop %v1389
    %v1391 = vmul.f32 1.0, %v1390
    %v1392 = vxor.u32 %v1383, 2147483648
    %v1393 = vmul.f32 %v1392, 1.442695
    %v1394 = vpow.pop %v1393
    %v1395 = vadd.f32 %v1394, 1.0
    %v1396 = vrcp.pop %v1395
    %v1397 = vmul.f32 1.0, %v1396
    %v1398 = vtanh.pop %v1384
    %v1399 = vxor.u32 %v1385, 2147483648
    %v1400 = vmul.f32 %v1399, 1.442695
    %v1401 = vpow.pop %v1400
    %v1402 = vadd.f32 %v1401, 1.0
    %v1403 = vrcp.pop %v1402
    %v1404 = vmul.f32 1.0, %v1403
    %v1405 = vmul.f32 %v1397, %v1166
    %v1406 = vmul.f32 %v1391, %v1398
    %v1407 = vadd.f32 %v1405, %v1406
    %v1408 = vtanh.pop %v1407
    %v1409 = vmul.f32 %v1404, %v1408
    %s1410 = scalar_lea.vmem [#allocation2], 24
    %1411 = vst [vmem:[%s1410] sm:$0xff] %v1409
    %s1412 = scalar_lea.vmem [#allocation3], 128
    %v1413 = vld [vmem:[%s1412] sm:$0xff]
    %v1414 = vld [vmem:[%s1412 + $0x8] sm:$0xff]
    %v1415 = vld [vmem:[%s1412 + $0x10] sm:$0xff]
    %v1416 = vld [vmem:[%s1412 + $0x18] sm:$0xff]
    %v1417 = vld [vmem:[#allocation6] sm:$0xff]
    %v1418 = vld [vmem:[#allocation6 + $0x8] sm:$0xff]
    %v1419 = vld [vmem:[#allocation6 + $0x10] sm:$0xff]
    %v1420 = vld [vmem:[#allocation6 + $0x18] sm:$0xff]
    %v1421 = vld [vmem:[#allocation6 + $0x20] sm:$0xff]
    %v1422 = vld [vmem:[#allocation6 + $0x28] sm:$0xff]
    %v1423 = vld [vmem:[#allocation6 + $0x30] sm:$0xff]
    %v1424 = vld [vmem:[#allocation6 + $0x38] sm:$0xff]
    %v1425 = vld [vmem:[#allocation6 + $0x40] sm:$0xff]
    %v1426 = vld [vmem:[#allocation6 + $0x48] sm:$0xff]
    %v1427 = vld [vmem:[#allocation6 + $0x50] sm:$0xff]
    %v1428 = vld [vmem:[#allocation6 + $0x58] sm:$0xff]
    %v1429 = vld [vmem:[#allocation6 + $0x60] sm:$0xff]
    %v1430 = vld [vmem:[#allocation6 + $0x68] sm:$0xff]
    %v1431 = vld [vmem:[#allocation6 + $0x70] sm:$0xff]
    %v1432 = vld [vmem:[#allocation6 + $0x78] sm:$0xff]
    %v1433 = vld [vmem:[#allocation6 + $0x80] sm:$0xff]
    %v1434 = vld [vmem:[#allocation6 + $0x88] sm:$0xff]
    %v1435 = vld [vmem:[#allocation6 + $0x90] sm:$0xff]
    %v1436 = vld [vmem:[#allocation6 + $0x98] sm:$0xff]
    %v1437 = vld [vmem:[#allocation6 + $0xa0] sm:$0xff]
    %v1438 = vld [vmem:[#allocation6 + $0xa8] sm:$0xff]
    %v1439 = vld [vmem:[#allocation6 + $0xb0] sm:$0xff]
    %v1440 = vld [vmem:[#allocation6 + $0xb8] sm:$0xff]
    %v1441 = vld [vmem:[#allocation6 + $0xc0] sm:$0xff]
    %v1442 = vld [vmem:[#allocation6 + $0xc8] sm:$0xff]
    %v1443 = vld [vmem:[#allocation6 + $0xd0] sm:$0xff]
    %v1444 = vld [vmem:[#allocation6 + $0xd8] sm:$0xff]
    %v1445 = vld [vmem:[#allocation6 + $0xe0] sm:$0xff]
    %v1446 = vld [vmem:[#allocation6 + $0xe8] sm:$0xff]
    %v1447 = vld [vmem:[#allocation6 + $0xf0] sm:$0xff]
    %v1448 = vld [vmem:[#allocation6 + $0xf8] sm:$0xff]
    %v1449 = vld [vmem:[#allocation6 + $0x100] sm:$0xff]
    %v1450 = vld [vmem:[#allocation6 + $0x108] sm:$0xff]
    %v1451 = vld [vmem:[#allocation6 + $0x110] sm:$0xff]
    %v1452 = vld [vmem:[#allocation6 + $0x118] sm:$0xff]
    %v1453 = vld [vmem:[#allocation6 + $0x120] sm:$0xff]
    %v1454 = vld [vmem:[#allocation6 + $0x128] sm:$0xff]
    %v1455 = vld [vmem:[#allocation6 + $0x130] sm:$0xff]
    %v1456 = vld [vmem:[#allocation6 + $0x138] sm:$0xff]
    %v1457 = vld [vmem:[#allocation6 + $0x140] sm:$0xff]
    %v1458 = vld [vmem:[#allocation6 + $0x148] sm:$0xff]
    %v1459 = vld [vmem:[#allocation6 + $0x150] sm:$0xff]
    %v1460 = vld [vmem:[#allocation6 + $0x158] sm:$0xff]
    %v1461 = vld [vmem:[#allocation6 + $0x160] sm:$0xff]
    %v1462 = vld [vmem:[#allocation6 + $0x168] sm:$0xff]
    %v1463 = vld [vmem:[#allocation6 + $0x170] sm:$0xff]
    %v1464 = vld [vmem:[#allocation6 + $0x178] sm:$0xff]
    %v1465 = vld [vmem:[#allocation6 + $0x180] sm:$0xff]
    %v1466 = vld [vmem:[#allocation6 + $0x188] sm:$0xff]
    %v1467 = vld [vmem:[#allocation6 + $0x190] sm:$0xff]
    %v1468 = vld [vmem:[#allocation6 + $0x198] sm:$0xff]
    %v1469 = vld [vmem:[#allocation6 + $0x1a0] sm:$0xff]
    %v1470 = vld [vmem:[#allocation6 + $0x1a8] sm:$0xff]
    %v1471 = vld [vmem:[#allocation6 + $0x1b0] sm:$0xff]
    %v1472 = vld [vmem:[#allocation6 + $0x1b8] sm:$0xff]
    %v1473 = vld [vmem:[#allocation6 + $0x1c0] sm:$0xff]
    %v1474 = vld [vmem:[#allocation6 + $0x1c8] sm:$0xff]
    %v1475 = vld [vmem:[#allocation6 + $0x1d0] sm:$0xff]
    %v1476 = vld [vmem:[#allocation6 + $0x1d8] sm:$0xff]
    %v1477 = vld [vmem:[#allocation6 + $0x1e0] sm:$0xff]
    %v1478 = vld [vmem:[#allocation6 + $0x1e8] sm:$0xff]
    %v1479 = vld [vmem:[#allocation6 + $0x1f0] sm:$0xff]
    %v1480 = vld [vmem:[#allocation6 + $0x1f8] sm:$0xff]
    %1481 = vmatprep.subr.mxu0 %v1478
    %1482 = vmatpush1.msra.mxu0 %v1477
    %1483 = vmatprep.subr.mxu0 %v1474
    %1484 = vmatpush1.msra.mxu0 %v1473
    %1485 = vmatprep.subr.mxu0 %v1470
    %1486 = vmatpush1.msra.mxu0 %v1469
    %1487 = vmatprep.subr.mxu0 %v1466
    %1488 = vmatpush1.msra.mxu0 %v1465
    %1489 = vmatprep.subr.mxu0 %v1462
    %1490 = vmatpush1.msra.mxu0 %v1461
    %1491 = vmatprep.subr.mxu0 %v1458
    %1492 = vmatpush1.msra.mxu0 %v1457
    %1493 = vmatprep.subr.mxu0 %v1454
    %1494 = vmatpush1.msra.mxu0 %v1453
    %1495 = vmatprep.subr.mxu0 %v1450
    %1496 = vmatpush1.msra.mxu0 %v1449
    %1497 = vmatprep.subr.mxu0 %v1446
    %1498 = vmatpush1.msra.mxu0 %v1445
    %1499 = vmatprep.subr.mxu0 %v1442
    %1500 = vmatpush1.msra.mxu0 %v1441
    %1501 = vmatprep.subr.mxu0 %v1438
    %1502 = vmatpush1.msra.mxu0 %v1437
    %1503 = vmatprep.subr.mxu0 %v1434
    %1504 = vmatpush1.msra.mxu0 %v1433
    %1505 = vmatprep.subr.mxu0 %v1430
    %1506 = vmatpush1.msra.mxu0 %v1429
    %1507 = vmatprep.subr.mxu0 %v1426
    %1508 = vmatpush1.msra.mxu0 %v1425
    %1509 = vmatprep.subr.mxu0 %v1422
    %1510 = vmatpush1.msra.mxu0 %v1421
    %1511 = vmatprep.subr.mxu0 %v1418
    %1512 = vmatpush1.msra.mxu0 %v1417
    %1513 = vmatprep.subr.mxu0 0.0
    %1514 = vmatpush2.msra.mxu0 0.0
    %1515 = vmatprep.subr.mxu0 0.0
    %1516 = vmatpush2.msra.mxu0 0.0
    %1517 = vmatprep.subr.mxu0 0.0
    %1518 = vmatpush2.msra.mxu0 0.0
    %1519 = vmatprep.subr.mxu0 0.0
    %1520 = vmatpush2.msra.mxu0 0.0
    %1521 = vmatprep.subr.mxu0 0.0
    %1522 = vmatpush2.msra.mxu0 0.0
    %1523 = vmatprep.subr.mxu0 0.0
    %1524 = vmatpush2.msra.mxu0 0.0
    %1525 = vmatprep.subr.mxu0 0.0
    %1526 = vmatpush2.msra.mxu0 0.0
    %1527 = vmatprep.subr.mxu0 0.0
    %1528 = vmatpush2.msra.mxu0 0.0
    %1529 = vmatprep.subr.mxu0 0.0
    %1530 = vmatpush2.msra.mxu0 0.0
    %1531 = vmatprep.subr.mxu0 0.0
    %1532 = vmatpush2.msra.mxu0 0.0
    %1533 = vmatprep.subr.mxu0 0.0
    %1534 = vmatpush2.msra.mxu0 0.0
    %1535 = vmatprep.subr.mxu0 0.0
    %1536 = vmatpush2.msra.mxu0 0.0
    %1537 = vmatprep.subr.mxu0 0.0
    %1538 = vmatpush2.msra.mxu0 0.0
    %1539 = vmatprep.subr.mxu0 0.0
    %1540 = vmatpush2.msra.mxu0 0.0
    %1541 = vmatprep.subr.mxu0 0.0
    %1542 = vmatpush2.msra.mxu0 0.0
    %1543 = vmatprep.subr.mxu0 0.0
    %1544 = vmatpush2.msra.mxu0 0.0
    %1545 = vmatprep.mubr.f32.mxu0 0.0
    %1546 = vmatmul.mubr.f32.gmra.mxu0 %v1409
    %v1547 = vpop.f32.mrf.mxu0
    %v1548 = vadd.f32 0.0, %v1547
    %v1549 = vpop.f32.mrf.mxu0
    %v1550 = vadd.f32 0.0, %v1549
    %1551 = vdwg.mxu0
    %1552 = vmatprep.subr.mxu0 %v1480
    %1553 = vmatpush1.msra.mxu0 %v1479
    %1554 = vmatprep.subr.mxu0 %v1476
    %1555 = vmatpush1.msra.mxu0 %v1475
    %1556 = vmatprep.subr.mxu0 %v1472
    %1557 = vmatpush1.msra.mxu0 %v1471
    %1558 = vmatprep.subr.mxu0 %v1468
    %1559 = vmatpush1.msra.mxu0 %v1467
    %1560 = vmatprep.subr.mxu0 %v1464
    %1561 = vmatpush1.msra.mxu0 %v1463
    %1562 = vmatprep.subr.mxu0 %v1460
    %1563 = vmatpush1.msra.mxu0 %v1459
    %1564 = vmatprep.subr.mxu0 %v1456
    %1565 = vmatpush1.msra.mxu0 %v1455
    %1566 = vmatprep.subr.mxu0 %v1452
    %1567 = vmatpush1.msra.mxu0 %v1451
    %1568 = vmatprep.subr.mxu0 %v1448
    %1569 = vmatpush1.msra.mxu0 %v1447
    %1570 = vmatprep.subr.mxu0 %v1444
    %1571 = vmatpush1.msra.mxu0 %v1443
    %1572 = vmatprep.subr.mxu0 %v1440
    %1573 = vmatpush1.msra.mxu0 %v1439
    %1574 = vmatprep.subr.mxu0 %v1436
    %1575 = vmatpush1.msra.mxu0 %v1435
    %1576 = vmatprep.subr.mxu0 %v1432
    %1577 = vmatpush1.msra.mxu0 %v1431
    %1578 = vmatprep.subr.mxu0 %v1428
    %1579 = vmatpush1.msra.mxu0 %v1427
    %1580 = vmatprep.subr.mxu0 %v1424
    %1581 = vmatpush1.msra.mxu0 %v1423
    %1582 = vmatprep.subr.mxu0 %v1420
    %1583 = vmatpush1.msra.mxu0 %v1419
    %1584 = vmatprep.subr.mxu0 0.0
    %1585 = vmatpush2.msra.mxu0 0.0
    %1586 = vmatprep.subr.mxu0 0.0
    %1587 = vmatpush2.msra.mxu0 0.0
    %1588 = vmatprep.subr.mxu0 0.0
    %1589 = vmatpush2.msra.mxu0 0.0
    %1590 = vmatprep.subr.mxu0 0.0
    %1591 = vmatpush2.msra.mxu0 0.0
    %1592 = vmatprep.subr.mxu0 0.0
    %1593 = vmatpush2.msra.mxu0 0.0
    %1594 = vmatprep.subr.mxu0 0.0
    %1595 = vmatpush2.msra.mxu0 0.0
    %1596 = vmatprep.subr.mxu0 0.0
    %1597 = vmatpush2.msra.mxu0 0.0
    %1598 = vmatprep.subr.mxu0 0.0
    %1599 = vmatpush2.msra.mxu0 0.0
    %1600 = vmatprep.subr.mxu0 0.0
    %1601 = vmatpush2.msra.mxu0 0.0
    %1602 = vmatprep.subr.mxu0 0.0
    %1603 = vmatpush2.msra.mxu0 0.0
    %1604 = vmatprep.subr.mxu0 0.0
    %1605 = vmatpush2.msra.mxu0 0.0
    %1606 = vmatprep.subr.mxu0 0.0
    %1607 = vmatpush2.msra.mxu0 0.0
    %1608 = vmatprep.subr.mxu0 0.0
    %1609 = vmatpush2.msra.mxu0 0.0
    %1610 = vmatprep.subr.mxu0 0.0
    %1611 = vmatpush2.msra.mxu0 0.0
    %1612 = vmatprep.subr.mxu0 0.0
    %1613 = vmatpush2.msra.mxu0 0.0
    %1614 = vmatprep.subr.mxu0 0.0
    %1615 = vmatpush2.msra.mxu0 0.0
    %1616 = vmatprep.mubr.f32.mxu0 0.0
    %1617 = vmatmul.mubr.f32.gmra.mxu0 %v1409
    %v1618 = vpop.f32.mrf.mxu0
    %v1619 = vadd.f32 0.0, %v1618
    %v1620 = vpop.f32.mrf.mxu0
    %v1621 = vadd.f32 0.0, %v1620
    %1622 = vdwg.mxu0
    %v1623 = vadd.f32 %v1413, %v1548
    %v1624 = vadd.f32 %v1414, %v1550
    %v1625 = vadd.f32 %v1415, %v1619
    %v1626 = vadd.f32 %v1416, %v1621
    %v1627 = vxor.u32 %v1623, 2147483648
    %v1628 = vmul.f32 %v1627, 1.442695
    %v1629 = vpow.pop %v1628
    %v1630 = vadd.f32 %v1629, 1.0
    %v1631 = vrcp.pop %v1630
    %v1632 = vmul.f32 1.0, %v1631
    %v1633 = vxor.u32 %v1624, 2147483648
    %v1634 = vmul.f32 %v1633, 1.442695
    %v1635 = vpow.pop %v1634
    %v1636 = vadd.f32 %v1635, 1.0
    %v1637 = vrcp.pop %v1636
    %v1638 = vmul.f32 1.0, %v1637
    %v1639 = vtanh.pop %v1625
    %v1640 = vxor.u32 %v1626, 2147483648
    %v1641 = vmul.f32 %v1640, 1.442695
    %v1642 = vpow.pop %v1641
    %v1643 = vadd.f32 %v1642, 1.0
    %v1644 = vrcp.pop %v1643
    %v1645 = vmul.f32 1.0, %v1644
    %v1646 = vmul.f32 %v1638, %v1407
    %v1647 = vmul.f32 %v1632, %v1639
    %v1648 = vadd.f32 %v1646, %v1647
    %v1649 = vtanh.pop %v1648
    %v1650 = vmul.f32 %v1645, %v1649
    %s1651 = scalar_lea.vmem [#allocation2], 32
    %1652 = vst [vmem:[%s1651] sm:$0xff] %v1650
    %s1653 = scalar_lea.vmem [#allocation3], 160
    %v1654 = vld [vmem:[%s1653] sm:$0xff]
    %v1655 = vld [vmem:[%s1653 + $0x8] sm:$0xff]
    %v1656 = vld [vmem:[%s1653 + $0x10] sm:$0xff]
    %v1657 = vld [vmem:[%s1653 + $0x18] sm:$0xff]
    %v1658 = vld [vmem:[#allocation6] sm:$0xff]
    %v1659 = vld [vmem:[#allocation6 + $0x8] sm:$0xff]
    %v1660 = vld [vmem:[#allocation6 + $0x10] sm:$0xff]
    %v1661 = vld [vmem:[#allocation6 + $0x18] sm:$0xff]
    %v1662 = vld [vmem:[#allocation6 + $0x20] sm:$0xff]
    %v1663 = vld [vmem:[#allocation6 + $0x28] sm:$0xff]
    %v1664 = vld [vmem:[#allocation6 + $0x30] sm:$0xff]
    %v1665 = vld [vmem:[#allocation6 + $0x38] sm:$0xff]
    %v1666 = vld [vmem:[#allocation6 + $0x40] sm:$0xff]
    %v1667 = vld [vmem:[#allocation6 + $0x48] sm:$0xff]
    %v1668 = vld [vmem:[#allocation6 + $0x50] sm:$0xff]
    %v1669 = vld [vmem:[#allocation6 + $0x58] sm:$0xff]
    %v1670 = vld [vmem:[#allocation6 + $0x60] sm:$0xff]
    %v1671 = vld [vmem:[#allocation6 + $0x68] sm:$0xff]
    %v1672 = vld [vmem:[#allocation6 + $0x70] sm:$0xff]
    %v1673 = vld [vmem:[#allocation6 + $0x78] sm:$0xff]
    %v1674 = vld [vmem:[#allocation6 + $0x80] sm:$0xff]
    %v1675 = vld [vmem:[#allocation6 + $0x88] sm:$0xff]
    %v1676 = vld [vmem:[#allocation6 + $0x90] sm:$0xff]
    %v1677 = vld [vmem:[#allocation6 + $0x98] sm:$0xff]
    %v1678 = vld [vmem:[#allocation6 + $0xa0] sm:$0xff]
    %v1679 = vld [vmem:[#allocation6 + $0xa8] sm:$0xff]
    %v1680 = vld [vmem:[#allocation6 + $0xb0] sm:$0xff]
    %v1681 = vld [vmem:[#allocation6 + $0xb8] sm:$0xff]
    %v1682 = vld [vmem:[#allocation6 + $0xc0] sm:$0xff]
    %v1683 = vld [vmem:[#allocation6 + $0xc8] sm:$0xff]
    %v1684 = vld [vmem:[#allocation6 + $0xd0] sm:$0xff]
    %v1685 = vld [vmem:[#allocation6 + $0xd8] sm:$0xff]
    %v1686 = vld [vmem:[#allocation6 + $0xe0] sm:$0xff]
    %v1687 = vld [vmem:[#allocation6 + $0xe8] sm:$0xff]
    %v1688 = vld [vmem:[#allocation6 + $0xf0] sm:$0xff]
    %v1689 = vld [vmem:[#allocation6 + $0xf8] sm:$0xff]
    %v1690 = vld [vmem:[#allocation6 + $0x100] sm:$0xff]
    %v1691 = vld [vmem:[#allocation6 + $0x108] sm:$0xff]
    %v1692 = vld [vmem:[#allocation6 + $0x110] sm:$0xff]
    %v1693 = vld [vmem:[#allocation6 + $0x118] sm:$0xff]
    %v1694 = vld [vmem:[#allocation6 + $0x120] sm:$0xff]
    %v1695 = vld [vmem:[#allocation6 + $0x128] sm:$0xff]
    %v1696 = vld [vmem:[#allocation6 + $0x130] sm:$0xff]
    %v1697 = vld [vmem:[#allocation6 + $0x138] sm:$0xff]
    %v1698 = vld [vmem:[#allocation6 + $0x140] sm:$0xff]
    %v1699 = vld [vmem:[#allocation6 + $0x148] sm:$0xff]
    %v1700 = vld [vmem:[#allocation6 + $0x150] sm:$0xff]
    %v1701 = vld [vmem:[#allocation6 + $0x158] sm:$0xff]
    %v1702 = vld [vmem:[#allocation6 + $0x160] sm:$0xff]
    %v1703 = vld [vmem:[#allocation6 + $0x168] sm:$0xff]
    %v1704 = vld [vmem:[#allocation6 + $0x170] sm:$0xff]
    %v1705 = vld [vmem:[#allocation6 + $0x178] sm:$0xff]
    %v1706 = vld [vmem:[#allocation6 + $0x180] sm:$0xff]
    %v1707 = vld [vmem:[#allocation6 + $0x188] sm:$0xff]
    %v1708 = vld [vmem:[#allocation6 + $0x190] sm:$0xff]
    %v1709 = vld [vmem:[#allocation6 + $0x198] sm:$0xff]
    %v1710 = vld [vmem:[#allocation6 + $0x1a0] sm:$0xff]
    %v1711 = vld [vmem:[#allocation6 + $0x1a8] sm:$0xff]
    %v1712 = vld [vmem:[#allocation6 + $0x1b0] sm:$0xff]
    %v1713 = vld [vmem:[#allocation6 + $0x1b8] sm:$0xff]
    %v1714 = vld [vmem:[#allocation6 + $0x1c0] sm:$0xff]
    %v1715 = vld [vmem:[#allocation6 + $0x1c8] sm:$0xff]
    %v1716 = vld [vmem:[#allocation6 + $0x1d0] sm:$0xff]
    %v1717 = vld [vmem:[#allocation6 + $0x1d8] sm:$0xff]
    %v1718 = vld [vmem:[#allocation6 + $0x1e0] sm:$0xff]
    %v1719 = vld [vmem:[#allocation6 + $0x1e8] sm:$0xff]
    %v1720 = vld [vmem:[#allocation6 + $0x1f0] sm:$0xff]
    %v1721 = vld [vmem:[#allocation6 + $0x1f8] sm:$0xff]
    %1722 = vmatprep.subr.mxu0 %v1719
    %1723 = vmatpush1.msra.mxu0 %v1718
    %1724 = vmatprep.subr.mxu0 %v1715
    %1725 = vmatpush1.msra.mxu0 %v1714
    %1726 = vmatprep.subr.mxu0 %v1711
    %1727 = vmatpush1.msra.mxu0 %v1710
    %1728 = vmatprep.subr.mxu0 %v1707
    %1729 = vmatpush1.msra.mxu0 %v1706
    %1730 = vmatprep.subr.mxu0 %v1703
    %1731 = vmatpush1.msra.mxu0 %v1702
    %1732 = vmatprep.subr.mxu0 %v1699
    %1733 = vmatpush1.msra.mxu0 %v1698
    %1734 = vmatprep.subr.mxu0 %v1695
    %1735 = vmatpush1.msra.mxu0 %v1694
    %1736 = vmatprep.subr.mxu0 %v1691
    %1737 = vmatpush1.msra.mxu0 %v1690
    %1738 = vmatprep.subr.mxu0 %v1687
    %1739 = vmatpush1.msra.mxu0 %v1686
    %1740 = vmatprep.subr.mxu0 %v1683
    %1741 = vmatpush1.msra.mxu0 %v1682
    %1742 = vmatprep.subr.mxu0 %v1679
    %1743 = vmatpush1.msra.mxu0 %v1678
    %1744 = vmatprep.subr.mxu0 %v1675
    %1745 = vmatpush1.msra.mxu0 %v1674
    %1746 = vmatprep.subr.mxu0 %v1671
    %1747 = vmatpush1.msra.mxu0 %v1670
    %1748 = vmatprep.subr.mxu0 %v1667
    %1749 = vmatpush1.msra.mxu0 %v1666
    %1750 = vmatprep.subr.mxu0 %v1663
    %1751 = vmatpush1.msra.mxu0 %v1662
    %1752 = vmatprep.subr.mxu0 %v1659
    %1753 = vmatpush1.msra.mxu0 %v1658
    %1754 = vmatprep.subr.mxu0 0.0
    %1755 = vmatpush2.msra.mxu0 0.0
    %1756 = vmatprep.subr.mxu0 0.0
    %1757 = vmatpush2.msra.mxu0 0.0
    %1758 = vmatprep.subr.mxu0 0.0
    %1759 = vmatpush2.msra.mxu0 0.0
    %1760 = vmatprep.subr.mxu0 0.0
    %1761 = vmatpush2.msra.mxu0 0.0
    %1762 = vmatprep.subr.mxu0 0.0
    %1763 = vmatpush2.msra.mxu0 0.0
    %1764 = vmatprep.subr.mxu0 0.0
    %1765 = vmatpush2.msra.mxu0 0.0
    %1766 = vmatprep.subr.mxu0 0.0
    %1767 = vmatpush2.msra.mxu0 0.0
    %1768 = vmatprep.subr.mxu0 0.0
    %1769 = vmatpush2.msra.mxu0 0.0
    %1770 = vmatprep.subr.mxu0 0.0
    %1771 = vmatpush2.msra.mxu0 0.0
    %1772 = vmatprep.subr.mxu0 0.0
    %1773 = vmatpush2.msra.mxu0 0.0
    %1774 = vmatprep.subr.mxu0 0.0
    %1775 = vmatpush2.msra.mxu0 0.0
    %1776 = vmatprep.subr.mxu0 0.0
    %1777 = vmatpush2.msra.mxu0 0.0
    %1778 = vmatprep.subr.mxu0 0.0
    %1779 = vmatpush2.msra.mxu0 0.0
    %1780 = vmatprep.subr.mxu0 0.0
    %1781 = vmatpush2.msra.mxu0 0.0
    %1782 = vmatprep.subr.mxu0 0.0
    %1783 = vmatpush2.msra.mxu0 0.0
    %1784 = vmatprep.subr.mxu0 0.0
    %1785 = vmatpush2.msra.mxu0 0.0
    %1786 = vmatprep.mubr.f32.mxu0 0.0
    %1787 = vmatmul.mubr.f32.gmra.mxu0 %v1650
    %v1788 = vpop.f32.mrf.mxu0
    %v1789 = vadd.f32 0.0, %v1788
    %v1790 = vpop.f32.mrf.mxu0
    %v1791 = vadd.f32 0.0, %v1790
    %1792 = vdwg.mxu0
    %1793 = vmatprep.subr.mxu0 %v1721
    %1794 = vmatpush1.msra.mxu0 %v1720
    %1795 = vmatprep.subr.mxu0 %v1717
    %1796 = vmatpush1.msra.mxu0 %v1716
    %1797 = vmatprep.subr.mxu0 %v1713
    %1798 = vmatpush1.msra.mxu0 %v1712
    %1799 = vmatprep.subr.mxu0 %v1709
    %1800 = vmatpush1.msra.mxu0 %v1708
    %1801 = vmatprep.subr.mxu0 %v1705
    %1802 = vmatpush1.msra.mxu0 %v1704
    %1803 = vmatprep.subr.mxu0 %v1701
    %1804 = vmatpush1.msra.mxu0 %v1700
    %1805 = vmatprep.subr.mxu0 %v1697
    %1806 = vmatpush1.msra.mxu0 %v1696
    %1807 = vmatprep.subr.mxu0 %v1693
    %1808 = vmatpush1.msra.mxu0 %v1692
    %1809 = vmatprep.subr.mxu0 %v1689
    %1810 = vmatpush1.msra.mxu0 %v1688
    %1811 = vmatprep.subr.mxu0 %v1685
    %1812 = vmatpush1.msra.mxu0 %v1684
    %1813 = vmatprep.subr.mxu0 %v1681
    %1814 = vmatpush1.msra.mxu0 %v1680
    %1815 = vmatprep.subr.mxu0 %v1677
    %1816 = vmatpush1.msra.mxu0 %v1676
    %1817 = vmatprep.subr.mxu0 %v1673
    %1818 = vmatpush1.msra.mxu0 %v1672
    %1819 = vmatprep.subr.mxu0 %v1669
    %1820 = vmatpush1.msra.mxu0 %v1668
    %1821 = vmatprep.subr.mxu0 %v1665
    %1822 = vmatpush1.msra.mxu0 %v1664
    %1823 = vmatprep.subr.mxu0 %v1661
    %1824 = vmatpush1.msra.mxu0 %v1660
    %1825 = vmatprep.subr.mxu0 0.0
    %1826 = vmatpush2.msra.mxu0 0.0
    %1827 = vmatprep.subr.mxu0 0.0
    %1828 = vmatpush2.msra.mxu0 0.0
    %1829 = vmatprep.subr.mxu0 0.0
    %1830 = vmatpush2.msra.mxu0 0.0
    %1831 = vmatprep.subr.mxu0 0.0
    %1832 = vmatpush2.msra.mxu0 0.0
    %1833 = vmatprep.subr.mxu0 0.0
    %1834 = vmatpush2.msra.mxu0 0.0
    %1835 = vmatprep.subr.mxu0 0.0
    %1836 = vmatpush2.msra.mxu0 0.0
    %1837 = vmatprep.subr.mxu0 0.0
    %1838 = vmatpush2.msra.mxu0 0.0
    %1839 = vmatprep.subr.mxu0 0.0
    %1840 = vmatpush2.msra.mxu0 0.0
    %1841 = vmatprep.subr.mxu0 0.0
    %1842 = vmatpush2.msra.mxu0 0.0
    %1843 = vmatprep.subr.mxu0 0.0
    %1844 = vmatpush2.msra.mxu0 0.0
    %1845 = vmatprep.subr.mxu0 0.0
    %1846 = vmatpush2.msra.mxu0 0.0
    %1847 = vmatprep.subr.mxu0 0.0
    %1848 = vmatpush2.msra.mxu0 0.0
    %1849 = vmatprep.subr.mxu0 0.0
    %1850 = vmatpush2.msra.mxu0 0.0
    %1851 = vmatprep.subr.mxu0 0.0
    %1852 = vmatpush2.msra.mxu0 0.0
    %1853 = vmatprep.subr.mxu0 0.0
    %1854 = vmatpush2.msra.mxu0 0.0
    %1855 = vmatprep.subr.mxu0 0.0
    %1856 = vmatpush2.msra.mxu0 0.0
    %1857 = vmatprep.mubr.f32.mxu0 0.0
    %1858 = vmatmul.mubr.f32.gmra.mxu0 %v1650
    %v1859 = vpop.f32.mrf.mxu0
    %v1860 = vadd.f32 0.0, %v1859
    %v1861 = vpop.f32.mrf.mxu0
    %v1862 = vadd.f32 0.0, %v1861
    %1863 = vdwg.mxu0
    %v1864 = vadd.f32 %v1654, %v1789
    %v1865 = vadd.f32 %v1655, %v1791
    %v1866 = vadd.f32 %v1656, %v1860
    %v1867 = vadd.f32 %v1657, %v1862
    %v1868 = vxor.u32 %v1864, 2147483648
    %v1869 = vmul.f32 %v1868, 1.442695
    %v1870 = vpow.pop %v1869
    %v1871 = vadd.f32 %v1870, 1.0
    %v1872 = vrcp.pop %v1871
    %v1873 = vmul.f32 1.0, %v1872
    %v1874 = vxor.u32 %v1865, 2147483648
    %v1875 = vmul.f32 %v1874, 1.442695
    %v1876 = vpow.pop %v1875
    %v1877 = vadd.f32 %v1876, 1.0
    %v1878 = vrcp.pop %v1877
    %v1879 = vmul.f32 1.0, %v1878
    %v1880 = vtanh.pop %v1866
    %v1881 = vxor.u32 %v1867, 2147483648
    %v1882 = vmul.f32 %v1881, 1.442695
    %v1883 = vpow.pop %v1882
    %v1884 = vadd.f32 %v1883, 1.0
    %v1885 = vrcp.pop %v1884
    %v1886 = vmul.f32 1.0, %v1885
    %v1887 = vmul.f32 %v1879, %v1648
    %v1888 = vmul.f32 %v1873, %v1880
    %v1889 = vadd.f32 %v1887, %v1888
    %v1890 = vtanh.pop %v1889
    %v1891 = vmul.f32 %v1886, %v1890
    %s1892 = scalar_lea.vmem [#allocation2], 40
    %1893 = vst [vmem:[%s1892] sm:$0xff] %v1891
    %s1894 = scalar_lea.vmem [#allocation3], 192
    %v1895 = vld [vmem:[%s1894] sm:$0xff]
    %v1896 = vld [vmem:[%s1894 + $0x8] sm:$0xff]
    %v1897 = vld [vmem:[%s1894 + $0x10] sm:$0xff]
    %v1898 = vld [vmem:[%s1894 + $0x18] sm:$0xff]
    %v1899 = vld [vmem:[#allocation6] sm:$0xff]
    %v1900 = vld [vmem:[#allocation6 + $0x8] sm:$0xff]
    %v1901 = vld [vmem:[#allocation6 + $0x10] sm:$0xff]
    %v1902 = vld [vmem:[#allocation6 + $0x18] sm:$0xff]
    %v1903 = vld [vmem:[#allocation6 + $0x20] sm:$0xff]
    %v1904 = vld [vmem:[#allocation6 + $0x28] sm:$0xff]
    %v1905 = vld [vmem:[#allocation6 + $0x30] sm:$0xff]
    %v1906 = vld [vmem:[#allocation6 + $0x38] sm:$0xff]
    %v1907 = vld [vmem:[#allocation6 + $0x40] sm:$0xff]
    %v1908 = vld [vmem:[#allocation6 + $0x48] sm:$0xff]
    %v1909 = vld [vmem:[#allocation6 + $0x50] sm:$0xff]
    %v1910 = vld [vmem:[#allocation6 + $0x58] sm:$0xff]
    %v1911 = vld [vmem:[#allocation6 + $0x60] sm:$0xff]
    %v1912 = vld [vmem:[#allocation6 + $0x68] sm:$0xff]
    %v1913 = vld [vmem:[#allocation6 + $0x70] sm:$0xff]
    %v1914 = vld [vmem:[#allocation6 + $0x78] sm:$0xff]
    %v1915 = vld [vmem:[#allocation6 + $0x80] sm:$0xff]
    %v1916 = vld [vmem:[#allocation6 + $0x88] sm:$0xff]
    %v1917 = vld [vmem:[#allocation6 + $0x90] sm:$0xff]
    %v1918 = vld [vmem:[#allocation6 + $0x98] sm:$0xff]
    %v1919 = vld [vmem:[#allocation6 + $0xa0] sm:$0xff]
    %v1920 = vld [vmem:[#allocation6 + $0xa8] sm:$0xff]
    %v1921 = vld [vmem:[#allocation6 + $0xb0] sm:$0xff]
    %v1922 = vld [vmem:[#allocation6 + $0xb8] sm:$0xff]
    %v1923 = vld [vmem:[#allocation6 + $0xc0] sm:$0xff]
    %v1924 = vld [vmem:[#allocation6 + $0xc8] sm:$0xff]
    %v1925 = vld [vmem:[#allocation6 + $0xd0] sm:$0xff]
    %v1926 = vld [vmem:[#allocation6 + $0xd8] sm:$0xff]
    %v1927 = vld [vmem:[#allocation6 + $0xe0] sm:$0xff]
    %v1928 = vld [vmem:[#allocation6 + $0xe8] sm:$0xff]
    %v1929 = vld [vmem:[#allocation6 + $0xf0] sm:$0xff]
    %v1930 = vld [vmem:[#allocation6 + $0xf8] sm:$0xff]
    %v1931 = vld [vmem:[#allocation6 + $0x100] sm:$0xff]
    %v1932 = vld [vmem:[#allocation6 + $0x108] sm:$0xff]
    %v1933 = vld [vmem:[#allocation6 + $0x110] sm:$0xff]
    %v1934 = vld [vmem:[#allocation6 + $0x118] sm:$0xff]
    %v1935 = vld [vmem:[#allocation6 + $0x120] sm:$0xff]
    %v1936 = vld [vmem:[#allocation6 + $0x128] sm:$0xff]
    %v1937 = vld [vmem:[#allocation6 + $0x130] sm:$0xff]
    %v1938 = vld [vmem:[#allocation6 + $0x138] sm:$0xff]
    %v1939 = vld [vmem:[#allocation6 + $0x140] sm:$0xff]
    %v1940 = vld [vmem:[#allocation6 + $0x148] sm:$0xff]
    %v1941 = vld [vmem:[#allocation6 + $0x150] sm:$0xff]
    %v1942 = vld [vmem:[#allocation6 + $0x158] sm:$0xff]
    %v1943 = vld [vmem:[#allocation6 + $0x160] sm:$0xff]
    %v1944 = vld [vmem:[#allocation6 + $0x168] sm:$0xff]
    %v1945 = vld [vmem:[#allocation6 + $0x170] sm:$0xff]
    %v1946 = vld [vmem:[#allocation6 + $0x178] sm:$0xff]
    %v1947 = vld [vmem:[#allocation6 + $0x180] sm:$0xff]
    %v1948 = vld [vmem:[#allocation6 + $0x188] sm:$0xff]
    %v1949 = vld [vmem:[#allocation6 + $0x190] sm:$0xff]
    %v1950 = vld [vmem:[#allocation6 + $0x198] sm:$0xff]
    %v1951 = vld [vmem:[#allocation6 + $0x1a0] sm:$0xff]
    %v1952 = vld [vmem:[#allocation6 + $0x1a8] sm:$0xff]
    %v1953 = vld [vmem:[#allocation6 + $0x1b0] sm:$0xff]
    %v1954 = vld [vmem:[#allocation6 + $0x1b8] sm:$0xff]
    %v1955 = vld [vmem:[#allocation6 + $0x1c0] sm:$0xff]
    %v1956 = vld [vmem:[#allocation6 + $0x1c8] sm:$0xff]
    %v1957 = vld [vmem:[#allocation6 + $0x1d0] sm:$0xff]
    %v1958 = vld [vmem:[#allocation6 + $0x1d8] sm:$0xff]
    %v1959 = vld [vmem:[#allocation6 + $0x1e0] sm:$0xff]
    %v1960 = vld [vmem:[#allocation6 + $0x1e8] sm:$0xff]
    %v1961 = vld [vmem:[#allocation6 + $0x1f0] sm:$0xff]
    %v1962 = vld [vmem:[#allocation6 + $0x1f8] sm:$0xff]
    %1963 = vmatprep.subr.mxu0 %v1960
    %1964 = vmatpush1.msra.mxu0 %v1959
    %1965 = vmatprep.subr.mxu0 %v1956
    %1966 = vmatpush1.msra.mxu0 %v1955
    %1967 = vmatprep.subr.mxu0 %v1952
    %1968 = vmatpush1.msra.mxu0 %v1951
    %1969 = vmatprep.subr.mxu0 %v1948
    %1970 = vmatpush1.msra.mxu0 %v1947
    %1971 = vmatprep.subr.mxu0 %v1944
    %1972 = vmatpush1.msra.mxu0 %v1943
    %1973 = vmatprep.subr.mxu0 %v1940
    %1974 = vmatpush1.msra.mxu0 %v1939
    %1975 = vmatprep.subr.mxu0 %v1936
    %1976 = vmatpush1.msra.mxu0 %v1935
    %1977 = vmatprep.subr.mxu0 %v1932
    %1978 = vmatpush1.msra.mxu0 %v1931
    %1979 = vmatprep.subr.mxu0 %v1928
    %1980 = vmatpush1.msra.mxu0 %v1927
    %1981 = vmatprep.subr.mxu0 %v1924
    %1982 = vmatpush1.msra.mxu0 %v1923
    %1983 = vmatprep.subr.mxu0 %v1920
    %1984 = vmatpush1.msra.mxu0 %v1919
    %1985 = vmatprep.subr.mxu0 %v1916
    %1986 = vmatpush1.msra.mxu0 %v1915
    %1987 = vmatprep.subr.mxu0 %v1912
    %1988 = vmatpush1.msra.mxu0 %v1911
    %1989 = vmatprep.subr.mxu0 %v1908
    %1990 = vmatpush1.msra.mxu0 %v1907
    %1991 = vmatprep.subr.mxu0 %v1904
    %1992 = vmatpush1.msra.mxu0 %v1903
    %1993 = vmatprep.subr.mxu0 %v1900
    %1994 = vmatpush1.msra.mxu0 %v1899
    %1995 = vmatprep.subr.mxu0 0.0
    %1996 = vmatpush2.msra.mxu0 0.0
    %1997 = vmatprep.subr.mxu0 0.0
    %1998 = vmatpush2.msra.mxu0 0.0
    %1999 = vmatprep.subr.mxu0 0.0
    %2000 = vmatpush2.msra.mxu0 0.0
    %2001 = vmatprep.subr.mxu0 0.0
    %2002 = vmatpush2.msra.mxu0 0.0
    %2003 = vmatprep.subr.mxu0 0.0
    %2004 = vmatpush2.msra.mxu0 0.0
    %2005 = vmatprep.subr.mxu0 0.0
    %2006 = vmatpush2.msra.mxu0 0.0
    %2007 = vmatprep.subr.mxu0 0.0
    %2008 = vmatpush2.msra.mxu0 0.0
    %2009 = vmatprep.subr.mxu0 0.0
    %2010 = vmatpush2.msra.mxu0 0.0
    %2011 = vmatprep.subr.mxu0 0.0
    %2012 = vmatpush2.msra.mxu0 0.0
    %2013 = vmatprep.subr.mxu0 0.0
    %2014 = vmatpush2.msra.mxu0 0.0
    %2015 = vmatprep.subr.mxu0 0.0
    %2016 = vmatpush2.msra.mxu0 0.0
    %2017 = vmatprep.subr.mxu0 0.0
    %2018 = vmatpush2.msra.mxu0 0.0
    %2019 = vmatprep.subr.mxu0 0.0
    %2020 = vmatpush2.msra.mxu0 0.0
    %2021 = vmatprep.subr.mxu0 0.0
    %2022 = vmatpush2.msra.mxu0 0.0
    %2023 = vmatprep.subr.mxu0 0.0
    %2024 = vmatpush2.msra.mxu0 0.0
    %2025 = vmatprep.subr.mxu0 0.0
    %2026 = vmatpush2.msra.mxu0 0.0
    %2027 = vmatprep.mubr.f32.mxu0 0.0
    %2028 = vmatmul.mubr.f32.gmra.mxu0 %v1891
    %v2029 = vpop.f32.mrf.mxu0
    %v2030 = vadd.f32 0.0, %v2029
    %v2031 = vpop.f32.mrf.mxu0
    %v2032 = vadd.f32 0.0, %v2031
    %2033 = vdwg.mxu0
    %2034 = vmatprep.subr.mxu0 %v1962
    %2035 = vmatpush1.msra.mxu0 %v1961
    %2036 = vmatprep.subr.mxu0 %v1958
    %2037 = vmatpush1.msra.mxu0 %v1957
    %2038 = vmatprep.subr.mxu0 %v1954
    %2039 = vmatpush1.msra.mxu0 %v1953
    %2040 = vmatprep.subr.mxu0 %v1950
    %2041 = vmatpush1.msra.mxu0 %v1949
    %2042 = vmatprep.subr.mxu0 %v1946
    %2043 = vmatpush1.msra.mxu0 %v1945
    %2044 = vmatprep.subr.mxu0 %v1942
    %2045 = vmatpush1.msra.mxu0 %v1941
    %2046 = vmatprep.subr.mxu0 %v1938
    %2047 = vmatpush1.msra.mxu0 %v1937
    %2048 = vmatprep.subr.mxu0 %v1934
    %2049 = vmatpush1.msra.mxu0 %v1933
    %2050 = vmatprep.subr.mxu0 %v1930
    %2051 = vmatpush1.msra.mxu0 %v1929
    %2052 = vmatprep.subr.mxu0 %v1926
    %2053 = vmatpush1.msra.mxu0 %v1925
    %2054 = vmatprep.subr.mxu0 %v1922
    %2055 = vmatpush1.msra.mxu0 %v1921
    %2056 = vmatprep.subr.mxu0 %v1918
    %2057 = vmatpush1.msra.mxu0 %v1917
    %2058 = vmatprep.subr.mxu0 %v1914
    %2059 = vmatpush1.msra.mxu0 %v1913
    %2060 = vmatprep.subr.mxu0 %v1910
    %2061 = vmatpush1.msra.mxu0 %v1909
    %2062 = vmatprep.subr.mxu0 %v1906
    %2063 = vmatpush1.msra.mxu0 %v1905
    %2064 = vmatprep.subr.mxu0 %v1902
    %2065 = vmatpush1.msra.mxu0 %v1901
    %2066 = vmatprep.subr.mxu0 0.0
    %2067 = vmatpush2.msra.mxu0 0.0
    %2068 = vmatprep.subr.mxu0 0.0
    %2069 = vmatpush2.msra.mxu0 0.0
    %2070 = vmatprep.subr.mxu0 0.0
    %2071 = vmatpush2.msra.mxu0 0.0
    %2072 = vmatprep.subr.mxu0 0.0
    %2073 = vmatpush2.msra.mxu0 0.0
    %2074 = vmatprep.subr.mxu0 0.0
    %2075 = vmatpush2.msra.mxu0 0.0
    %2076 = vmatprep.subr.mxu0 0.0
    %2077 = vmatpush2.msra.mxu0 0.0
    %2078 = vmatprep.subr.mxu0 0.0
    %2079 = vmatpush2.msra.mxu0 0.0
    %2080 = vmatprep.subr.mxu0 0.0
    %2081 = vmatpush2.msra.mxu0 0.0
    %2082 = vmatprep.subr.mxu0 0.0
    %2083 = vmatpush2.msra.mxu0 0.0
    %2084 = vmatprep.subr.mxu0 0.0
    %2085 = vmatpush2.msra.mxu0 0.0
    %2086 = vmatprep.subr.mxu0 0.0
    %2087 = vmatpush2.msra.mxu0 0.0
    %2088 = vmatprep.subr.mxu0 0.0
    %2089 = vmatpush2.msra.mxu0 0.0
    %2090 = vmatprep.subr.mxu0 0.0
    %2091 = vmatpush2.msra.mxu0 0.0
    %2092 = vmatprep.subr.mxu0 0.0
    %2093 = vmatpush2.msra.mxu0 0.0
    %2094 = vmatprep.subr.mxu0 0.0
    %2095 = vmatpush2.msra.mxu0 0.0
    %2096 = vmatprep.subr.mxu0 0.0
    %2097 = vmatpush2.msra.mxu0 0.0
    %2098 = vmatprep.mubr.f32.mxu0 0.0
    %2099 = vmatmul.mubr.f32.gmra.mxu0 %v1891
    %v2100 = vpop.f32.mrf.mxu0
    %v2101 = vadd.f32 0.0, %v2100
    %v2102 = vpop.f32.mrf.mxu0
    %v2103 = vadd.f32 0.0, %v2102
    %2104 = vdwg.mxu0
    %v2105 = vadd.f32 %v1895, %v2030
    %v2106 = vadd.f32 %v1896, %v2032
    %v2107 = vadd.f32 %v1897, %v2101
    %v2108 = vadd.f32 %v1898, %v2103
    %v2109 = vxor.u32 %v2105, 2147483648
    %v2110 = vmul.f32 %v2109, 1.442695
    %v2111 = vpow.pop %v2110
    %v2112 = vadd.f32 %v2111, 1.0
    %v2113 = vrcp.pop %v2112
    %v2114 = vmul.f32 1.0, %v2113
    %v2115 = vxor.u32 %v2106, 2147483648
    %v2116 = vmul.f32 %v2115, 1.442695
    %v2117 = vpow.pop %v2116
    %v2118 = vadd.f32 %v2117, 1.0
    %v2119 = vrcp.pop %v2118
    %v2120 = vmul.f32 1.0, %v2119
    %v2121 = vtanh.pop %v2107
    %v2122 = vxor.u32 %v2108, 2147483648
    %v2123 = vmul.f32 %v2122, 1.442695
    %v2124 = vpow.pop %v2123
    %v2125 = vadd.f32 %v2124, 1.0
    %v2126 = vrcp.pop %v2125
    %v2127 = vmul.f32 1.0, %v2126
    %v2128 = vmul.f32 %v2120, %v1889
    %v2129 = vmul.f32 %v2114, %v2121
    %v2130 = vadd.f32 %v2128, %v2129
    %v2131 = vtanh.pop %v2130
    %v2132 = vmul.f32 %v2127, %v2131
    %s2133 = scalar_lea.vmem [#allocation2], 48
    %2134 = vst [vmem:[%s2133] sm:$0xff] %v2132
    %s2135 = scalar_lea.vmem [#allocation3], 224
    %v2136 = vld [vmem:[%s2135] sm:$0xff]
    %v2137 = vld [vmem:[%s2135 + $0x8] sm:$0xff]
    %v2138 = vld [vmem:[%s2135 + $0x10] sm:$0xff]
    %v2139 = vld [vmem:[%s2135 + $0x18] sm:$0xff]
    %v2140 = vld [vmem:[#allocation6] sm:$0xff]
    %v2141 = vld [vmem:[#allocation6 + $0x8] sm:$0xff]
    %v2142 = vld [vmem:[#allocation6 + $0x10] sm:$0xff]
    %v2143 = vld [vmem:[#allocation6 + $0x18] sm:$0xff]
    %v2144 = vld [vmem:[#allocation6 + $0x20] sm:$0xff]
    %v2145 = vld [vmem:[#allocation6 + $0x28] sm:$0xff]
    %v2146 = vld [vmem:[#allocation6 + $0x30] sm:$0xff]
    %v2147 = vld [vmem:[#allocation6 + $0x38] sm:$0xff]
    %v2148 = vld [vmem:[#allocation6 + $0x40] sm:$0xff]
    %v2149 = vld [vmem:[#allocation6 + $0x48] sm:$0xff]
    %v2150 = vld [vmem:[#allocation6 + $0x50] sm:$0xff]
    %v2151 = vld [vmem:[#allocation6 + $0x58] sm:$0xff]
    %v2152 = vld [vmem:[#allocation6 + $0x60] sm:$0xff]
    %v2153 = vld [vmem:[#allocation6 + $0x68] sm:$0xff]
    %v2154 = vld [vmem:[#allocation6 + $0x70] sm:$0xff]
    %v2155 = vld [vmem:[#allocation6 + $0x78] sm:$0xff]
    %v2156 = vld [vmem:[#allocation6 + $0x80] sm:$0xff]
    %v2157 = vld [vmem:[#allocation6 + $0x88] sm:$0xff]
    %v2158 = vld [vmem:[#allocation6 + $0x90] sm:$0xff]
    %v2159 = vld [vmem:[#allocation6 + $0x98] sm:$0xff]
    %v2160 = vld [vmem:[#allocation6 + $0xa0] sm:$0xff]
    %v2161 = vld [vmem:[#allocation6 + $0xa8] sm:$0xff]
    %v2162 = vld [vmem:[#allocation6 + $0xb0] sm:$0xff]
    %v2163 = vld [vmem:[#allocation6 + $0xb8] sm:$0xff]
    %v2164 = vld [vmem:[#allocation6 + $0xc0] sm:$0xff]
    %v2165 = vld [vmem:[#allocation6 + $0xc8] sm:$0xff]
    %v2166 = vld [vmem:[#allocation6 + $0xd0] sm:$0xff]
    %v2167 = vld [vmem:[#allocation6 + $0xd8] sm:$0xff]
    %v2168 = vld [vmem:[#allocation6 + $0xe0] sm:$0xff]
    %v2169 = vld [vmem:[#allocation6 + $0xe8] sm:$0xff]
    %v2170 = vld [vmem:[#allocation6 + $0xf0] sm:$0xff]
    %v2171 = vld [vmem:[#allocation6 + $0xf8] sm:$0xff]
    %v2172 = vld [vmem:[#allocation6 + $0x100] sm:$0xff]
    %v2173 = vld [vmem:[#allocation6 + $0x108] sm:$0xff]
    %v2174 = vld [vmem:[#allocation6 + $0x110] sm:$0xff]
    %v2175 = vld [vmem:[#allocation6 + $0x118] sm:$0xff]
    %v2176 = vld [vmem:[#allocation6 + $0x120] sm:$0xff]
    %v2177 = vld [vmem:[#allocation6 + $0x128] sm:$0xff]
    %v2178 = vld [vmem:[#allocation6 + $0x130] sm:$0xff]
    %v2179 = vld [vmem:[#allocation6 + $0x138] sm:$0xff]
    %v2180 = vld [vmem:[#allocation6 + $0x140] sm:$0xff]
    %v2181 = vld [vmem:[#allocation6 + $0x148] sm:$0xff]
    %v2182 = vld [vmem:[#allocation6 + $0x150] sm:$0xff]
    %v2183 = vld [vmem:[#allocation6 + $0x158] sm:$0xff]
    %v2184 = vld [vmem:[#allocation6 + $0x160] sm:$0xff]
    %v2185 = vld [vmem:[#allocation6 + $0x168] sm:$0xff]
    %v2186 = vld [vmem:[#allocation6 + $0x170] sm:$0xff]
    %v2187 = vld [vmem:[#allocation6 + $0x178] sm:$0xff]
    %v2188 = vld [vmem:[#allocation6 + $0x180] sm:$0xff]
    %v2189 = vld [vmem:[#allocation6 + $0x188] sm:$0xff]
    %v2190 = vld [vmem:[#allocation6 + $0x190] sm:$0xff]
    %v2191 = vld [vmem:[#allocation6 + $0x198] sm:$0xff]
    %v2192 = vld [vmem:[#allocation6 + $0x1a0] sm:$0xff]
    %v2193 = vld [vmem:[#allocation6 + $0x1a8] sm:$0xff]
    %v2194 = vld [vmem:[#allocation6 + $0x1b0] sm:$0xff]
    %v2195 = vld [vmem:[#allocation6 + $0x1b8] sm:$0xff]
    %v2196 = vld [vmem:[#allocation6 + $0x1c0] sm:$0xff]
    %v2197 = vld [vmem:[#allocation6 + $0x1c8] sm:$0xff]
    %v2198 = vld [vmem:[#allocation6 + $0x1d0] sm:$0xff]
    %v2199 = vld [vmem:[#allocation6 + $0x1d8] sm:$0xff]
    %v2200 = vld [vmem:[#allocation6 + $0x1e0] sm:$0xff]
    %v2201 = vld [vmem:[#allocation6 + $0x1e8] sm:$0xff]
    %v2202 = vld [vmem:[#allocation6 + $0x1f0] sm:$0xff]
    %v2203 = vld [vmem:[#allocation6 + $0x1f8] sm:$0xff]
    %2204 = vmatprep.subr.mxu0 %v2201
    %2205 = vmatpush1.msra.mxu0 %v2200
    %2206 = vmatprep.subr.mxu0 %v2197
    %2207 = vmatpush1.msra.mxu0 %v2196
    %2208 = vmatprep.subr.mxu0 %v2193
    %2209 = vmatpush1.msra.mxu0 %v2192
    %2210 = vmatprep.subr.mxu0 %v2189
    %2211 = vmatpush1.msra.mxu0 %v2188
    %2212 = vmatprep.subr.mxu0 %v2185
    %2213 = vmatpush1.msra.mxu0 %v2184
    %2214 = vmatprep.subr.mxu0 %v2181
    %2215 = vmatpush1.msra.mxu0 %v2180
    %2216 = vmatprep.subr.mxu0 %v2177
    %2217 = vmatpush1.msra.mxu0 %v2176
    %2218 = vmatprep.subr.mxu0 %v2173
    %2219 = vmatpush1.msra.mxu0 %v2172
    %2220 = vmatprep.subr.mxu0 %v2169
    %2221 = vmatpush1.msra.mxu0 %v2168
    %2222 = vmatprep.subr.mxu0 %v2165
    %2223 = vmatpush1.msra.mxu0 %v2164
    %2224 = vmatprep.subr.mxu0 %v2161
    %2225 = vmatpush1.msra.mxu0 %v2160
    %2226 = vmatprep.subr.mxu0 %v2157
    %2227 = vmatpush1.msra.mxu0 %v2156
    %2228 = vmatprep.subr.mxu0 %v2153
    %2229 = vmatpush1.msra.mxu0 %v2152
    %2230 = vmatprep.subr.mxu0 %v2149
    %2231 = vmatpush1.msra.mxu0 %v2148
    %2232 = vmatprep.subr.mxu0 %v2145
    %2233 = vmatpush1.msra.mxu0 %v2144
    %2234 = vmatprep.subr.mxu0 %v2141
    %2235 = vmatpush1.msra.mxu0 %v2140
    %2236 = vmatprep.subr.mxu0 0.0
    %2237 = vmatpush2.msra.mxu0 0.0
    %2238 = vmatprep.subr.mxu0 0.0
    %2239 = vmatpush2.msra.mxu0 0.0
    %2240 = vmatprep.subr.mxu0 0.0
    %2241 = vmatpush2.msra.mxu0 0.0
    %2242 = vmatprep.subr.mxu0 0.0
    %2243 = vmatpush2.msra.mxu0 0.0
    %2244 = vmatprep.subr.mxu0 0.0
    %2245 = vmatpush2.msra.mxu0 0.0
    %2246 = vmatprep.subr.mxu0 0.0
    %2247 = vmatpush2.msra.mxu0 0.0
    %2248 = vmatprep.subr.mxu0 0.0
    %2249 = vmatpush2.msra.mxu0 0.0
    %2250 = vmatprep.subr.mxu0 0.0
    %2251 = vmatpush2.msra.mxu0 0.0
    %2252 = vmatprep.subr.mxu0 0.0
    %2253 = vmatpush2.msra.mxu0 0.0
    %2254 = vmatprep.subr.mxu0 0.0
    %2255 = vmatpush2.msra.mxu0 0.0
    %2256 = vmatprep.subr.mxu0 0.0
    %2257 = vmatpush2.msra.mxu0 0.0
    %2258 = vmatprep.subr.mxu0 0.0
    %2259 = vmatpush2.msra.mxu0 0.0
    %2260 = vmatprep.subr.mxu0 0.0
    %2261 = vmatpush2.msra.mxu0 0.0
    %2262 = vmatprep.subr.mxu0 0.0
    %2263 = vmatpush2.msra.mxu0 0.0
    %2264 = vmatprep.subr.mxu0 0.0
    %2265 = vmatpush2.msra.mxu0 0.0
    %2266 = vmatprep.subr.mxu0 0.0
    %2267 = vmatpush2.msra.mxu0 0.0
    %2268 = vmatprep.mubr.f32.mxu0 0.0
    %2269 = vmatmul.mubr.f32.gmra.mxu0 %v2132
    %v2270 = vpop.f32.mrf.mxu0
    %v2271 = vadd.f32 0.0, %v2270
    %v2272 = vpop.f32.mrf.mxu0
    %v2273 = vadd.f32 0.0, %v2272
    %2274 = vdwg.mxu0
    %2275 = vmatprep.subr.mxu0 %v2203
    %2276 = vmatpush1.msra.mxu0 %v2202
    %2277 = vmatprep.subr.mxu0 %v2199
    %2278 = vmatpush1.msra.mxu0 %v2198
    %2279 = vmatprep.subr.mxu0 %v2195
    %2280 = vmatpush1.msra.mxu0 %v2194
    %2281 = vmatprep.subr.mxu0 %v2191
    %2282 = vmatpush1.msra.mxu0 %v2190
    %2283 = vmatprep.subr.mxu0 %v2187
    %2284 = vmatpush1.msra.mxu0 %v2186
    %2285 = vmatprep.subr.mxu0 %v2183
    %2286 = vmatpush1.msra.mxu0 %v2182
    %2287 = vmatprep.subr.mxu0 %v2179
    %2288 = vmatpush1.msra.mxu0 %v2178
    %2289 = vmatprep.subr.mxu0 %v2175
    %2290 = vmatpush1.msra.mxu0 %v2174
    %2291 = vmatprep.subr.mxu0 %v2171
    %2292 = vmatpush1.msra.mxu0 %v2170
    %2293 = vmatprep.subr.mxu0 %v2167
    %2294 = vmatpush1.msra.mxu0 %v2166
    %2295 = vmatprep.subr.mxu0 %v2163
    %2296 = vmatpush1.msra.mxu0 %v2162
    %2297 = vmatprep.subr.mxu0 %v2159
    %2298 = vmatpush1.msra.mxu0 %v2158
    %2299 = vmatprep.subr.mxu0 %v2155
    %2300 = vmatpush1.msra.mxu0 %v2154
    %2301 = vmatprep.subr.mxu0 %v2151
    %2302 = vmatpush1.msra.mxu0 %v2150
    %2303 = vmatprep.subr.mxu0 %v2147
    %2304 = vmatpush1.msra.mxu0 %v2146
    %2305 = vmatprep.subr.mxu0 %v2143
    %2306 = vmatpush1.msra.mxu0 %v2142
    %2307 = vmatprep.subr.mxu0 0.0
    %2308 = vmatpush2.msra.mxu0 0.0
    %2309 = vmatprep.subr.mxu0 0.0
    %2310 = vmatpush2.msra.mxu0 0.0
    %2311 = vmatprep.subr.mxu0 0.0
    %2312 = vmatpush2.msra.mxu0 0.0
    %2313 = vmatprep.subr.mxu0 0.0
    %2314 = vmatpush2.msra.mxu0 0.0
    %2315 = vmatprep.subr.mxu0 0.0
    %2316 = vmatpush2.msra.mxu0 0.0
    %2317 = vmatprep.subr.mxu0 0.0
    %2318 = vmatpush2.msra.mxu0 0.0
    %2319 = vmatprep.subr.mxu0 0.0
    %2320 = vmatpush2.msra.mxu0 0.0
    %2321 = vmatprep.subr.mxu0 0.0
    %2322 = vmatpush2.msra.mxu0 0.0
    %2323 = vmatprep.subr.mxu0 0.0
    %2324 = vmatpush2.msra.mxu0 0.0
    %2325 = vmatprep.subr.mxu0 0.0
    %2326 = vmatpush2.msra.mxu0 0.0
    %2327 = vmatprep.subr.mxu0 0.0
    %2328 = vmatpush2.msra.mxu0 0.0
    %2329 = vmatprep.subr.mxu0 0.0
    %2330 = vmatpush2.msra.mxu0 0.0
    %2331 = vmatprep.subr.mxu0 0.0
    %2332 = vmatpush2.msra.mxu0 0.0
    %2333 = vmatprep.subr.mxu0 0.0
    %2334 = vmatpush2.msra.mxu0 0.0
    %2335 = vmatprep.subr.mxu0 0.0
    %2336 = vmatpush2.msra.mxu0 0.0
    %2337 = vmatprep.subr.mxu0 0.0
    %2338 = vmatpush2.msra.mxu0 0.0
    %2339 = vmatprep.mubr.f32.mxu0 0.0
    %2340 = vmatmul.mubr.f32.gmra.mxu0 %v2132
    %v2341 = vpop.f32.mrf.mxu0
    %v2342 = vadd.f32 0.0, %v2341
    %v2343 = vpop.f32.mrf.mxu0
    %v2344 = vadd.f32 0.0, %v2343
    %2345 = vdwg.mxu0
    %v2346 = vadd.f32 %v2136, %v2271
    %v2347 = vadd.f32 %v2137, %v2273
    %v2348 = vadd.f32 %v2138, %v2342
    %v2349 = vadd.f32 %v2139, %v2344
    %v2350 = vxor.u32 %v2346, 2147483648
    %v2351 = vmul.f32 %v2350, 1.442695
    %v2352 = vpow.pop %v2351
    %v2353 = vadd.f32 %v2352, 1.0
    %v2354 = vrcp.pop %v2353
    %v2355 = vmul.f32 1.0, %v2354
    %v2356 = vxor.u32 %v2347, 2147483648
    %v2357 = vmul.f32 %v2356, 1.442695
    %v2358 = vpow.pop %v2357
    %v2359 = vadd.f32 %v2358, 1.0
    %v2360 = vrcp.pop %v2359
    %v2361 = vmul.f32 1.0, %v2360
    %v2362 = vtanh.pop %v2348
    %v2363 = vxor.u32 %v2349, 2147483648
    %v2364 = vmul.f32 %v2363, 1.442695
    %v2365 = vpow.pop %v2364
    %v2366 = vadd.f32 %v2365, 1.0
    %v2367 = vrcp.pop %v2366
    %v2368 = vmul.f32 1.0, %v2367
    %v2369 = vmul.f32 %v2361, %v2130
    %v2370 = vmul.f32 %v2355, %v2362
    %v2371 = vadd.f32 %v2369, %v2370
    %v2372 = vtanh.pop %v2371
    %v2373 = vmul.f32 %v2368, %v2372
    %s2374 = scalar_lea.vmem [#allocation2], 56
    %2375 = vst [vmem:[%s2374] sm:$0xff] %v2373
    %2376 = vst [vmem:[%s12] sm:$0xff] %v2373
    %2377 = vst [vmem:[%s13] sm:$0xff] %v2371
    %v2378 = vld [vmem:[#allocation2] sm:$0xff]
    %v2379 = vld [vmem:[#allocation2 + $0x8] sm:$0xff]
    %v2380 = vld [vmem:[#allocation2 + $0x10] sm:$0xff]
    %v2381 = vld [vmem:[#allocation2 + $0x18] sm:$0xff]
    %v2382 = vld [vmem:[#allocation2 + $0x20] sm:$0xff]
    %v2383 = vld [vmem:[#allocation2 + $0x28] sm:$0xff]
    %v2384 = vld [vmem:[#allocation2 + $0x30] sm:$0xff]
    %v2385 = vld [vmem:[#allocation2 + $0x38] sm:$0xff]
    %v2386 = vld [vmem:[#allocation8] sm:$0xff]
    %v2387 = vld [vmem:[#allocation8 + $0x8] sm:$0xff]
    %v2388 = vld [vmem:[#allocation8 + $0x10] sm:$0xff]
    %v2389 = vld [vmem:[#allocation8 + $0x18] sm:$0xff]
    %v2390 = vld [vmem:[#allocation8 + $0x20] sm:$0xff]
    %v2391 = vld [vmem:[#allocation8 + $0x28] sm:$0xff]
    %v2392 = vld [vmem:[#allocation8 + $0x30] sm:$0xff]
    %v2393 = vld [vmem:[#allocation8 + $0x38] sm:$0xff]
    %v2394 = vld [vmem:[#allocation8 + $0x40] sm:$0xff]
    %v2395 = vld [vmem:[#allocation8 + $0x48] sm:$0xff]
    %v2396 = vld [vmem:[#allocation8 + $0x50] sm:$0xff]
    %v2397 = vld [vmem:[#allocation8 + $0x58] sm:$0xff]
    %v2398 = vld [vmem:[#allocation8 + $0x60] sm:$0xff]
    %v2399 = vld [vmem:[#allocation8 + $0x68] sm:$0xff]
    %v2400 = vld [vmem:[#allocation8 + $0x70] sm:$0xff]
    %v2401 = vld [vmem:[#allocation8 + $0x78] sm:$0xff]
    %v2402 = vld [vmem:[#allocation8 + $0x80] sm:$0xff]
    %v2403 = vld [vmem:[#allocation8 + $0x88] sm:$0xff]
    %v2404 = vld [vmem:[#allocation8 + $0x90] sm:$0xff]
    %v2405 = vld [vmem:[#allocation8 + $0x98] sm:$0xff]
    %v2406 = vld [vmem:[#allocation8 + $0xa0] sm:$0xff]
    %v2407 = vld [vmem:[#allocation8 + $0xa8] sm:$0xff]
    %v2408 = vld [vmem:[#allocation8 + $0xb0] sm:$0xff]
    %v2409 = vld [vmem:[#allocation8 + $0xb8] sm:$0xff]
    %v2410 = vld [vmem:[#allocation8 + $0xc0] sm:$0xff]
    %v2411 = vld [vmem:[#allocation8 + $0xc8] sm:$0xff]
    %v2412 = vld [vmem:[#allocation8 + $0xd0] sm:$0xff]
    %v2413 = vld [vmem:[#allocation8 + $0xd8] sm:$0xff]
    %v2414 = vld [vmem:[#allocation8 + $0xe0] sm:$0xff]
    %v2415 = vld [vmem:[#allocation8 + $0xe8] sm:$0xff]
    %v2416 = vld [vmem:[#allocation8 + $0xf0] sm:$0xff]
    %v2417 = vld [vmem:[#allocation8 + $0xf8] sm:$0xff]
    %v2418 = vld [vmem:[#allocation8 + $0x100] sm:$0xff]
    %v2419 = vld [vmem:[#allocation8 + $0x108] sm:$0xff]
    %v2420 = vld [vmem:[#allocation8 + $0x110] sm:$0xff]
    %v2421 = vld [vmem:[#allocation8 + $0x118] sm:$0xff]
    %v2422 = vld [vmem:[#allocation8 + $0x120] sm:$0xff]
    %v2423 = vld [vmem:[#allocation8 + $0x128] sm:$0xff]
    %v2424 = vld [vmem:[#allocation8 + $0x130] sm:$0xff]
    %v2425 = vld [vmem:[#allocation8 + $0x138] sm:$0xff]
    %v2426 = vld [vmem:[#allocation8 + $0x140] sm:$0xff]
    %v2427 = vld [vmem:[#allocation8 + $0x148] sm:$0xff]
    %v2428 = vld [vmem:[#allocation8 + $0x150] sm:$0xff]
    %v2429 = vld [vmem:[#allocation8 + $0x158] sm:$0xff]
    %v2430 = vld [vmem:[#allocation8 + $0x160] sm:$0xff]
    %v2431 = vld [vmem:[#allocation8 + $0x168] sm:$0xff]
    %v2432 = vld [vmem:[#allocation8 + $0x170] sm:$0xff]
    %v2433 = vld [vmem:[#allocation8 + $0x178] sm:$0xff]
    %v2434 = vld [vmem:[#allocation8 + $0x180] sm:$0xff]
    %v2435 = vld [vmem:[#allocation8 + $0x188] sm:$0xff]
    %v2436 = vld [vmem:[#allocation8 + $0x190] sm:$0xff]
    %v2437 = vld [vmem:[#allocation8 + $0x198] sm:$0xff]
    %v2438 = vld [vmem:[#allocation8 + $0x1a0] sm:$0xff]
    %v2439 = vld [vmem:[#allocation8 + $0x1a8] sm:$0xff]
    %v2440 = vld [vmem:[#allocation8 + $0x1b0] sm:$0xff]
    %v2441 = vld [vmem:[#allocation8 + $0x1b8] sm:$0xff]
    %v2442 = vld [vmem:[#allocation8 + $0x1c0] sm:$0xff]
    %v2443 = vld [vmem:[#allocation8 + $0x1c8] sm:$0xff]
    %v2444 = vld [vmem:[#allocation8 + $0x1d0] sm:$0xff]
    %v2445 = vld [vmem:[#allocation8 + $0x1d8] sm:$0xff]
    %v2446 = vld [vmem:[#allocation8 + $0x1e0] sm:$0xff]
    %v2447 = vld [vmem:[#allocation8 + $0x1e8] sm:$0xff]
    %v2448 = vld [vmem:[#allocation8 + $0x1f0] sm:$0xff]
    %v2449 = vld [vmem:[#allocation8 + $0x1f8] sm:$0xff]
    %v2450 = vld [vmem:[%s8] sm:$0xf]
    %v2452 = vlaneseq
    %v2453 = vshrl.u32 %v2452, 7
    %v2454 = vsub.s32 0, %v2453
    %v2455 = vrot.slane %v2450, %v2454
    %v2456 = vlaneseq
    %v2457 = vshrl.u32 %v2456, 7
    %v2458 = vsub.s32 1, %v2457
    %v2459 = vrot.slane %v2450, %v2458
    %v2460 = vlaneseq
    %v2461 = vshrl.u32 %v2460, 7
    %v2462 = vsub.s32 2, %v2461
    %v2463 = vrot.slane %v2450, %v2462
    %v2464 = vlaneseq
    %v2465 = vshrl.u32 %v2464, 7
    %v2466 = vsub.s32 3, %v2465
    %v2467 = vrot.slane %v2450, %v2466
    %2472 = vmatprep.subr.mxu0 %v2447
    %2473 = vmatpush1.msra.mxu0 %v2446
    %2474 = vmatprep.subr.mxu0 %v2443
    %2475 = vmatpush1.msra.mxu0 %v2442
    %2476 = vmatprep.subr.mxu0 %v2439
    %2477 = vmatpush1.msra.mxu0 %v2438
    %2478 = vmatprep.subr.mxu0 %v2435
    %2479 = vmatpush1.msra.mxu0 %v2434
    %2480 = vmatprep.subr.mxu0 %v2431
    %2481 = vmatpush1.msra.mxu0 %v2430
    %2482 = vmatprep.subr.mxu0 %v2427
    %2483 = vmatpush1.msra.mxu0 %v2426
    %2484 = vmatprep.subr.mxu0 %v2423
    %2485 = vmatpush1.msra.mxu0 %v2422
    %2486 = vmatprep.subr.mxu0 %v2419
    %2487 = vmatpush1.msra.mxu0 %v2418
    %2488 = vmatprep.subr.mxu0 %v2415
    %2489 = vmatpush1.msra.mxu0 %v2414
    %2490 = vmatprep.subr.mxu0 %v2411
    %2491 = vmatpush1.msra.mxu0 %v2410
    %2492 = vmatprep.subr.mxu0 %v2407
    %2493 = vmatpush1.msra.mxu0 %v2406
    %2494 = vmatprep.subr.mxu0 %v2403
    %2495 = vmatpush1.msra.mxu0 %v2402
    %2496 = vmatprep.subr.mxu0 %v2399
    %2497 = vmatpush1.msra.mxu0 %v2398
    %2498 = vmatprep.subr.mxu0 %v2395
    %2499 = vmatpush1.msra.mxu0 %v2394
    %2500 = vmatprep.subr.mxu0 %v2391
    %2501 = vmatpush1.msra.mxu0 %v2390
    %2502 = vmatprep.subr.mxu0 %v2387
    %2503 = vmatpush1.msra.mxu0 %v2386
    %2504 = vmatprep.subr.mxu0 0.0
    %2505 = vmatpush2.msra.mxu0 0.0
    %2506 = vmatprep.subr.mxu0 0.0
    %2507 = vmatpush2.msra.mxu0 0.0
    %2508 = vmatprep.subr.mxu0 0.0
    %2509 = vmatpush2.msra.mxu0 0.0
    %2510 = vmatprep.subr.mxu0 0.0
    %2511 = vmatpush2.msra.mxu0 0.0
    %2512 = vmatprep.subr.mxu0 0.0
    %2513 = vmatpush2.msra.mxu0 0.0
    %2514 = vmatprep.subr.mxu0 0.0
    %2515 = vmatpush2.msra.mxu0 0.0
    %2516 = vmatprep.subr.mxu0 0.0
    %2517 = vmatpush2.msra.mxu0 0.0
    %2518 = vmatprep.subr.mxu0 0.0
    %2519 = vmatpush2.msra.mxu0 0.0
    %2520 = vmatprep.subr.mxu0 0.0
    %2521 = vmatpush2.msra.mxu0 0.0
    %2522 = vmatprep.subr.mxu0 0.0
    %2523 = vmatpush2.msra.mxu0 0.0
    %2524 = vmatprep.subr.mxu0 0.0
    %2525 = vmatpush2.msra.mxu0 0.0
    %2526 = vmatprep.subr.mxu0 0.0
    %2527 = vmatpush2.msra.mxu0 0.0
    %2528 = vmatprep.subr.mxu0 0.0
    %2529 = vmatpush2.msra.mxu0 0.0
    %2530 = vmatprep.subr.mxu0 0.0
    %2531 = vmatpush2.msra.mxu0 0.0
    %2532 = vmatprep.subr.mxu0 0.0
    %2533 = vmatpush2.msra.mxu0 0.0
    %2534 = vmatprep.subr.mxu0 0.0
    %2535 = vmatpush2.msra.mxu0 0.0
    %2536 = vmatprep.mubr.f32.mxu0 0.0
    %2537 = vmatmul.mubr.f32.gmra.mxu0 %v2378
    %v2538 = vpop.f32.mrf.mxu0
    %v2539 = vadd.f32 %v2455, %v2538
    %v2540 = vpop.f32.mrf.mxu0
    %v2541 = vadd.f32 %v2459, %v2540
    %2542 = vmatprep.mubr.f32.mxu0 0.0
    %2543 = vmatmul.mubr.f32.gmra.mxu0 %v2379
    %v2544 = vpop.f32.mrf.mxu0
    %v2545 = vadd.f32 %v2455, %v2544
    %v2546 = vpop.f32.mrf.mxu0
    %v2547 = vadd.f32 %v2459, %v2546
    %2548 = vmatprep.mubr.f32.mxu0 0.0
    %2549 = vmatmul.mubr.f32.gmra.mxu0 %v2380
    %v2550 = vpop.f32.mrf.mxu0
    %v2551 = vadd.f32 %v2455, %v2550
    %v2552 = vpop.f32.mrf.mxu0
    %v2553 = vadd.f32 %v2459, %v2552
    %2554 = vmatprep.mubr.f32.mxu0 0.0
    %2555 = vmatmul.mubr.f32.gmra.mxu0 %v2381
    %v2556 = vpop.f32.mrf.mxu0
    %v2557 = vadd.f32 %v2455, %v2556
    %v2558 = vpop.f32.mrf.mxu0
    %v2559 = vadd.f32 %v2459, %v2558
    %2560 = vmatprep.mubr.f32.mxu0 0.0
    %2561 = vmatmul.mubr.f32.gmra.mxu0 %v2382
    %v2562 = vpop.f32.mrf.mxu0
    %v2563 = vadd.f32 %v2455, %v2562
    %v2564 = vpop.f32.mrf.mxu0
    %v2565 = vadd.f32 %v2459, %v2564
    %2566 = vmatprep.mubr.f32.mxu0 0.0
    %2567 = vmatmul.mubr.f32.gmra.mxu0 %v2383
    %v2568 = vpop.f32.mrf.mxu0
    %v2569 = vadd.f32 %v2455, %v2568
    %v2570 = vpop.f32.mrf.mxu0
    %v2571 = vadd.f32 %v2459, %v2570
    %2572 = vmatprep.mubr.f32.mxu0 0.0
    %2573 = vmatmul.mubr.f32.gmra.mxu0 %v2384
    %v2574 = vpop.f32.mrf.mxu0
    %v2575 = vadd.f32 %v2455, %v2574
    %v2576 = vpop.f32.mrf.mxu0
    %v2577 = vadd.f32 %v2459, %v2576
    %2578 = vmatprep.mubr.f32.mxu0 0.0
    %2579 = vmatmul.mubr.f32.gmra.mxu0 %v2385
    %v2580 = vpop.f32.mrf.mxu0
    %v2581 = vadd.f32 %v2455, %v2580
    %v2582 = vpop.f32.mrf.mxu0
    %v2583 = vadd.f32 %v2459, %v2582
    %2584 = vdwg.mxu0
    %2585 = vmatprep.subr.mxu0 %v2449
    %2586 = vmatpush1.msra.mxu0 %v2448
    %2587 = vmatprep.subr.mxu0 %v2445
    %2588 = vmatpush1.msra.mxu0 %v2444
    %2589 = vmatprep.subr.mxu0 %v2441
    %2590 = vmatpush1.msra.mxu0 %v2440
    %2591 = vmatprep.subr.mxu0 %v2437
    %2592 = vmatpush1.msra.mxu0 %v2436
    %2593 = vmatprep.subr.mxu0 %v2433
    %2594 = vmatpush1.msra.mxu0 %v2432
    %2595 = vmatprep.subr.mxu0 %v2429
    %2596 = vmatpush1.msra.mxu0 %v2428
    %2597 = vmatprep.subr.mxu0 %v2425
    %2598 = vmatpush1.msra.mxu0 %v2424
    %2599 = vmatprep.subr.mxu0 %v2421
    %2600 = vmatpush1.msra.mxu0 %v2420
    %2601 = vmatprep.subr.mxu0 %v2417
    %2602 = vmatpush1.msra.mxu0 %v2416
    %2603 = vmatprep.subr.mxu0 %v2413
    %2604 = vmatpush1.msra.mxu0 %v2412
    %2605 = vmatprep.subr.mxu0 %v2409
    %2606 = vmatpush1.msra.mxu0 %v2408
    %2607 = vmatprep.subr.mxu0 %v2405
    %2608 = vmatpush1.msra.mxu0 %v2404
    %2609 = vmatprep.subr.mxu0 %v2401
    %2610 = vmatpush1.msra.mxu0 %v2400
    %2611 = vmatprep.subr.mxu0 %v2397
    %2612 = vmatpush1.msra.mxu0 %v2396
    %2613 = vmatprep.subr.mxu0 %v2393
    %2614 = vmatpush1.msra.mxu0 %v2392
    %2615 = vmatprep.subr.mxu0 %v2389
    %2616 = vmatpush1.msra.mxu0 %v2388
    %2617 = vmatprep.subr.mxu0 0.0
    %2618 = vmatpush2.msra.mxu0 0.0
    %2619 = vmatprep.subr.mxu0 0.0
    %2620 = vmatpush2.msra.mxu0 0.0
    %2621 = vmatprep.subr.mxu0 0.0
    %2622 = vmatpush2.msra.mxu0 0.0
    %2623 = vmatprep.subr.mxu0 0.0
    %2624 = vmatpush2.msra.mxu0 0.0
    %2625 = vmatprep.subr.mxu0 0.0
    %2626 = vmatpush2.msra.mxu0 0.0
    %2627 = vmatprep.subr.mxu0 0.0
    %2628 = vmatpush2.msra.mxu0 0.0
    %2629 = vmatprep.subr.mxu0 0.0
    %2630 = vmatpush2.msra.mxu0 0.0
    %2631 = vmatprep.subr.mxu0 0.0
    %2632 = vmatpush2.msra.mxu0 0.0
    %2633 = vmatprep.subr.mxu0 0.0
    %2634 = vmatpush2.msra.mxu0 0.0
    %2635 = vmatprep.subr.mxu0 0.0
    %2636 = vmatpush2.msra.mxu0 0.0
    %2637 = vmatprep.subr.mxu0 0.0
    %2638 = vmatpush2.msra.mxu0 0.0
    %2639 = vmatprep.subr.mxu0 0.0
    %2640 = vmatpush2.msra.mxu0 0.0
    %2641 = vmatprep.subr.mxu0 0.0
    %2642 = vmatpush2.msra.mxu0 0.0
    %2643 = vmatprep.subr.mxu0 0.0
    %2644 = vmatpush2.msra.mxu0 0.0
    %2645 = vmatprep.subr.mxu0 0.0
    %2646 = vmatpush2.msra.mxu0 0.0
    %2647 = vmatprep.subr.mxu0 0.0
    %2648 = vmatpush2.msra.mxu0 0.0
    %2649 = vmatprep.mubr.f32.mxu0 0.0
    %2650 = vmatmul.mubr.f32.gmra.mxu0 %v2378
    %v2651 = vpop.f32.mrf.mxu0
    %v2652 = vadd.f32 %v2463, %v2651
    %v2653 = vpop.f32.mrf.mxu0
    %v2654 = vadd.f32 %v2467, %v2653
    %2655 = vmatprep.mubr.f32.mxu0 0.0
    %2656 = vmatmul.mubr.f32.gmra.mxu0 %v2379
    %v2657 = vpop.f32.mrf.mxu0
    %v2658 = vadd.f32 %v2463, %v2657
    %v2659 = vpop.f32.mrf.mxu0
    %v2660 = vadd.f32 %v2467, %v2659
    %2661 = vmatprep.mubr.f32.mxu0 0.0
    %2662 = vmatmul.mubr.f32.gmra.mxu0 %v2380
    %v2663 = vpop.f32.mrf.mxu0
    %v2664 = vadd.f32 %v2463, %v2663
    %v2665 = vpop.f32.mrf.mxu0
    %v2666 = vadd.f32 %v2467, %v2665
    %2667 = vmatprep.mubr.f32.mxu0 0.0
    %2668 = vmatmul.mubr.f32.gmra.mxu0 %v2381
    %v2669 = vpop.f32.mrf.mxu0
    %v2670 = vadd.f32 %v2463, %v2669
    %v2671 = vpop.f32.mrf.mxu0
    %v2672 = vadd.f32 %v2467, %v2671
    %2673 = vmatprep.mubr.f32.mxu0 0.0
    %2674 = vmatmul.mubr.f32.gmra.mxu0 %v2382
    %v2675 = vpop.f32.mrf.mxu0
    %v2676 = vadd.f32 %v2463, %v2675
    %v2677 = vpop.f32.mrf.mxu0
    %v2678 = vadd.f32 %v2467, %v2677
    %2679 = vmatprep.mubr.f32.mxu0 0.0
    %2680 = vmatmul.mubr.f32.gmra.mxu0 %v2383
    %v2681 = vpop.f32.mrf.mxu0
    %v2682 = vadd.f32 %v2463, %v2681
    %v2683 = vpop.f32.mrf.mxu0
    %v2684 = vadd.f32 %v2467, %v2683
    %2685 = vmatprep.mubr.f32.mxu0 0.0
    %2686 = vmatmul.mubr.f32.gmra.mxu0 %v2384
    %v2687 = vpop.f32.mrf.mxu0
    %v2688 = vadd.f32 %v2463, %v2687
    %v2689 = vpop.f32.mrf.mxu0
    %v2690 = vadd.f32 %v2467, %v2689
    %2691 = vmatprep.mubr.f32.mxu0 0.0
    %2692 = vmatmul.mubr.f32.gmra.mxu0 %v2385
    %v2693 = vpop.f32.mrf.mxu0
    %v2694 = vadd.f32 %v2463, %v2693
    %v2695 = vpop.f32.mrf.mxu0
    %v2696 = vadd.f32 %v2467, %v2695
    %2697 = vdwg.mxu0
    %2698 = vst [vmem:[#allocation3] sm:$0xff] %v2539
    %2699 = vst [vmem:[#allocation3 + $0x8] sm:$0xff] %v2541
    %2700 = vst [vmem:[#allocation3 + $0x10] sm:$0xff] %v2652
    %2701 = vst [vmem:[#allocation3 + $0x18] sm:$0xff] %v2654
    %2702 = vst [vmem:[#allocation3 + $0x20] sm:$0xff] %v2545
    %2703 = vst [vmem:[#allocation3 + $0x28] sm:$0xff] %v2547
    %2704 = vst [vmem:[#allocation3 + $0x30] sm:$0xff] %v2658
    %2705 = vst [vmem:[#allocation3 + $0x38] sm:$0xff] %v2660
    %2706 = vst [vmem:[#allocation3 + $0x40] sm:$0xff] %v2551
    %2707 = vst [vmem:[#allocation3 + $0x48] sm:$0xff] %v2553
    %2708 = vst [vmem:[#allocation3 + $0x50] sm:$0xff] %v2664
    %2709 = vst [vmem:[#allocation3 + $0x58] sm:$0xff] %v2666
    %2710 = vst [vmem:[#allocation3 + $0x60] sm:$0xff] %v2557
    %2711 = vst [vmem:[#allocation3 + $0x68] sm:$0xff] %v2559
    %2712 = vst [vmem:[#allocation3 + $0x70] sm:$0xff] %v2670
    %2713 = vst [vmem:[#allocation3 + $0x78] sm:$0xff] %v2672
    %2714 = vst [vmem:[#allocation3 + $0x80] sm:$0xff] %v2563
    %2715 = vst [vmem:[#allocation3 + $0x88] sm:$0xff] %v2565
    %2716 = vst [vmem:[#allocation3 + $0x90] sm:$0xff] %v2676
    %2717 = vst [vmem:[#allocation3 + $0x98] sm:$0xff] %v2678
    %2718 = vst [vmem:[#allocation3 + $0xa0] sm:$0xff] %v2569
    %2719 = vst [vmem:[#allocation3 + $0xa8] sm:$0xff] %v2571
    %2720 = vst [vmem:[#allocation3 + $0xb0] sm:$0xff] %v2682
    %2721 = vst [vmem:[#allocation3 + $0xb8] sm:$0xff] %v2684
    %2722 = vst [vmem:[#allocation3 + $0xc0] sm:$0xff] %v2575
    %2723 = vst [vmem:[#allocation3 + $0xc8] sm:$0xff] %v2577
    %2724 = vst [vmem:[#allocation3 + $0xd0] sm:$0xff] %v2688
    %2725 = vst [vmem:[#allocation3 + $0xd8] sm:$0xff] %v2690
    %2726 = vst [vmem:[#allocation3 + $0xe0] sm:$0xff] %v2581
    %2727 = vst [vmem:[#allocation3 + $0xe8] sm:$0xff] %v2583
    %2728 = vst [vmem:[#allocation3 + $0xf0] sm:$0xff] %v2694
    %2729 = vst [vmem:[#allocation3 + $0xf8] sm:$0xff] %v2696
    %s2730 = scalar_lea.vmem %s1, 8
    %v2731 = vld [vmem:[%s2730] sm:$0xff]
    %s2732 = scalar_lea.vmem %s2, 8
    %v2733 = vld [vmem:[%s2732] sm:$0xff]
    %v2734 = vld [vmem:[#allocation3] sm:$0xff]
    %v2735 = vld [vmem:[#allocation3 + $0x8] sm:$0xff]
    %v2736 = vld [vmem:[#allocation3 + $0x10] sm:$0xff]
    %v2737 = vld [vmem:[#allocation3 + $0x18] sm:$0xff]
    %v2738 = vld [vmem:[#allocation9] sm:$0xff]
    %v2739 = vld [vmem:[#allocation9 + $0x8] sm:$0xff]
    %v2740 = vld [vmem:[#allocation9 + $0x10] sm:$0xff]
    %v2741 = vld [vmem:[#allocation9 + $0x18] sm:$0xff]
    %v2742 = vld [vmem:[#allocation9 + $0x20] sm:$0xff]
    %v2743 = vld [vmem:[#allocation9 + $0x28] sm:$0xff]
    %v2744 = vld [vmem:[#allocation9 + $0x30] sm:$0xff]
    %v2745 = vld [vmem:[#allocation9 + $0x38] sm:$0xff]
    %v2746 = vld [vmem:[#allocation9 + $0x40] sm:$0xff]
    %v2747 = vld [vmem:[#allocation9 + $0x48] sm:$0xff]
    %v2748 = vld [vmem:[#allocation9 + $0x50] sm:$0xff]
    %v2749 = vld [vmem:[#allocation9 + $0x58] sm:$0xff]
    %v2750 = vld [vmem:[#allocation9 + $0x60] sm:$0xff]
    %v2751 = vld [vmem:[#allocation9 + $0x68] sm:$0xff]
    %v2752 = vld [vmem:[#allocation9 + $0x70] sm:$0xff]
    %v2753 = vld [vmem:[#allocation9 + $0x78] sm:$0xff]
    %v2754 = vld [vmem:[#allocation9 + $0x80] sm:$0xff]
    %v2755 = vld [vmem:[#allocation9 + $0x88] sm:$0xff]
    %v2756 = vld [vmem:[#allocation9 + $0x90] sm:$0xff]
    %v2757 = vld [vmem:[#allocation9 + $0x98] sm:$0xff]
    %v2758 = vld [vmem:[#allocation9 + $0xa0] sm:$0xff]
    %v2759 = vld [vmem:[#allocation9 + $0xa8] sm:$0xff]
    %v2760 = vld [vmem:[#allocation9 + $0xb0] sm:$0xff]
    %v2761 = vld [vmem:[#allocation9 + $0xb8] sm:$0xff]
    %v2762 = vld [vmem:[#allocation9 + $0xc0] sm:$0xff]
    %v2763 = vld [vmem:[#allocation9 + $0xc8] sm:$0xff]
    %v2764 = vld [vmem:[#allocation9 + $0xd0] sm:$0xff]
    %v2765 = vld [vmem:[#allocation9 + $0xd8] sm:$0xff]
    %v2766 = vld [vmem:[#allocation9 + $0xe0] sm:$0xff]
    %v2767 = vld [vmem:[#allocation9 + $0xe8] sm:$0xff]
    %v2768 = vld [vmem:[#allocation9 + $0xf0] sm:$0xff]
    %v2769 = vld [vmem:[#allocation9 + $0xf8] sm:$0xff]
    %v2770 = vld [vmem:[#allocation9 + $0x100] sm:$0xff]
    %v2771 = vld [vmem:[#allocation9 + $0x108] sm:$0xff]
    %v2772 = vld [vmem:[#allocation9 + $0x110] sm:$0xff]
    %v2773 = vld [vmem:[#allocation9 + $0x118] sm:$0xff]
    %v2774 = vld [vmem:[#allocation9 + $0x120] sm:$0xff]
    %v2775 = vld [vmem:[#allocation9 + $0x128] sm:$0xff]
    %v2776 = vld [vmem:[#allocation9 + $0x130] sm:$0xff]
    %v2777 = vld [vmem:[#allocation9 + $0x138] sm:$0xff]
    %v2778 = vld [vmem:[#allocation9 + $0x140] sm:$0xff]
    %v2779 = vld [vmem:[#allocation9 + $0x148] sm:$0xff]
    %v2780 = vld [vmem:[#allocation9 + $0x150] sm:$0xff]
    %v2781 = vld [vmem:[#allocation9 + $0x158] sm:$0xff]
    %v2782 = vld [vmem:[#allocation9 + $0x160] sm:$0xff]
    %v2783 = vld [vmem:[#allocation9 + $0x168] sm:$0xff]
    %v2784 = vld [vmem:[#allocation9 + $0x170] sm:$0xff]
    %v2785 = vld [vmem:[#allocation9 + $0x178] sm:$0xff]
    %v2786 = vld [vmem:[#allocation9 + $0x180] sm:$0xff]
    %v2787 = vld [vmem:[#allocation9 + $0x188] sm:$0xff]
    %v2788 = vld [vmem:[#allocation9 + $0x190] sm:$0xff]
    %v2789 = vld [vmem:[#allocation9 + $0x198] sm:$0xff]
    %v2790 = vld [vmem:[#allocation9 + $0x1a0] sm:$0xff]
    %v2791 = vld [vmem:[#allocation9 + $0x1a8] sm:$0xff]
    %v2792 = vld [vmem:[#allocation9 + $0x1b0] sm:$0xff]
    %v2793 = vld [vmem:[#allocation9 + $0x1b8] sm:$0xff]
    %v2794 = vld [vmem:[#allocation9 + $0x1c0] sm:$0xff]
    %v2795 = vld [vmem:[#allocation9 + $0x1c8] sm:$0xff]
    %v2796 = vld [vmem:[#allocation9 + $0x1d0] sm:$0xff]
    %v2797 = vld [vmem:[#allocation9 + $0x1d8] sm:$0xff]
    %v2798 = vld [vmem:[#allocation9 + $0x1e0] sm:$0xff]
    %v2799 = vld [vmem:[#allocation9 + $0x1e8] sm:$0xff]
    %v2800 = vld [vmem:[#allocation9 + $0x1f0] sm:$0xff]
    %v2801 = vld [vmem:[#allocation9 + $0x1f8] sm:$0xff]
    %2802 = vmatprep.subr.mxu0 %v2799
    %2803 = vmatpush1.msra.mxu0 %v2798
    %2804 = vmatprep.subr.mxu0 %v2795
    %2805 = vmatpush1.msra.mxu0 %v2794
    %2806 = vmatprep.subr.mxu0 %v2791
    %2807 = vmatpush1.msra.mxu0 %v2790
    %2808 = vmatprep.subr.mxu0 %v2787
    %2809 = vmatpush1.msra.mxu0 %v2786
    %2810 = vmatprep.subr.mxu0 %v2783
    %2811 = vmatpush1.msra.mxu0 %v2782
    %2812 = vmatprep.subr.mxu0 %v2779
    %2813 = vmatpush1.msra.mxu0 %v2778
    %2814 = vmatprep.subr.mxu0 %v2775
    %2815 = vmatpush1.msra.mxu0 %v2774
    %2816 = vmatprep.subr.mxu0 %v2771
    %2817 = vmatpush1.msra.mxu0 %v2770
    %2818 = vmatprep.subr.mxu0 %v2767
    %2819 = vmatpush1.msra.mxu0 %v2766
    %2820 = vmatprep.subr.mxu0 %v2763
    %2821 = vmatpush1.msra.mxu0 %v2762
    %2822 = vmatprep.subr.mxu0 %v2759
    %2823 = vmatpush1.msra.mxu0 %v2758
    %2824 = vmatprep.subr.mxu0 %v2755
    %2825 = vmatpush1.msra.mxu0 %v2754
    %2826 = vmatprep.subr.mxu0 %v2751
    %2827 = vmatpush1.msra.mxu0 %v2750
    %2828 = vmatprep.subr.mxu0 %v2747
    %2829 = vmatpush1.msra.mxu0 %v2746
    %2830 = vmatprep.subr.mxu0 %v2743
    %2831 = vmatpush1.msra.mxu0 %v2742
    %2832 = vmatprep.subr.mxu0 %v2739
    %2833 = vmatpush1.msra.mxu0 %v2738
    %2834 = vmatprep.subr.mxu0 0.0
    %2835 = vmatpush2.msra.mxu0 0.0
    %2836 = vmatprep.subr.mxu0 0.0
    %2837 = vmatpush2.msra.mxu0 0.0
    %2838 = vmatprep.subr.mxu0 0.0
    %2839 = vmatpush2.msra.mxu0 0.0
    %2840 = vmatprep.subr.mxu0 0.0
    %2841 = vmatpush2.msra.mxu0 0.0
    %2842 = vmatprep.subr.mxu0 0.0
    %2843 = vmatpush2.msra.mxu0 0.0
    %2844 = vmatprep.subr.mxu0 0.0
    %2845 = vmatpush2.msra.mxu0 0.0
    %2846 = vmatprep.subr.mxu0 0.0
    %2847 = vmatpush2.msra.mxu0 0.0
    %2848 = vmatprep.subr.mxu0 0.0
    %2849 = vmatpush2.msra.mxu0 0.0
    %2850 = vmatprep.subr.mxu0 0.0
    %2851 = vmatpush2.msra.mxu0 0.0
    %2852 = vmatprep.subr.mxu0 0.0
    %2853 = vmatpush2.msra.mxu0 0.0
    %2854 = vmatprep.subr.mxu0 0.0
    %2855 = vmatpush2.msra.mxu0 0.0
    %2856 = vmatprep.subr.mxu0 0.0
    %2857 = vmatpush2.msra.mxu0 0.0
    %2858 = vmatprep.subr.mxu0 0.0
    %2859 = vmatpush2.msra.mxu0 0.0
    %2860 = vmatprep.subr.mxu0 0.0
    %2861 = vmatpush2.msra.mxu0 0.0
    %2862 = vmatprep.subr.mxu0 0.0
    %2863 = vmatpush2.msra.mxu0 0.0
    %2864 = vmatprep.subr.mxu0 0.0
    %2865 = vmatpush2.msra.mxu0 0.0
    %2866 = vmatprep.mubr.f32.mxu0 0.0
    %2867 = vmatmul.mubr.f32.gmra.mxu0 %v2731
    %v2868 = vpop.f32.mrf.mxu0
    %v2869 = vadd.f32 0.0, %v2868
    %v2870 = vpop.f32.mrf.mxu0
    %v2871 = vadd.f32 0.0, %v2870
    %2872 = vdwg.mxu0
    %2873 = vmatprep.subr.mxu0 %v2801
    %2874 = vmatpush1.msra.mxu0 %v2800
    %2875 = vmatprep.subr.mxu0 %v2797
    %2876 = vmatpush1.msra.mxu0 %v2796
    %2877 = vmatprep.subr.mxu0 %v2793
    %2878 = vmatpush1.msra.mxu0 %v2792
    %2879 = vmatprep.subr.mxu0 %v2789
    %2880 = vmatpush1.msra.mxu0 %v2788
    %2881 = vmatprep.subr.mxu0 %v2785
    %2882 = vmatpush1.msra.mxu0 %v2784
    %2883 = vmatprep.subr.mxu0 %v2781
    %2884 = vmatpush1.msra.mxu0 %v2780
    %2885 = vmatprep.subr.mxu0 %v2777
    %2886 = vmatpush1.msra.mxu0 %v2776
    %2887 = vmatprep.subr.mxu0 %v2773
    %2888 = vmatpush1.msra.mxu0 %v2772
    %2889 = vmatprep.subr.mxu0 %v2769
    %2890 = vmatpush1.msra.mxu0 %v2768
    %2891 = vmatprep.subr.mxu0 %v2765
    %2892 = vmatpush1.msra.mxu0 %v2764
    %2893 = vmatprep.subr.mxu0 %v2761
    %2894 = vmatpush1.msra.mxu0 %v2760
    %2895 = vmatprep.subr.mxu0 %v2757
    %2896 = vmatpush1.msra.mxu0 %v2756
    %2897 = vmatprep.subr.mxu0 %v2753
    %2898 = vmatpush1.msra.mxu0 %v2752
    %2899 = vmatprep.subr.mxu0 %v2749
    %2900 = vmatpush1.msra.mxu0 %v2748
    %2901 = vmatprep.subr.mxu0 %v2745
    %2902 = vmatpush1.msra.mxu0 %v2744
    %2903 = vmatprep.subr.mxu0 %v2741
    %2904 = vmatpush1.msra.mxu0 %v2740
    %2905 = vmatprep.subr.mxu0 0.0
    %2906 = vmatpush2.msra.mxu0 0.0
    %2907 = vmatprep.subr.mxu0 0.0
    %2908 = vmatpush2.msra.mxu0 0.0
    %2909 = vmatprep.subr.mxu0 0.0
    %2910 = vmatpush2.msra.mxu0 0.0
    %2911 = vmatprep.subr.mxu0 0.0
    %2912 = vmatpush2.msra.mxu0 0.0
    %2913 = vmatprep.subr.mxu0 0.0
    %2914 = vmatpush2.msra.mxu0 0.0
    %2915 = vmatprep.subr.mxu0 0.0
    %2916 = vmatpush2.msra.mxu0 0.0
    %2917 = vmatprep.subr.mxu0 0.0
    %2918 = vmatpush2.msra.mxu0 0.0
    %2919 = vmatprep.subr.mxu0 0.0
    %2920 = vmatpush2.msra.mxu0 0.0
    %2921 = vmatprep.subr.mxu0 0.0
    %2922 = vmatpush2.msra.mxu0 0.0
    %2923 = vmatprep.subr.mxu0 0.0
    %2924 = vmatpush2.msra.mxu0 0.0
    %2925 = vmatprep.subr.mxu0 0.0
    %2926 = vmatpush2.msra.mxu0 0.0
    %2927 = vmatprep.subr.mxu0 0.0
    %2928 = vmatpush2.msra.mxu0 0.0
    %2929 = vmatprep.subr.mxu0 0.0
    %2930 = vmatpush2.msra.mxu0 0.0
    %2931 = vmatprep.subr.mxu0 0.0
    %2932 = vmatpush2.msra.mxu0 0.0
    %2933 = vmatprep.subr.mxu0 0.0
    %2934 = vmatpush2.msra.mxu0 0.0
    %2935 = vmatprep.subr.mxu0 0.0
    %2936 = vmatpush2.msra.mxu0 0.0
    %2937 = vmatprep.mubr.f32.mxu0 0.0
    %2938 = vmatmul.mubr.f32.gmra.mxu0 %v2731
    %v2939 = vpop.f32.mrf.mxu0
    %v2940 = vadd.f32 0.0, %v2939
    %v2941 = vpop.f32.mrf.mxu0
    %v2942 = vadd.f32 0.0, %v2941
    %2943 = vdwg.mxu0
    %v2944 = vadd.f32 %v2734, %v2869
    %v2945 = vadd.f32 %v2735, %v2871
    %v2946 = vadd.f32 %v2736, %v2940
    %v2947 = vadd.f32 %v2737, %v2942
    %v2948 = vxor.u32 %v2944, 2147483648
    %v2949 = vmul.f32 %v2948, 1.442695
    %v2950 = vpow.pop %v2949
    %v2951 = vadd.f32 %v2950, 1.0
    %v2952 = vrcp.pop %v2951
    %v2953 = vmul.f32 1.0, %v2952
    %v2954 = vxor.u32 %v2945, 2147483648
    %v2955 = vmul.f32 %v2954, 1.442695
    %v2956 = vpow.pop %v2955
    %v2957 = vadd.f32 %v2956, 1.0
    %v2958 = vrcp.pop %v2957
    %v2959 = vmul.f32 1.0, %v2958
    %v2960 = vtanh.pop %v2946
    %v2961 = vxor.u32 %v2947, 2147483648
    %v2962 = vmul.f32 %v2961, 1.442695
    %v2963 = vpow.pop %v2962
    %v2964 = vadd.f32 %v2963, 1.0
    %v2965 = vrcp.pop %v2964
    %v2966 = vmul.f32 1.0, %v2965
    %v2967 = vmul.f32 %v2959, %v2733
    %v2968 = vmul.f32 %v2953, %v2960
    %v2969 = vadd.f32 %v2967, %v2968
    %v2970 = vtanh.pop %v2969
    %v2971 = vmul.f32 %v2966, %v2970
    %v2972 = vld [vmem:[%s689] sm:$0xff]
    %v2973 = vld [vmem:[%s689 + $0x8] sm:$0xff]
    %v2974 = vld [vmem:[%s689 + $0x10] sm:$0xff]
    %v2975 = vld [vmem:[%s689 + $0x18] sm:$0xff]
    %2976 = vmatprep.subr.mxu0 %v2799
    %2977 = vmatpush1.msra.mxu0 %v2798
    %2978 = vmatprep.subr.mxu0 %v2795
    %2979 = vmatpush1.msra.mxu0 %v2794
    %2980 = vmatprep.subr.mxu0 %v2791
    %2981 = vmatpush1.msra.mxu0 %v2790
    %2982 = vmatprep.subr.mxu0 %v2787
    %2983 = vmatpush1.msra.mxu0 %v2786
    %2984 = vmatprep.subr.mxu0 %v2783
    %2985 = vmatpush1.msra.mxu0 %v2782
    %2986 = vmatprep.subr.mxu0 %v2779
    %2987 = vmatpush1.msra.mxu0 %v2778
    %2988 = vmatprep.subr.mxu0 %v2775
    %2989 = vmatpush1.msra.mxu0 %v2774
    %2990 = vmatprep.subr.mxu0 %v2771
    %2991 = vmatpush1.msra.mxu0 %v2770
    %2992 = vmatprep.subr.mxu0 %v2767
    %2993 = vmatpush1.msra.mxu0 %v2766
    %2994 = vmatprep.subr.mxu0 %v2763
    %2995 = vmatpush1.msra.mxu0 %v2762
    %2996 = vmatprep.subr.mxu0 %v2759
    %2997 = vmatpush1.msra.mxu0 %v2758
    %2998 = vmatprep.subr.mxu0 %v2755
    %2999 = vmatpush1.msra.mxu0 %v2754
    %3000 = vmatprep.subr.mxu0 %v2751
    %3001 = vmatpush1.msra.mxu0 %v2750
    %3002 = vmatprep.subr.mxu0 %v2747
    %3003 = vmatpush1.msra.mxu0 %v2746
    %3004 = vmatprep.subr.mxu0 %v2743
    %3005 = vmatpush1.msra.mxu0 %v2742
    %3006 = vmatprep.subr.mxu0 %v2739
    %3007 = vmatpush1.msra.mxu0 %v2738
    %3008 = vmatprep.subr.mxu0 0.0
    %3009 = vmatpush2.msra.mxu0 0.0
    %3010 = vmatprep.subr.mxu0 0.0
    %3011 = vmatpush2.msra.mxu0 0.0
    %3012 = vmatprep.subr.mxu0 0.0
    %3013 = vmatpush2.msra.mxu0 0.0
    %3014 = vmatprep.subr.mxu0 0.0
    %3015 = vmatpush2.msra.mxu0 0.0
    %3016 = vmatprep.subr.mxu0 0.0
    %3017 = vmatpush2.msra.mxu0 0.0
    %3018 = vmatprep.subr.mxu0 0.0
    %3019 = vmatpush2.msra.mxu0 0.0
    %3020 = vmatprep.subr.mxu0 0.0
    %3021 = vmatpush2.msra.mxu0 0.0
    %3022 = vmatprep.subr.mxu0 0.0
    %3023 = vmatpush2.msra.mxu0 0.0
    %3024 = vmatprep.subr.mxu0 0.0
    %3025 = vmatpush2.msra.mxu0 0.0
    %3026 = vmatprep.subr.mxu0 0.0
    %3027 = vmatpush2.msra.mxu0 0.0
    %3028 = vmatprep.subr.mxu0 0.0
    %3029 = vmatpush2.msra.mxu0 0.0
    %3030 = vmatprep.subr.mxu0 0.0
    %3031 = vmatpush2.msra.mxu0 0.0
    %3032 = vmatprep.subr.mxu0 0.0
    %3033 = vmatpush2.msra.mxu0 0.0
    %3034 = vmatprep.subr.mxu0 0.0
    %3035 = vmatpush2.msra.mxu0 0.0
    %3036 = vmatprep.subr.mxu0 0.0
    %3037 = vmatpush2.msra.mxu0 0.0
    %3038 = vmatprep.subr.mxu0 0.0
    %3039 = vmatpush2.msra.mxu0 0.0
    %3040 = vmatprep.mubr.f32.mxu0 0.0
    %3041 = vmatmul.mubr.f32.gmra.mxu0 %v2971
    %v3042 = vpop.f32.mrf.mxu0
    %v3043 = vadd.f32 0.0, %v3042
    %v3044 = vpop.f32.mrf.mxu0
    %v3045 = vadd.f32 0.0, %v3044
    %3046 = vdwg.mxu0
    %3047 = vmatprep.subr.mxu0 %v2801
    %3048 = vmatpush1.msra.mxu0 %v2800
    %3049 = vmatprep.subr.mxu0 %v2797
    %3050 = vmatpush1.msra.mxu0 %v2796
    %3051 = vmatprep.subr.mxu0 %v2793
    %3052 = vmatpush1.msra.mxu0 %v2792
    %3053 = vmatprep.subr.mxu0 %v2789
    %3054 = vmatpush1.msra.mxu0 %v2788
    %3055 = vmatprep.subr.mxu0 %v2785
    %3056 = vmatpush1.msra.mxu0 %v2784
    %3057 = vmatprep.subr.mxu0 %v2781
    %3058 = vmatpush1.msra.mxu0 %v2780
    %3059 = vmatprep.subr.mxu0 %v2777
    %3060 = vmatpush1.msra.mxu0 %v2776
    %3061 = vmatprep.subr.mxu0 %v2773
    %3062 = vmatpush1.msra.mxu0 %v2772
    %3063 = vmatprep.subr.mxu0 %v2769
    %3064 = vmatpush1.msra.mxu0 %v2768
    %3065 = vmatprep.subr.mxu0 %v2765
    %3066 = vmatpush1.msra.mxu0 %v2764
    %3067 = vmatprep.subr.mxu0 %v2761
    %3068 = vmatpush1.msra.mxu0 %v2760
    %3069 = vmatprep.subr.mxu0 %v2757
    %3070 = vmatpush1.msra.mxu0 %v2756
    %3071 = vmatprep.subr.mxu0 %v2753
    %3072 = vmatpush1.msra.mxu0 %v2752
    %3073 = vmatprep.subr.mxu0 %v2749
    %3074 = vmatpush1.msra.mxu0 %v2748
    %3075 = vmatprep.subr.mxu0 %v2745
    %3076 = vmatpush1.msra.mxu0 %v2744
    %3077 = vmatprep.subr.mxu0 %v2741
    %3078 = vmatpush1.msra.mxu0 %v2740
    %3079 = vmatprep.subr.mxu0 0.0
    %3080 = vmatpush2.msra.mxu0 0.0
    %3081 = vmatprep.subr.mxu0 0.0
    %3082 = vmatpush2.msra.mxu0 0.0
    %3083 = vmatprep.subr.mxu0 0.0
    %3084 = vmatpush2.msra.mxu0 0.0
    %3085 = vmatprep.subr.mxu0 0.0
    %3086 = vmatpush2.msra.mxu0 0.0
    %3087 = vmatprep.subr.mxu0 0.0
    %3088 = vmatpush2.msra.mxu0 0.0
    %3089 = vmatprep.subr.mxu0 0.0
    %3090 = vmatpush2.msra.mxu0 0.0
    %3091 = vmatprep.subr.mxu0 0.0
    %3092 = vmatpush2.msra.mxu0 0.0
    %3093 = vmatprep.subr.mxu0 0.0
    %3094 = vmatpush2.msra.mxu0 0.0
    %3095 = vmatprep.subr.mxu0 0.0
    %3096 = vmatpush2.msra.mxu0 0.0
    %3097 = vmatprep.subr.mxu0 0.0
    %3098 = vmatpush2.msra.mxu0 0.0
    %3099 = vmatprep.subr.mxu0 0.0
    %3100 = vmatpush2.msra.mxu0 0.0
    %3101 = vmatprep.subr.mxu0 0.0
    %3102 = vmatpush2.msra.mxu0 0.0
    %3103 = vmatprep.subr.mxu0 0.0
    %3104 = vmatpush2.msra.mxu0 0.0
    %3105 = vmatprep.subr.mxu0 0.0
    %3106 = vmatpush2.msra.mxu0 0.0
    %3107 = vmatprep.subr.mxu0 0.0
    %3108 = vmatpush2.msra.mxu0 0.0
    %3109 = vmatprep.subr.mxu0 0.0
    %3110 = vmatpush2.msra.mxu0 0.0
    %3111 = vmatprep.mubr.f32.mxu0 0.0
    %3112 = vmatmul.mubr.f32.gmra.mxu0 %v2971
    %v3113 = vpop.f32.mrf.mxu0
    %v3114 = vadd.f32 0.0, %v3113
    %v3115 = vpop.f32.mrf.mxu0
    %v3116 = vadd.f32 0.0, %v3115
    %3117 = vdwg.mxu0
    %v3118 = vadd.f32 %v2972, %v3043
    %v3119 = vadd.f32 %v2973, %v3045
    %v3120 = vadd.f32 %v2974, %v3114
    %v3121 = vadd.f32 %v2975, %v3116
    %v3122 = vxor.u32 %v3118, 2147483648
    %v3123 = vmul.f32 %v3122, 1.442695
    %v3124 = vpow.pop %v3123
    %v3125 = vadd.f32 %v3124, 1.0
    %v3126 = vrcp.pop %v3125
    %v3127 = vmul.f32 1.0, %v3126
    %v3128 = vxor.u32 %v3119, 2147483648
    %v3129 = vmul.f32 %v3128, 1.442695
    %v3130 = vpow.pop %v3129
    %v3131 = vadd.f32 %v3130, 1.0
    %v3132 = vrcp.pop %v3131
    %v3133 = vmul.f32 1.0, %v3132
    %v3134 = vtanh.pop %v3120
    %v3135 = vxor.u32 %v3121, 2147483648
    %v3136 = vmul.f32 %v3135, 1.442695
    %v3137 = vpow.pop %v3136
    %v3138 = vadd.f32 %v3137, 1.0
    %v3139 = vrcp.pop %v3138
    %v3140 = vmul.f32 1.0, %v3139
    %v3141 = vmul.f32 %v3133, %v2969
    %v3142 = vmul.f32 %v3127, %v3134
    %v3143 = vadd.f32 %v3141, %v3142
    %v3144 = vtanh.pop %v3143
    %v3145 = vmul.f32 %v3140, %v3144
    %v3146 = vld [vmem:[%s930] sm:$0xff]
    %v3147 = vld [vmem:[%s930 + $0x8] sm:$0xff]
    %v3148 = vld [vmem:[%s930 + $0x10] sm:$0xff]
    %v3149 = vld [vmem:[%s930 + $0x18] sm:$0xff]
    %3150 = vmatprep.subr.mxu0 %v2799
    %3151 = vmatpush1.msra.mxu0 %v2798
    %3152 = vmatprep.subr.mxu0 %v2795
    %3153 = vmatpush1.msra.mxu0 %v2794
    %3154 = vmatprep.subr.mxu0 %v2791
    %3155 = vmatpush1.msra.mxu0 %v2790
    %3156 = vmatprep.subr.mxu0 %v2787
    %3157 = vmatpush1.msra.mxu0 %v2786
    %3158 = vmatprep.subr.mxu0 %v2783
    %3159 = vmatpush1.msra.mxu0 %v2782
    %3160 = vmatprep.subr.mxu0 %v2779
    %3161 = vmatpush1.msra.mxu0 %v2778
    %3162 = vmatprep.subr.mxu0 %v2775
    %3163 = vmatpush1.msra.mxu0 %v2774
    %3164 = vmatprep.subr.mxu0 %v2771
    %3165 = vmatpush1.msra.mxu0 %v2770
    %3166 = vmatprep.subr.mxu0 %v2767
    %3167 = vmatpush1.msra.mxu0 %v2766
    %3168 = vmatprep.subr.mxu0 %v2763
    %3169 = vmatpush1.msra.mxu0 %v2762
    %3170 = vmatprep.subr.mxu0 %v2759
    %3171 = vmatpush1.msra.mxu0 %v2758
    %3172 = vmatprep.subr.mxu0 %v2755
    %3173 = vmatpush1.msra.mxu0 %v2754
    %3174 = vmatprep.subr.mxu0 %v2751
    %3175 = vmatpush1.msra.mxu0 %v2750
    %3176 = vmatprep.subr.mxu0 %v2747
    %3177 = vmatpush1.msra.mxu0 %v2746
    %3178 = vmatprep.subr.mxu0 %v2743
    %3179 = vmatpush1.msra.mxu0 %v2742
    %3180 = vmatprep.subr.mxu0 %v2739
    %3181 = vmatpush1.msra.mxu0 %v2738
    %3182 = vmatprep.subr.mxu0 0.0
    %3183 = vmatpush2.msra.mxu0 0.0
    %3184 = vmatprep.subr.mxu0 0.0
    %3185 = vmatpush2.msra.mxu0 0.0
    %3186 = vmatprep.subr.mxu0 0.0
    %3187 = vmatpush2.msra.mxu0 0.0
    %3188 = vmatprep.subr.mxu0 0.0
    %3189 = vmatpush2.msra.mxu0 0.0
    %3190 = vmatprep.subr.mxu0 0.0
    %3191 = vmatpush2.msra.mxu0 0.0
    %3192 = vmatprep.subr.mxu0 0.0
    %3193 = vmatpush2.msra.mxu0 0.0
    %3194 = vmatprep.subr.mxu0 0.0
    %3195 = vmatpush2.msra.mxu0 0.0
    %3196 = vmatprep.subr.mxu0 0.0
    %3197 = vmatpush2.msra.mxu0 0.0
    %3198 = vmatprep.subr.mxu0 0.0
    %3199 = vmatpush2.msra.mxu0 0.0
    %3200 = vmatprep.subr.mxu0 0.0
    %3201 = vmatpush2.msra.mxu0 0.0
    %3202 = vmatprep.subr.mxu0 0.0
    %3203 = vmatpush2.msra.mxu0 0.0
    %3204 = vmatprep.subr.mxu0 0.0
    %3205 = vmatpush2.msra.mxu0 0.0
    %3206 = vmatprep.subr.mxu0 0.0
    %3207 = vmatpush2.msra.mxu0 0.0
    %3208 = vmatprep.subr.mxu0 0.0
    %3209 = vmatpush2.msra.mxu0 0.0
    %3210 = vmatprep.subr.mxu0 0.0
    %3211 = vmatpush2.msra.mxu0 0.0
    %3212 = vmatprep.subr.mxu0 0.0
    %3213 = vmatpush2.msra.mxu0 0.0
    %3214 = vmatprep.mubr.f32.mxu0 0.0
    %3215 = vmatmul.mubr.f32.gmra.mxu0 %v3145
    %v3216 = vpop.f32.mrf.mxu0
    %v3217 = vadd.f32 0.0, %v3216
    %v3218 = vpop.f32.mrf.mxu0
    %v3219 = vadd.f32 0.0, %v3218
    %3220 = vdwg.mxu0
    %3221 = vmatprep.subr.mxu0 %v2801
    %3222 = vmatpush1.msra.mxu0 %v2800
    %3223 = vmatprep.subr.mxu0 %v2797
    %3224 = vmatpush1.msra.mxu0 %v2796
    %3225 = vmatprep.subr.mxu0 %v2793
    %3226 = vmatpush1.msra.mxu0 %v2792
    %3227 = vmatprep.subr.mxu0 %v2789
    %3228 = vmatpush1.msra.mxu0 %v2788
    %3229 = vmatprep.subr.mxu0 %v2785
    %3230 = vmatpush1.msra.mxu0 %v2784
    %3231 = vmatprep.subr.mxu0 %v2781
    %3232 = vmatpush1.msra.mxu0 %v2780
    %3233 = vmatprep.subr.mxu0 %v2777
    %3234 = vmatpush1.msra.mxu0 %v2776
    %3235 = vmatprep.subr.mxu0 %v2773
    %3236 = vmatpush1.msra.mxu0 %v2772
    %3237 = vmatprep.subr.mxu0 %v2769
    %3238 = vmatpush1.msra.mxu0 %v2768
    %3239 = vmatprep.subr.mxu0 %v2765
    %3240 = vmatpush1.msra.mxu0 %v2764
    %3241 = vmatprep.subr.mxu0 %v2761
    %3242 = vmatpush1.msra.mxu0 %v2760
    %3243 = vmatprep.subr.mxu0 %v2757
    %3244 = vmatpush1.msra.mxu0 %v2756
    %3245 = vmatprep.subr.mxu0 %v2753
    %3246 = vmatpush1.msra.mxu0 %v2752
    %3247 = vmatprep.subr.mxu0 %v2749
    %3248 = vmatpush1.msra.mxu0 %v2748
    %3249 = vmatprep.subr.mxu0 %v2745
    %3250 = vmatpush1.msra.mxu0 %v2744
    %3251 = vmatprep.subr.mxu0 %v2741
    %3252 = vmatpush1.msra.mxu0 %v2740
    %3253 = vmatprep.subr.mxu0 0.0
    %3254 = vmatpush2.msra.mxu0 0.0
    %3255 = vmatprep.subr.mxu0 0.0
    %3256 = vmatpush2.msra.mxu0 0.0
    %3257 = vmatprep.subr.mxu0 0.0
    %3258 = vmatpush2.msra.mxu0 0.0
    %3259 = vmatprep.subr.mxu0 0.0
    %3260 = vmatpush2.msra.mxu0 0.0
    %3261 = vmatprep.subr.mxu0 0.0
    %3262 = vmatpush2.msra.mxu0 0.0
    %3263 = vmatprep.subr.mxu0 0.0
    %3264 = vmatpush2.msra.mxu0 0.0
    %3265 = vmatprep.subr.mxu0 0.0
    %3266 = vmatpush2.msra.mxu0 0.0
    %3267 = vmatprep.subr.mxu0 0.0
    %3268 = vmatpush2.msra.mxu0 0.0
    %3269 = vmatprep.subr.mxu0 0.0
    %3270 = vmatpush2.msra.mxu0 0.0
    %3271 = vmatprep.subr.mxu0 0.0
    %3272 = vmatpush2.msra.mxu0 0.0
    %3273 = vmatprep.subr.mxu0 0.0
    %3274 = vmatpush2.msra.mxu0 0.0
    %3275 = vmatprep.subr.mxu0 0.0
    %3276 = vmatpush2.msra.mxu0 0.0
    %3277 = vmatprep.subr.mxu0 0.0
    %3278 = vmatpush2.msra.mxu0 0.0
    %3279 = vmatprep.subr.mxu0 0.0
    %3280 = vmatpush2.msra.mxu0 0.0
    %3281 = vmatprep.subr.mxu0 0.0
    %3282 = vmatpush2.msra.mxu0 0.0
    %3283 = vmatprep.subr.mxu0 0.0
    %3284 = vmatpush2.msra.mxu0 0.0
    %3285 = vmatprep.mubr.f32.mxu0 0.0
    %3286 = vmatmul.mubr.f32.gmra.mxu0 %v3145
    %v3287 = vpop.f32.mrf.mxu0
    %v3288 = vadd.f32 0.0, %v3287
    %v3289 = vpop.f32.mrf.mxu0
    %v3290 = vadd.f32 0.0, %v3289
    %3291 = vdwg.mxu0
    %v3292 = vadd.f32 %v3146, %v3217
    %v3293 = vadd.f32 %v3147, %v3219
    %v3294 = vadd.f32 %v3148, %v3288
    %v3295 = vadd.f32 %v3149, %v3290
    %v3296 = vxor.u32 %v3292, 2147483648
    %v3297 = vmul.f32 %v3296, 1.442695
    %v3298 = vpow.pop %v3297
    %v3299 = vadd.f32 %v3298, 1.0
    %v3300 = vrcp.pop %v3299
    %v3301 = vmul.f32 1.0, %v3300
    %v3302 = vxor.u32 %v3293, 2147483648
    %v3303 = vmul.f32 %v3302, 1.442695
    %v3304 = vpow.pop %v3303
    %v3305 = vadd.f32 %v3304, 1.0
    %v3306 = vrcp.pop %v3305
    %v3307 = vmul.f32 1.0, %v3306
    %v3308 = vtanh.pop %v3294
    %v3309 = vxor.u32 %v3295, 2147483648
    %v3310 = vmul.f32 %v3309, 1.442695
    %v3311 = vpow.pop %v3310
    %v3312 = vadd.f32 %v3311, 1.0
    %v3313 = vrcp.pop %v3312
    %v3314 = vmul.f32 1.0, %v3313
    %v3315 = vmul.f32 %v3307, %v3143
    %v3316 = vmul.f32 %v3301, %v3308
    %v3317 = vadd.f32 %v3315, %v3316
    %v3318 = vtanh.pop %v3317
    %v3319 = vmul.f32 %v3314, %v3318
    %v3320 = vld [vmem:[%s1171] sm:$0xff]
    %v3321 = vld [vmem:[%s1171 + $0x8] sm:$0xff]
    %v3322 = vld [vmem:[%s1171 + $0x10] sm:$0xff]
    %v3323 = vld [vmem:[%s1171 + $0x18] sm:$0xff]
    %3324 = vmatprep.subr.mxu0 %v2799
    %3325 = vmatpush1.msra.mxu0 %v2798
    %3326 = vmatprep.subr.mxu0 %v2795
    %3327 = vmatpush1.msra.mxu0 %v2794
    %3328 = vmatprep.subr.mxu0 %v2791
    %3329 = vmatpush1.msra.mxu0 %v2790
    %3330 = vmatprep.subr.mxu0 %v2787
    %3331 = vmatpush1.msra.mxu0 %v2786
    %3332 = vmatprep.subr.mxu0 %v2783
    %3333 = vmatpush1.msra.mxu0 %v2782
    %3334 = vmatprep.subr.mxu0 %v2779
    %3335 = vmatpush1.msra.mxu0 %v2778
    %3336 = vmatprep.subr.mxu0 %v2775
    %3337 = vmatpush1.msra.mxu0 %v2774
    %3338 = vmatprep.subr.mxu0 %v2771
    %3339 = vmatpush1.msra.mxu0 %v2770
    %3340 = vmatprep.subr.mxu0 %v2767
    %3341 = vmatpush1.msra.mxu0 %v2766
    %3342 = vmatprep.subr.mxu0 %v2763
    %3343 = vmatpush1.msra.mxu0 %v2762
    %3344 = vmatprep.subr.mxu0 %v2759
    %3345 = vmatpush1.msra.mxu0 %v2758
    %3346 = vmatprep.subr.mxu0 %v2755
    %3347 = vmatpush1.msra.mxu0 %v2754
    %3348 = vmatprep.subr.mxu0 %v2751
    %3349 = vmatpush1.msra.mxu0 %v2750
    %3350 = vmatprep.subr.mxu0 %v2747
    %3351 = vmatpush1.msra.mxu0 %v2746
    %3352 = vmatprep.subr.mxu0 %v2743
    %3353 = vmatpush1.msra.mxu0 %v2742
    %3354 = vmatprep.subr.mxu0 %v2739
    %3355 = vmatpush1.msra.mxu0 %v2738
    %3356 = vmatprep.subr.mxu0 0.0
    %3357 = vmatpush2.msra.mxu0 0.0
    %3358 = vmatprep.subr.mxu0 0.0
    %3359 = vmatpush2.msra.mxu0 0.0
    %3360 = vmatprep.subr.mxu0 0.0
    %3361 = vmatpush2.msra.mxu0 0.0
    %3362 = vmatprep.subr.mxu0 0.0
    %3363 = vmatpush2.msra.mxu0 0.0
    %3364 = vmatprep.subr.mxu0 0.0
    %3365 = vmatpush2.msra.mxu0 0.0
    %3366 = vmatprep.subr.mxu0 0.0
    %3367 = vmatpush2.msra.mxu0 0.0
    %3368 = vmatprep.subr.mxu0 0.0
    %3369 = vmatpush2.msra.mxu0 0.0
    %3370 = vmatprep.subr.mxu0 0.0
    %3371 = vmatpush2.msra.mxu0 0.0
    %3372 = vmatprep.subr.mxu0 0.0
    %3373 = vmatpush2.msra.mxu0 0.0
    %3374 = vmatprep.subr.mxu0 0.0
    %3375 = vmatpush2.msra.mxu0 0.0
    %3376 = vmatprep.subr.mxu0 0.0
    %3377 = vmatpush2.msra.mxu0 0.0
    %3378 = vmatprep.subr.mxu0 0.0
    %3379 = vmatpush2.msra.mxu0 0.0
    %3380 = vmatprep.subr.mxu0 0.0
    %3381 = vmatpush2.msra.mxu0 0.0
    %3382 = vmatprep.subr.mxu0 0.0
    %3383 = vmatpush2.msra.mxu0 0.0
    %3384 = vmatprep.subr.mxu0 0.0
    %3385 = vmatpush2.msra.mxu0 0.0
    %3386 = vmatprep.subr.mxu0 0.0
    %3387 = vmatpush2.msra.mxu0 0.0
    %3388 = vmatprep.mubr.f32.mxu0 0.0
    %3389 = vmatmul.mubr.f32.gmra.mxu0 %v3319
    %v3390 = vpop.f32.mrf.mxu0
    %v3391 = vadd.f32 0.0, %v3390
    %v3392 = vpop.f32.mrf.mxu0
    %v3393 = vadd.f32 0.0, %v3392
    %3394 = vdwg.mxu0
    %3395 = vmatprep.subr.mxu0 %v2801
    %3396 = vmatpush1.msra.mxu0 %v2800
    %3397 = vmatprep.subr.mxu0 %v2797
    %3398 = vmatpush1.msra.mxu0 %v2796
    %3399 = vmatprep.subr.mxu0 %v2793
    %3400 = vmatpush1.msra.mxu0 %v2792
    %3401 = vmatprep.subr.mxu0 %v2789
    %3402 = vmatpush1.msra.mxu0 %v2788
    %3403 = vmatprep.subr.mxu0 %v2785
    %3404 = vmatpush1.msra.mxu0 %v2784
    %3405 = vmatprep.subr.mxu0 %v2781
    %3406 = vmatpush1.msra.mxu0 %v2780
    %3407 = vmatprep.subr.mxu0 %v2777
    %3408 = vmatpush1.msra.mxu0 %v2776
    %3409 = vmatprep.subr.mxu0 %v2773
    %3410 = vmatpush1.msra.mxu0 %v2772
    %3411 = vmatprep.subr.mxu0 %v2769
    %3412 = vmatpush1.msra.mxu0 %v2768
    %3413 = vmatprep.subr.mxu0 %v2765
    %3414 = vmatpush1.msra.mxu0 %v2764
    %3415 = vmatprep.subr.mxu0 %v2761
    %3416 = vmatpush1.msra.mxu0 %v2760
    %3417 = vmatprep.subr.mxu0 %v2757
    %3418 = vmatpush1.msra.mxu0 %v2756
    %3419 = vmatprep.subr.mxu0 %v2753
    %3420 = vmatpush1.msra.mxu0 %v2752
    %3421 = vmatprep.subr.mxu0 %v2749
    %3422 = vmatpush1.msra.mxu0 %v2748
    %3423 = vmatprep.subr.mxu0 %v2745
    %3424 = vmatpush1.msra.mxu0 %v2744
    %3425 = vmatprep.subr.mxu0 %v2741
    %3426 = vmatpush1.msra.mxu0 %v2740
    %3427 = vmatprep.subr.mxu0 0.0
    %3428 = vmatpush2.msra.mxu0 0.0
    %3429 = vmatprep.subr.mxu0 0.0
    %3430 = vmatpush2.msra.mxu0 0.0
    %3431 = vmatprep.subr.mxu0 0.0
    %3432 = vmatpush2.msra.mxu0 0.0
    %3433 = vmatprep.subr.mxu0 0.0
    %3434 = vmatpush2.msra.mxu0 0.0
    %3435 = vmatprep.subr.mxu0 0.0
    %3436 = vmatpush2.msra.mxu0 0.0
    %3437 = vmatprep.subr.mxu0 0.0
    %3438 = vmatpush2.msra.mxu0 0.0
    %3439 = vmatprep.subr.mxu0 0.0
    %3440 = vmatpush2.msra.mxu0 0.0
    %3441 = vmatprep.subr.mxu0 0.0
    %3442 = vmatpush2.msra.mxu0 0.0
    %3443 = vmatprep.subr.mxu0 0.0
    %3444 = vmatpush2.msra.mxu0 0.0
    %3445 = vmatprep.subr.mxu0 0.0
    %3446 = vmatpush2.msra.mxu0 0.0
    %3447 = vmatprep.subr.mxu0 0.0
    %3448 = vmatpush2.msra.mxu0 0.0
    %3449 = vmatprep.subr.mxu0 0.0
    %3450 = vmatpush2.msra.mxu0 0.0
    %3451 = vmatprep.subr.mxu0 0.0
    %3452 = vmatpush2.msra.mxu0 0.0
    %3453 = vmatprep.subr.mxu0 0.0
    %3454 = vmatpush2.msra.mxu0 0.0
    %3455 = vmatprep.subr.mxu0 0.0
    %3456 = vmatpush2.msra.mxu0 0.0
    %3457 = vmatprep.subr.mxu0 0.0
    %3458 = vmatpush2.msra.mxu0 0.0
    %3459 = vmatprep.mubr.f32.mxu0 0.0
    %3460 = vmatmul.mubr.f32.gmra.mxu0 %v3319
    %v3461 = vpop.f32.mrf.mxu0
    %v3462 = vadd.f32 0.0, %v3461
    %v3463 = vpop.f32.mrf.mxu0
    %v3464 = vadd.f32 0.0, %v3463
    %3465 = vdwg.mxu0
    %v3466 = vadd.f32 %v3320, %v3391
    %v3467 = vadd.f32 %v3321, %v3393
    %v3468 = vadd.f32 %v3322, %v3462
    %v3469 = vadd.f32 %v3323, %v3464
    %v3470 = vxor.u32 %v3466, 2147483648
    %v3471 = vmul.f32 %v3470, 1.442695
    %v3472 = vpow.pop %v3471
    %v3473 = vadd.f32 %v3472, 1.0
    %v3474 = vrcp.pop %v3473
    %v3475 = vmul.f32 1.0, %v3474
    %v3476 = vxor.u32 %v3467, 2147483648
    %v3477 = vmul.f32 %v3476, 1.442695
    %v3478 = vpow.pop %v3477
    %v3479 = vadd.f32 %v3478, 1.0
    %v3480 = vrcp.pop %v3479
    %v3481 = vmul.f32 1.0, %v3480
    %v3482 = vtanh.pop %v3468
    %v3483 = vxor.u32 %v3469, 2147483648
    %v3484 = vmul.f32 %v3483, 1.442695
    %v3485 = vpow.pop %v3484
    %v3486 = vadd.f32 %v3485, 1.0
    %v3487 = vrcp.pop %v3486
    %v3488 = vmul.f32 1.0, %v3487
    %v3489 = vmul.f32 %v3481, %v3317
    %v3490 = vmul.f32 %v3475, %v3482
    %v3491 = vadd.f32 %v3489, %v3490
    %v3492 = vtanh.pop %v3491
    %v3493 = vmul.f32 %v3488, %v3492
    %v3494 = vld [vmem:[%s1412] sm:$0xff]
    %v3495 = vld [vmem:[%s1412 + $0x8] sm:$0xff]
    %v3496 = vld [vmem:[%s1412 + $0x10] sm:$0xff]
    %v3497 = vld [vmem:[%s1412 + $0x18] sm:$0xff]
    %3498 = vmatprep.subr.mxu0 %v2799
    %3499 = vmatpush1.msra.mxu0 %v2798
    %3500 = vmatprep.subr.mxu0 %v2795
    %3501 = vmatpush1.msra.mxu0 %v2794
    %3502 = vmatprep.subr.mxu0 %v2791
    %3503 = vmatpush1.msra.mxu0 %v2790
    %3504 = vmatprep.subr.mxu0 %v2787
    %3505 = vmatpush1.msra.mxu0 %v2786
    %3506 = vmatprep.subr.mxu0 %v2783
    %3507 = vmatpush1.msra.mxu0 %v2782
    %3508 = vmatprep.subr.mxu0 %v2779
    %3509 = vmatpush1.msra.mxu0 %v2778
    %3510 = vmatprep.subr.mxu0 %v2775
    %3511 = vmatpush1.msra.mxu0 %v2774
    %3512 = vmatprep.subr.mxu0 %v2771
    %3513 = vmatpush1.msra.mxu0 %v2770
    %3514 = vmatprep.subr.mxu0 %v2767
    %3515 = vmatpush1.msra.mxu0 %v2766
    %3516 = vmatprep.subr.mxu0 %v2763
    %3517 = vmatpush1.msra.mxu0 %v2762
    %3518 = vmatprep.subr.mxu0 %v2759
    %3519 = vmatpush1.msra.mxu0 %v2758
    %3520 = vmatprep.subr.mxu0 %v2755
    %3521 = vmatpush1.msra.mxu0 %v2754
    %3522 = vmatprep.subr.mxu0 %v2751
    %3523 = vmatpush1.msra.mxu0 %v2750
    %3524 = vmatprep.subr.mxu0 %v2747
    %3525 = vmatpush1.msra.mxu0 %v2746
    %3526 = vmatprep.subr.mxu0 %v2743
    %3527 = vmatpush1.msra.mxu0 %v2742
    %3528 = vmatprep.subr.mxu0 %v2739
    %3529 = vmatpush1.msra.mxu0 %v2738
    %3530 = vmatprep.subr.mxu0 0.0
    %3531 = vmatpush2.msra.mxu0 0.0
    %3532 = vmatprep.subr.mxu0 0.0
    %3533 = vmatpush2.msra.mxu0 0.0
    %3534 = vmatprep.subr.mxu0 0.0
    %3535 = vmatpush2.msra.mxu0 0.0
    %3536 = vmatprep.subr.mxu0 0.0
    %3537 = vmatpush2.msra.mxu0 0.0
    %3538 = vmatprep.subr.mxu0 0.0
    %3539 = vmatpush2.msra.mxu0 0.0
    %3540 = vmatprep.subr.mxu0 0.0
    %3541 = vmatpush2.msra.mxu0 0.0
    %3542 = vmatprep.subr.mxu0 0.0
    %3543 = vmatpush2.msra.mxu0 0.0
    %3544 = vmatprep.subr.mxu0 0.0
    %3545 = vmatpush2.msra.mxu0 0.0
    %3546 = vmatprep.subr.mxu0 0.0
    %3547 = vmatpush2.msra.mxu0 0.0
    %3548 = vmatprep.subr.mxu0 0.0
    %3549 = vmatpush2.msra.mxu0 0.0
    %3550 = vmatprep.subr.mxu0 0.0
    %3551 = vmatpush2.msra.mxu0 0.0
    %3552 = vmatprep.subr.mxu0 0.0
    %3553 = vmatpush2.msra.mxu0 0.0
    %3554 = vmatprep.subr.mxu0 0.0
    %3555 = vmatpush2.msra.mxu0 0.0
    %3556 = vmatprep.subr.mxu0 0.0
    %3557 = vmatpush2.msra.mxu0 0.0
    %3558 = vmatprep.subr.mxu0 0.0
    %3559 = vmatpush2.msra.mxu0 0.0
    %3560 = vmatprep.subr.mxu0 0.0
    %3561 = vmatpush2.msra.mxu0 0.0
    %3562 = vmatprep.mubr.f32.mxu0 0.0
    %3563 = vmatmul.mubr.f32.gmra.mxu0 %v3493
    %v3564 = vpop.f32.mrf.mxu0
    %v3565 = vadd.f32 0.0, %v3564
    %v3566 = vpop.f32.mrf.mxu0
    %v3567 = vadd.f32 0.0, %v3566
    %3568 = vdwg.mxu0
    %3569 = vmatprep.subr.mxu0 %v2801
    %3570 = vmatpush1.msra.mxu0 %v2800
    %3571 = vmatprep.subr.mxu0 %v2797
    %3572 = vmatpush1.msra.mxu0 %v2796
    %3573 = vmatprep.subr.mxu0 %v2793
    %3574 = vmatpush1.msra.mxu0 %v2792
    %3575 = vmatprep.subr.mxu0 %v2789
    %3576 = vmatpush1.msra.mxu0 %v2788
    %3577 = vmatprep.subr.mxu0 %v2785
    %3578 = vmatpush1.msra.mxu0 %v2784
    %3579 = vmatprep.subr.mxu0 %v2781
    %3580 = vmatpush1.msra.mxu0 %v2780
    %3581 = vmatprep.subr.mxu0 %v2777
    %3582 = vmatpush1.msra.mxu0 %v2776
    %3583 = vmatprep.subr.mxu0 %v2773
    %3584 = vmatpush1.msra.mxu0 %v2772
    %3585 = vmatprep.subr.mxu0 %v2769
    %3586 = vmatpush1.msra.mxu0 %v2768
    %3587 = vmatprep.subr.mxu0 %v2765
    %3588 = vmatpush1.msra.mxu0 %v2764
    %3589 = vmatprep.subr.mxu0 %v2761
    %3590 = vmatpush1.msra.mxu0 %v2760
    %3591 = vmatprep.subr.mxu0 %v2757
    %3592 = vmatpush1.msra.mxu0 %v2756
    %3593 = vmatprep.subr.mxu0 %v2753
    %3594 = vmatpush1.msra.mxu0 %v2752
    %3595 = vmatprep.subr.mxu0 %v2749
    %3596 = vmatpush1.msra.mxu0 %v2748
    %3597 = vmatprep.subr.mxu0 %v2745
    %3598 = vmatpush1.msra.mxu0 %v2744
    %3599 = vmatprep.subr.mxu0 %v2741
    %3600 = vmatpush1.msra.mxu0 %v2740
    %3601 = vmatprep.subr.mxu0 0.0
    %3602 = vmatpush2.msra.mxu0 0.0
    %3603 = vmatprep.subr.mxu0 0.0
    %3604 = vmatpush2.msra.mxu0 0.0
    %3605 = vmatprep.subr.mxu0 0.0
    %3606 = vmatpush2.msra.mxu0 0.0
    %3607 = vmatprep.subr.mxu0 0.0
    %3608 = vmatpush2.msra.mxu0 0.0
    %3609 = vmatprep.subr.mxu0 0.0
    %3610 = vmatpush2.msra.mxu0 0.0
    %3611 = vmatprep.subr.mxu0 0.0
    %3612 = vmatpush2.msra.mxu0 0.0
    %3613 = vmatprep.subr.mxu0 0.0
    %3614 = vmatpush2.msra.mxu0 0.0
    %3615 = vmatprep.subr.mxu0 0.0
    %3616 = vmatpush2.msra.mxu0 0.0
    %3617 = vmatprep.subr.mxu0 0.0
    %3618 = vmatpush2.msra.mxu0 0.0
    %3619 = vmatprep.subr.mxu0 0.0
    %3620 = vmatpush2.msra.mxu0 0.0
    %3621 = vmatprep.subr.mxu0 0.0
    %3622 = vmatpush2.msra.mxu0 0.0
    %3623 = vmatprep.subr.mxu0 0.0
    %3624 = vmatpush2.msra.mxu0 0.0
    %3625 = vmatprep.subr.mxu0 0.0
    %3626 = vmatpush2.msra.mxu0 0.0
    %3627 = vmatprep.subr.mxu0 0.0
    %3628 = vmatpush2.msra.mxu0 0.0
    %3629 = vmatprep.subr.mxu0 0.0
    %3630 = vmatpush2.msra.mxu0 0.0
    %3631 = vmatprep.subr.mxu0 0.0
    %3632 = vmatpush2.msra.mxu0 0.0
    %3633 = vmatprep.mubr.f32.mxu0 0.0
    %3634 = vmatmul.mubr.f32.gmra.mxu0 %v3493
    %v3635 = vpop.f32.mrf.mxu0
    %v3636 = vadd.f32 0.0, %v3635
    %v3637 = vpop.f32.mrf.mxu0
    %v3638 = vadd.f32 0.0, %v3637
    %3639 = vdwg.mxu0
    %v3640 = vadd.f32 %v3494, %v3565
    %v3641 = vadd.f32 %v3495, %v3567
    %v3642 = vadd.f32 %v3496, %v3636
    %v3643 = vadd.f32 %v3497, %v3638
    %v3644 = vxor.u32 %v3640, 2147483648
    %v3645 = vmul.f32 %v3644, 1.442695
    %v3646 = vpow.pop %v3645
    %v3647 = vadd.f32 %v3646, 1.0
    %v3648 = vrcp.pop %v3647
    %v3649 = vmul.f32 1.0, %v3648
    %v3650 = vxor.u32 %v3641, 2147483648
    %v3651 = vmul.f32 %v3650, 1.442695
    %v3652 = vpow.pop %v3651
    %v3653 = vadd.f32 %v3652, 1.0
    %v3654 = vrcp.pop %v3653
    %v3655 = vmul.f32 1.0, %v3654
    %v3656 = vtanh.pop %v3642
    %v3657 = vxor.u32 %v3643, 2147483648
    %v3658 = vmul.f32 %v3657, 1.442695
    %v3659 = vpow.pop %v3658
    %v3660 = vadd.f32 %v3659, 1.0
    %v3661 = vrcp.pop %v3660
    %v3662 = vmul.f32 1.0, %v3661
    %v3663 = vmul.f32 %v3655, %v3491
    %v3664 = vmul.f32 %v3649, %v3656
    %v3665 = vadd.f32 %v3663, %v3664
    %v3666 = vtanh.pop %v3665
    %v3667 = vmul.f32 %v3662, %v3666
    %v3668 = vld [vmem:[%s1653] sm:$0xff]
    %v3669 = vld [vmem:[%s1653 + $0x8] sm:$0xff]
    %v3670 = vld [vmem:[%s1653 + $0x10] sm:$0xff]
    %v3671 = vld [vmem:[%s1653 + $0x18] sm:$0xff]
    %3672 = vmatprep.subr.mxu0 %v2799
    %3673 = vmatpush1.msra.mxu0 %v2798
    %3674 = vmatprep.subr.mxu0 %v2795
    %3675 = vmatpush1.msra.mxu0 %v2794
    %3676 = vmatprep.subr.mxu0 %v2791
    %3677 = vmatpush1.msra.mxu0 %v2790
    %3678 = vmatprep.subr.mxu0 %v2787
    %3679 = vmatpush1.msra.mxu0 %v2786
    %3680 = vmatprep.subr.mxu0 %v2783
    %3681 = vmatpush1.msra.mxu0 %v2782
    %3682 = vmatprep.subr.mxu0 %v2779
    %3683 = vmatpush1.msra.mxu0 %v2778
    %3684 = vmatprep.subr.mxu0 %v2775
    %3685 = vmatpush1.msra.mxu0 %v2774
    %3686 = vmatprep.subr.mxu0 %v2771
    %3687 = vmatpush1.msra.mxu0 %v2770
    %3688 = vmatprep.subr.mxu0 %v2767
    %3689 = vmatpush1.msra.mxu0 %v2766
    %3690 = vmatprep.subr.mxu0 %v2763
    %3691 = vmatpush1.msra.mxu0 %v2762
    %3692 = vmatprep.subr.mxu0 %v2759
    %3693 = vmatpush1.msra.mxu0 %v2758
    %3694 = vmatprep.subr.mxu0 %v2755
    %3695 = vmatpush1.msra.mxu0 %v2754
    %3696 = vmatprep.subr.mxu0 %v2751
    %3697 = vmatpush1.msra.mxu0 %v2750
    %3698 = vmatprep.subr.mxu0 %v2747
    %3699 = vmatpush1.msra.mxu0 %v2746
    %3700 = vmatprep.subr.mxu0 %v2743
    %3701 = vmatpush1.msra.mxu0 %v2742
    %3702 = vmatprep.subr.mxu0 %v2739
    %3703 = vmatpush1.msra.mxu0 %v2738
    %3704 = vmatprep.subr.mxu0 0.0
    %3705 = vmatpush2.msra.mxu0 0.0
    %3706 = vmatprep.subr.mxu0 0.0
    %3707 = vmatpush2.msra.mxu0 0.0
    %3708 = vmatprep.subr.mxu0 0.0
    %3709 = vmatpush2.msra.mxu0 0.0
    %3710 = vmatprep.subr.mxu0 0.0
    %3711 = vmatpush2.msra.mxu0 0.0
    %3712 = vmatprep.subr.mxu0 0.0
    %3713 = vmatpush2.msra.mxu0 0.0
    %3714 = vmatprep.subr.mxu0 0.0
    %3715 = vmatpush2.msra.mxu0 0.0
    %3716 = vmatprep.subr.mxu0 0.0
    %3717 = vmatpush2.msra.mxu0 0.0
    %3718 = vmatprep.subr.mxu0 0.0
    %3719 = vmatpush2.msra.mxu0 0.0
    %3720 = vmatprep.subr.mxu0 0.0
    %3721 = vmatpush2.msra.mxu0 0.0
    %3722 = vmatprep.subr.mxu0 0.0
    %3723 = vmatpush2.msra.mxu0 0.0
    %3724 = vmatprep.subr.mxu0 0.0
    %3725 = vmatpush2.msra.mxu0 0.0
    %3726 = vmatprep.subr.mxu0 0.0
    %3727 = vmatpush2.msra.mxu0 0.0
    %3728 = vmatprep.subr.mxu0 0.0
    %3729 = vmatpush2.msra.mxu0 0.0
    %3730 = vmatprep.subr.mxu0 0.0
    %3731 = vmatpush2.msra.mxu0 0.0
    %3732 = vmatprep.subr.mxu0 0.0
    %3733 = vmatpush2.msra.mxu0 0.0
    %3734 = vmatprep.subr.mxu0 0.0
    %3735 = vmatpush2.msra.mxu0 0.0
    %3736 = vmatprep.mubr.f32.mxu0 0.0
    %3737 = vmatmul.mubr.f32.gmra.mxu0 %v3667
    %v3738 = vpop.f32.mrf.mxu0
    %v3739 = vadd.f32 0.0, %v3738
    %v3740 = vpop.f32.mrf.mxu0
    %v3741 = vadd.f32 0.0, %v3740
    %3742 = vdwg.mxu0
    %3743 = vmatprep.subr.mxu0 %v2801
    %3744 = vmatpush1.msra.mxu0 %v2800
    %3745 = vmatprep.subr.mxu0 %v2797
    %3746 = vmatpush1.msra.mxu0 %v2796
    %3747 = vmatprep.subr.mxu0 %v2793
    %3748 = vmatpush1.msra.mxu0 %v2792
    %3749 = vmatprep.subr.mxu0 %v2789
    %3750 = vmatpush1.msra.mxu0 %v2788
    %3751 = vmatprep.subr.mxu0 %v2785
    %3752 = vmatpush1.msra.mxu0 %v2784
    %3753 = vmatprep.subr.mxu0 %v2781
    %3754 = vmatpush1.msra.mxu0 %v2780
    %3755 = vmatprep.subr.mxu0 %v2777
    %3756 = vmatpush1.msra.mxu0 %v2776
    %3757 = vmatprep.subr.mxu0 %v2773
    %3758 = vmatpush1.msra.mxu0 %v2772
    %3759 = vmatprep.subr.mxu0 %v2769
    %3760 = vmatpush1.msra.mxu0 %v2768
    %3761 = vmatprep.subr.mxu0 %v2765
    %3762 = vmatpush1.msra.mxu0 %v2764
    %3763 = vmatprep.subr.mxu0 %v2761
    %3764 = vmatpush1.msra.mxu0 %v2760
    %3765 = vmatprep.subr.mxu0 %v2757
    %3766 = vmatpush1.msra.mxu0 %v2756
    %3767 = vmatprep.subr.mxu0 %v2753
    %3768 = vmatpush1.msra.mxu0 %v2752
    %3769 = vmatprep.subr.mxu0 %v2749
    %3770 = vmatpush1.msra.mxu0 %v2748
    %3771 = vmatprep.subr.mxu0 %v2745
    %3772 = vmatpush1.msra.mxu0 %v2744
    %3773 = vmatprep.subr.mxu0 %v2741
    %3774 = vmatpush1.msra.mxu0 %v2740
    %3775 = vmatprep.subr.mxu0 0.0
    %3776 = vmatpush2.msra.mxu0 0.0
    %3777 = vmatprep.subr.mxu0 0.0
    %3778 = vmatpush2.msra.mxu0 0.0
    %3779 = vmatprep.subr.mxu0 0.0
    %3780 = vmatpush2.msra.mxu0 0.0
    %3781 = vmatprep.subr.mxu0 0.0
    %3782 = vmatpush2.msra.mxu0 0.0
    %3783 = vmatprep.subr.mxu0 0.0
    %3784 = vmatpush2.msra.mxu0 0.0
    %3785 = vmatprep.subr.mxu0 0.0
    %3786 = vmatpush2.msra.mxu0 0.0
    %3787 = vmatprep.subr.mxu0 0.0
    %3788 = vmatpush2.msra.mxu0 0.0
    %3789 = vmatprep.subr.mxu0 0.0
    %3790 = vmatpush2.msra.mxu0 0.0
    %3791 = vmatprep.subr.mxu0 0.0
    %3792 = vmatpush2.msra.mxu0 0.0
    %3793 = vmatprep.subr.mxu0 0.0
    %3794 = vmatpush2.msra.mxu0 0.0
    %3795 = vmatprep.subr.mxu0 0.0
    %3796 = vmatpush2.msra.mxu0 0.0
    %3797 = vmatprep.subr.mxu0 0.0
    %3798 = vmatpush2.msra.mxu0 0.0
    %3799 = vmatprep.subr.mxu0 0.0
    %3800 = vmatpush2.msra.mxu0 0.0
    %3801 = vmatprep.subr.mxu0 0.0
    %3802 = vmatpush2.msra.mxu0 0.0
    %3803 = vmatprep.subr.mxu0 0.0
    %3804 = vmatpush2.msra.mxu0 0.0
    %3805 = vmatprep.subr.mxu0 0.0
    %3806 = vmatpush2.msra.mxu0 0.0
    %3807 = vmatprep.mubr.f32.mxu0 0.0
    %3808 = vmatmul.mubr.f32.gmra.mxu0 %v3667
    %v3809 = vpop.f32.mrf.mxu0
    %v3810 = vadd.f32 0.0, %v3809
    %v3811 = vpop.f32.mrf.mxu0
    %v3812 = vadd.f32 0.0, %v3811
    %3813 = vdwg.mxu0
    %v3814 = vadd.f32 %v3668, %v3739
    %v3815 = vadd.f32 %v3669, %v3741
    %v3816 = vadd.f32 %v3670, %v3810
    %v3817 = vadd.f32 %v3671, %v3812
    %v3818 = vxor.u32 %v3814, 2147483648
    %v3819 = vmul.f32 %v3818, 1.442695
    %v3820 = vpow.pop %v3819
    %v3821 = vadd.f32 %v3820, 1.0
    %v3822 = vrcp.pop %v3821
    %v3823 = vmul.f32 1.0, %v3822
    %v3824 = vxor.u32 %v3815, 2147483648
    %v3825 = vmul.f32 %v3824, 1.442695
    %v3826 = vpow.pop %v3825
    %v3827 = vadd.f32 %v3826, 1.0
    %v3828 = vrcp.pop %v3827
    %v3829 = vmul.f32 1.0, %v3828
    %v3830 = vtanh.pop %v3816
    %v3831 = vxor.u32 %v3817, 2147483648
    %v3832 = vmul.f32 %v3831, 1.442695
    %v3833 = vpow.pop %v3832
    %v3834 = vadd.f32 %v3833, 1.0
    %v3835 = vrcp.pop %v3834
    %v3836 = vmul.f32 1.0, %v3835
    %v3837 = vmul.f32 %v3829, %v3665
    %v3838 = vmul.f32 %v3823, %v3830
    %v3839 = vadd.f32 %v3837, %v3838
    %v3840 = vtanh.pop %v3839
    %v3841 = vmul.f32 %v3836, %v3840
    %v3842 = vld [vmem:[%s1894] sm:$0xff]
    %v3843 = vld [vmem:[%s1894 + $0x8] sm:$0xff]
    %v3844 = vld [vmem:[%s1894 + $0x10] sm:$0xff]
    %v3845 = vld [vmem:[%s1894 + $0x18] sm:$0xff]
    %3846 = vmatprep.subr.mxu0 %v2799
    %3847 = vmatpush1.msra.mxu0 %v2798
    %3848 = vmatprep.subr.mxu0 %v2795
    %3849 = vmatpush1.msra.mxu0 %v2794
    %3850 = vmatprep.subr.mxu0 %v2791
    %3851 = vmatpush1.msra.mxu0 %v2790
    %3852 = vmatprep.subr.mxu0 %v2787
    %3853 = vmatpush1.msra.mxu0 %v2786
    %3854 = vmatprep.subr.mxu0 %v2783
    %3855 = vmatpush1.msra.mxu0 %v2782
    %3856 = vmatprep.subr.mxu0 %v2779
    %3857 = vmatpush1.msra.mxu0 %v2778
    %3858 = vmatprep.subr.mxu0 %v2775
    %3859 = vmatpush1.msra.mxu0 %v2774
    %3860 = vmatprep.subr.mxu0 %v2771
    %3861 = vmatpush1.msra.mxu0 %v2770
    %3862 = vmatprep.subr.mxu0 %v2767
    %3863 = vmatpush1.msra.mxu0 %v2766
    %3864 = vmatprep.subr.mxu0 %v2763
    %3865 = vmatpush1.msra.mxu0 %v2762
    %3866 = vmatprep.subr.mxu0 %v2759
    %3867 = vmatpush1.msra.mxu0 %v2758
    %3868 = vmatprep.subr.mxu0 %v2755
    %3869 = vmatpush1.msra.mxu0 %v2754
    %3870 = vmatprep.subr.mxu0 %v2751
    %3871 = vmatpush1.msra.mxu0 %v2750
    %3872 = vmatprep.subr.mxu0 %v2747
    %3873 = vmatpush1.msra.mxu0 %v2746
    %3874 = vmatprep.subr.mxu0 %v2743
    %3875 = vmatpush1.msra.mxu0 %v2742
    %3876 = vmatprep.subr.mxu0 %v2739
    %3877 = vmatpush1.msra.mxu0 %v2738
    %3878 = vmatprep.subr.mxu0 0.0
    %3879 = vmatpush2.msra.mxu0 0.0
    %3880 = vmatprep.subr.mxu0 0.0
    %3881 = vmatpush2.msra.mxu0 0.0
    %3882 = vmatprep.subr.mxu0 0.0
    %3883 = vmatpush2.msra.mxu0 0.0
    %3884 = vmatprep.subr.mxu0 0.0
    %3885 = vmatpush2.msra.mxu0 0.0
    %3886 = vmatprep.subr.mxu0 0.0
    %3887 = vmatpush2.msra.mxu0 0.0
    %3888 = vmatprep.subr.mxu0 0.0
    %3889 = vmatpush2.msra.mxu0 0.0
    %3890 = vmatprep.subr.mxu0 0.0
    %3891 = vmatpush2.msra.mxu0 0.0
    %3892 = vmatprep.subr.mxu0 0.0
    %3893 = vmatpush2.msra.mxu0 0.0
    %3894 = vmatprep.subr.mxu0 0.0
    %3895 = vmatpush2.msra.mxu0 0.0
    %3896 = vmatprep.subr.mxu0 0.0
    %3897 = vmatpush2.msra.mxu0 0.0
    %3898 = vmatprep.subr.mxu0 0.0
    %3899 = vmatpush2.msra.mxu0 0.0
    %3900 = vmatprep.subr.mxu0 0.0
    %3901 = vmatpush2.msra.mxu0 0.0
    %3902 = vmatprep.subr.mxu0 0.0
    %3903 = vmatpush2.msra.mxu0 0.0
    %3904 = vmatprep.subr.mxu0 0.0
    %3905 = vmatpush2.msra.mxu0 0.0
    %3906 = vmatprep.subr.mxu0 0.0
    %3907 = vmatpush2.msra.mxu0 0.0
    %3908 = vmatprep.subr.mxu0 0.0
    %3909 = vmatpush2.msra.mxu0 0.0
    %3910 = vmatprep.mubr.f32.mxu0 0.0
    %3911 = vmatmul.mubr.f32.gmra.mxu0 %v3841
    %v3912 = vpop.f32.mrf.mxu0
    %v3913 = vadd.f32 0.0, %v3912
    %v3914 = vpop.f32.mrf.mxu0
    %v3915 = vadd.f32 0.0, %v3914
    %3916 = vdwg.mxu0
    %3917 = vmatprep.subr.mxu0 %v2801
    %3918 = vmatpush1.msra.mxu0 %v2800
    %3919 = vmatprep.subr.mxu0 %v2797
    %3920 = vmatpush1.msra.mxu0 %v2796
    %3921 = vmatprep.subr.mxu0 %v2793
    %3922 = vmatpush1.msra.mxu0 %v2792
    %3923 = vmatprep.subr.mxu0 %v2789
    %3924 = vmatpush1.msra.mxu0 %v2788
    %3925 = vmatprep.subr.mxu0 %v2785
    %3926 = vmatpush1.msra.mxu0 %v2784
    %3927 = vmatprep.subr.mxu0 %v2781
    %3928 = vmatpush1.msra.mxu0 %v2780
    %3929 = vmatprep.subr.mxu0 %v2777
    %3930 = vmatpush1.msra.mxu0 %v2776
    %3931 = vmatprep.subr.mxu0 %v2773
    %3932 = vmatpush1.msra.mxu0 %v2772
    %3933 = vmatprep.subr.mxu0 %v2769
    %3934 = vmatpush1.msra.mxu0 %v2768
    %3935 = vmatprep.subr.mxu0 %v2765
    %3936 = vmatpush1.msra.mxu0 %v2764
    %3937 = vmatprep.subr.mxu0 %v2761
    %3938 = vmatpush1.msra.mxu0 %v2760
    %3939 = vmatprep.subr.mxu0 %v2757
    %3940 = vmatpush1.msra.mxu0 %v2756
    %3941 = vmatprep.subr.mxu0 %v2753
    %3942 = vmatpush1.msra.mxu0 %v2752
    %3943 = vmatprep.subr.mxu0 %v2749
    %3944 = vmatpush1.msra.mxu0 %v2748
    %3945 = vmatprep.subr.mxu0 %v2745
    %3946 = vmatpush1.msra.mxu0 %v2744
    %3947 = vmatprep.subr.mxu0 %v2741
    %3948 = vmatpush1.msra.mxu0 %v2740
    %3949 = vmatprep.subr.mxu0 0.0
    %3950 = vmatpush2.msra.mxu0 0.0
    %3951 = vmatprep.subr.mxu0 0.0
    %3952 = vmatpush2.msra.mxu0 0.0
    %3953 = vmatprep.subr.mxu0 0.0
    %3954 = vmatpush2.msra.mxu0 0.0
    %3955 = vmatprep.subr.mxu0 0.0
    %3956 = vmatpush2.msra.mxu0 0.0
    %3957 = vmatprep.subr.mxu0 0.0
    %3958 = vmatpush2.msra.mxu0 0.0
    %3959 = vmatprep.subr.mxu0 0.0
    %3960 = vmatpush2.msra.mxu0 0.0
    %3961 = vmatprep.subr.mxu0 0.0
    %3962 = vmatpush2.msra.mxu0 0.0
    %3963 = vmatprep.subr.mxu0 0.0
    %3964 = vmatpush2.msra.mxu0 0.0
    %3965 = vmatprep.subr.mxu0 0.0
    %3966 = vmatpush2.msra.mxu0 0.0
    %3967 = vmatprep.subr.mxu0 0.0
    %3968 = vmatpush2.msra.mxu0 0.0
    %3969 = vmatprep.subr.mxu0 0.0
    %3970 = vmatpush2.msra.mxu0 0.0
    %3971 = vmatprep.subr.mxu0 0.0
    %3972 = vmatpush2.msra.mxu0 0.0
    %3973 = vmatprep.subr.mxu0 0.0
    %3974 = vmatpush2.msra.mxu0 0.0
    %3975 = vmatprep.subr.mxu0 0.0
    %3976 = vmatpush2.msra.mxu0 0.0
    %3977 = vmatprep.subr.mxu0 0.0
    %3978 = vmatpush2.msra.mxu0 0.0
    %3979 = vmatprep.subr.mxu0 0.0
    %3980 = vmatpush2.msra.mxu0 0.0
    %3981 = vmatprep.mubr.f32.mxu0 0.0
    %3982 = vmatmul.mubr.f32.gmra.mxu0 %v3841
    %v3983 = vpop.f32.mrf.mxu0
    %v3984 = vadd.f32 0.0, %v3983
    %v3985 = vpop.f32.mrf.mxu0
    %v3986 = vadd.f32 0.0, %v3985
    %3987 = vdwg.mxu0
    %v3988 = vadd.f32 %v3842, %v3913
    %v3989 = vadd.f32 %v3843, %v3915
    %v3990 = vadd.f32 %v3844, %v3984
    %v3991 = vadd.f32 %v3845, %v3986
    %v3992 = vxor.u32 %v3988, 2147483648
    %v3993 = vmul.f32 %v3992, 1.442695
    %v3994 = vpow.pop %v3993
    %v3995 = vadd.f32 %v3994, 1.0
    %v3996 = vrcp.pop %v3995
    %v3997 = vmul.f32 1.0, %v3996
    %v3998 = vxor.u32 %v3989, 2147483648
    %v3999 = vmul.f32 %v3998, 1.442695
    %v4000 = vpow.pop %v3999
    %v4001 = vadd.f32 %v4000, 1.0
    %v4002 = vrcp.pop %v4001
    %v4003 = vmul.f32 1.0, %v4002
    %v4004 = vtanh.pop %v3990
    %v4005 = vxor.u32 %v3991, 2147483648
    %v4006 = vmul.f32 %v4005, 1.442695
    %v4007 = vpow.pop %v4006
    %v4008 = vadd.f32 %v4007, 1.0
    %v4009 = vrcp.pop %v4008
    %v4010 = vmul.f32 1.0, %v4009
    %v4011 = vmul.f32 %v4003, %v3839
    %v4012 = vmul.f32 %v3997, %v4004
    %v4013 = vadd.f32 %v4011, %v4012
    %v4014 = vtanh.pop %v4013
    %v4015 = vmul.f32 %v4010, %v4014
    %v4016 = vld [vmem:[%s2135] sm:$0xff]
    %v4017 = vld [vmem:[%s2135 + $0x8] sm:$0xff]
    %v4018 = vld [vmem:[%s2135 + $0x10] sm:$0xff]
    %v4019 = vld [vmem:[%s2135 + $0x18] sm:$0xff]
    %4020 = vmatprep.subr.mxu0 %v2799
    %4021 = vmatpush1.msra.mxu0 %v2798
    %4022 = vmatprep.subr.mxu0 %v2795
    %4023 = vmatpush1.msra.mxu0 %v2794
    %4024 = vmatprep.subr.mxu0 %v2791
    %4025 = vmatpush1.msra.mxu0 %v2790
    %4026 = vmatprep.subr.mxu0 %v2787
    %4027 = vmatpush1.msra.mxu0 %v2786
    %4028 = vmatprep.subr.mxu0 %v2783
    %4029 = vmatpush1.msra.mxu0 %v2782
    %4030 = vmatprep.subr.mxu0 %v2779
    %4031 = vmatpush1.msra.mxu0 %v2778
    %4032 = vmatprep.subr.mxu0 %v2775
    %4033 = vmatpush1.msra.mxu0 %v2774
    %4034 = vmatprep.subr.mxu0 %v2771
    %4035 = vmatpush1.msra.mxu0 %v2770
    %4036 = vmatprep.subr.mxu0 %v2767
    %4037 = vmatpush1.msra.mxu0 %v2766
    %4038 = vmatprep.subr.mxu0 %v2763
    %4039 = vmatpush1.msra.mxu0 %v2762
    %4040 = vmatprep.subr.mxu0 %v2759
    %4041 = vmatpush1.msra.mxu0 %v2758
    %4042 = vmatprep.subr.mxu0 %v2755
    %4043 = vmatpush1.msra.mxu0 %v2754
    %4044 = vmatprep.subr.mxu0 %v2751
    %4045 = vmatpush1.msra.mxu0 %v2750
    %4046 = vmatprep.subr.mxu0 %v2747
    %4047 = vmatpush1.msra.mxu0 %v2746
    %4048 = vmatprep.subr.mxu0 %v2743
    %4049 = vmatpush1.msra.mxu0 %v2742
    %4050 = vmatprep.subr.mxu0 %v2739
    %4051 = vmatpush1.msra.mxu0 %v2738
    %4052 = vmatprep.subr.mxu0 0.0
    %4053 = vmatpush2.msra.mxu0 0.0
    %4054 = vmatprep.subr.mxu0 0.0
    %4055 = vmatpush2.msra.mxu0 0.0
    %4056 = vmatprep.subr.mxu0 0.0
    %4057 = vmatpush2.msra.mxu0 0.0
    %4058 = vmatprep.subr.mxu0 0.0
    %4059 = vmatpush2.msra.mxu0 0.0
    %4060 = vmatprep.subr.mxu0 0.0
    %4061 = vmatpush2.msra.mxu0 0.0
    %4062 = vmatprep.subr.mxu0 0.0
    %4063 = vmatpush2.msra.mxu0 0.0
    %4064 = vmatprep.subr.mxu0 0.0
    %4065 = vmatpush2.msra.mxu0 0.0
    %4066 = vmatprep.subr.mxu0 0.0
    %4067 = vmatpush2.msra.mxu0 0.0
    %4068 = vmatprep.subr.mxu0 0.0
    %4069 = vmatpush2.msra.mxu0 0.0
    %4070 = vmatprep.subr.mxu0 0.0
    %4071 = vmatpush2.msra.mxu0 0.0
    %4072 = vmatprep.subr.mxu0 0.0
    %4073 = vmatpush2.msra.mxu0 0.0
    %4074 = vmatprep.subr.mxu0 0.0
    %4075 = vmatpush2.msra.mxu0 0.0
    %4076 = vmatprep.subr.mxu0 0.0
    %4077 = vmatpush2.msra.mxu0 0.0
    %4078 = vmatprep.subr.mxu0 0.0
    %4079 = vmatpush2.msra.mxu0 0.0
    %4080 = vmatprep.subr.mxu0 0.0
    %4081 = vmatpush2.msra.mxu0 0.0
    %4082 = vmatprep.subr.mxu0 0.0
    %4083 = vmatpush2.msra.mxu0 0.0
    %4084 = vmatprep.mubr.f32.mxu0 0.0
    %4085 = vmatmul.mubr.f32.gmra.mxu0 %v4015
    %v4086 = vpop.f32.mrf.mxu0
    %v4087 = vadd.f32 0.0, %v4086
    %v4088 = vpop.f32.mrf.mxu0
    %v4089 = vadd.f32 0.0, %v4088
    %4090 = vdwg.mxu0
    %4091 = vmatprep.subr.mxu0 %v2801
    %4092 = vmatpush1.msra.mxu0 %v2800
    %4093 = vmatprep.subr.mxu0 %v2797
    %4094 = vmatpush1.msra.mxu0 %v2796
    %4095 = vmatprep.subr.mxu0 %v2793
    %4096 = vmatpush1.msra.mxu0 %v2792
    %4097 = vmatprep.subr.mxu0 %v2789
    %4098 = vmatpush1.msra.mxu0 %v2788
    %4099 = vmatprep.subr.mxu0 %v2785
    %4100 = vmatpush1.msra.mxu0 %v2784
    %4101 = vmatprep.subr.mxu0 %v2781
    %4102 = vmatpush1.msra.mxu0 %v2780
    %4103 = vmatprep.subr.mxu0 %v2777
    %4104 = vmatpush1.msra.mxu0 %v2776
    %4105 = vmatprep.subr.mxu0 %v2773
    %4106 = vmatpush1.msra.mxu0 %v2772
    %4107 = vmatprep.subr.mxu0 %v2769
    %4108 = vmatpush1.msra.mxu0 %v2768
    %4109 = vmatprep.subr.mxu0 %v2765
    %4110 = vmatpush1.msra.mxu0 %v2764
    %4111 = vmatprep.subr.mxu0 %v2761
    %4112 = vmatpush1.msra.mxu0 %v2760
    %4113 = vmatprep.subr.mxu0 %v2757
    %4114 = vmatpush1.msra.mxu0 %v2756
    %4115 = vmatprep.subr.mxu0 %v2753
    %4116 = vmatpush1.msra.mxu0 %v2752
    %4117 = vmatprep.subr.mxu0 %v2749
    %4118 = vmatpush1.msra.mxu0 %v2748
    %4119 = vmatprep.subr.mxu0 %v2745
    %4120 = vmatpush1.msra.mxu0 %v2744
    %4121 = vmatprep.subr.mxu0 %v2741
    %4122 = vmatpush1.msra.mxu0 %v2740
    %4123 = vmatprep.subr.mxu0 0.0
    %4124 = vmatpush2.msra.mxu0 0.0
    %4125 = vmatprep.subr.mxu0 0.0
    %4126 = vmatpush2.msra.mxu0 0.0
    %4127 = vmatprep.subr.mxu0 0.0
    %4128 = vmatpush2.msra.mxu0 0.0
    %4129 = vmatprep.subr.mxu0 0.0
    %4130 = vmatpush2.msra.mxu0 0.0
    %4131 = vmatprep.subr.mxu0 0.0
    %4132 = vmatpush2.msra.mxu0 0.0
    %4133 = vmatprep.subr.mxu0 0.0
    %4134 = vmatpush2.msra.mxu0 0.0
    %4135 = vmatprep.subr.mxu0 0.0
    %4136 = vmatpush2.msra.mxu0 0.0
    %4137 = vmatprep.subr.mxu0 0.0
    %4138 = vmatpush2.msra.mxu0 0.0
    %4139 = vmatprep.subr.mxu0 0.0
    %4140 = vmatpush2.msra.mxu0 0.0
    %4141 = vmatprep.subr.mxu0 0.0
    %4142 = vmatpush2.msra.mxu0 0.0
    %4143 = vmatprep.subr.mxu0 0.0
    %4144 = vmatpush2.msra.mxu0 0.0
    %4145 = vmatprep.subr.mxu0 0.0
    %4146 = vmatpush2.msra.mxu0 0.0
    %4147 = vmatprep.subr.mxu0 0.0
    %4148 = vmatpush2.msra.mxu0 0.0
    %4149 = vmatprep.subr.mxu0 0.0
    %4150 = vmatpush2.msra.mxu0 0.0
    %4151 = vmatprep.subr.mxu0 0.0
    %4152 = vmatpush2.msra.mxu0 0.0
    %4153 = vmatprep.subr.mxu0 0.0
    %4154 = vmatpush2.msra.mxu0 0.0
    %4155 = vmatprep.mubr.f32.mxu0 0.0
    %4156 = vmatmul.mubr.f32.gmra.mxu0 %v4015
    %v4157 = vpop.f32.mrf.mxu0
    %v4158 = vadd.f32 0.0, %v4157
    %v4159 = vpop.f32.mrf.mxu0
    %v4160 = vadd.f32 0.0, %v4159
    %4161 = vdwg.mxu0
    %v4162 = vadd.f32 %v4016, %v4087
    %v4163 = vadd.f32 %v4017, %v4089
    %v4164 = vadd.f32 %v4018, %v4158
    %v4165 = vadd.f32 %v4019, %v4160
    %v4166 = vxor.u32 %v4162, 2147483648
    %v4167 = vmul.f32 %v4166, 1.442695
    %v4168 = vpow.pop %v4167
    %v4169 = vadd.f32 %v4168, 1.0
    %v4170 = vrcp.pop %v4169
    %v4171 = vmul.f32 1.0, %v4170
    %v4172 = vxor.u32 %v4163, 2147483648
    %v4173 = vmul.f32 %v4172, 1.442695
    %v4174 = vpow.pop %v4173
    %v4175 = vadd.f32 %v4174, 1.0
    %v4176 = vrcp.pop %v4175
    %v4177 = vmul.f32 1.0, %v4176
    %v4178 = vtanh.pop %v4164
    %v4179 = vxor.u32 %v4165, 2147483648
    %v4180 = vmul.f32 %v4179, 1.442695
    %v4181 = vpow.pop %v4180
    %v4182 = vadd.f32 %v4181, 1.0
    %v4183 = vrcp.pop %v4182
    %v4184 = vmul.f32 1.0, %v4183
    %v4185 = vmul.f32 %v4177, %v4013
    %v4186 = vmul.f32 %v4171, %v4178
    %v4187 = vadd.f32 %v4185, %v4186
    %v4188 = vtanh.pop %v4187
    %v4189 = vmul.f32 %v4184, %v4188
    %s4190 = scalar_lea.vmem %s12, 8
    %4191 = vst [vmem:[%s4190] sm:$0xff] %v4189
    %s4192 = scalar_lea.vmem %s13, 8
    %4193 = vst [vmem:[%s4192] sm:$0xff] %v4187
    %v4194 = vmax.f32 %v4189, 0.0
    %v4195 = vld [vmem:[%s9] sm:$0xff]
    %v4196 = vld [vmem:[%s9 + $0x8] sm:$0xff]
    %v4197 = vld [vmem:[%s9 + $0x10] sm:$0xff]
    %v4198 = vld [vmem:[%s9 + $0x18] sm:$0xff]
    %v4199 = vld [vmem:[%s9 + $0x20] sm:$0xff]
    %v4200 = vld [vmem:[%s9 + $0x28] sm:$0xff]
    %v4201 = vld [vmem:[%s9 + $0x30] sm:$0xff]
    %v4202 = vld [vmem:[%s9 + $0x38] sm:$0xff]
    %v4203 = vld [vmem:[%s9 + $0x40] sm:$0xff]
    %v4204 = vld [vmem:[%s9 + $0x48] sm:$0xff]
    %v4205 = vld [vmem:[%s9 + $0x50] sm:$0xff]
    %v4206 = vld [vmem:[%s9 + $0x58] sm:$0xff]
    %v4207 = vld [vmem:[%s9 + $0x60] sm:$0xff]
    %v4208 = vld [vmem:[%s9 + $0x68] sm:$0xff]
    %v4209 = vld [vmem:[%s9 + $0x70] sm:$0xff]
    %v4210 = vld [vmem:[%s9 + $0x78] sm:$0xff]
    %v4211 = vld [vmem:[%s10] sm:$0x1]
    %v4213 = vlaneseq
    %v4214 = vshrl.u32 %v4213, 7
    %v4215 = vsub.s32 0, %v4214
    %v4216 = vrot.slane %v4211, %v4215
    %4218 = vmatprep.subr.mxu0 0.0
    %4219 = vmatpush1.msra.mxu0 %v4210
    %4220 = vmatprep.subr.mxu0 0.0
    %4221 = vmatpush1.msra.mxu0 %v4209
    %4222 = vmatprep.subr.mxu0 0.0
    %4223 = vmatpush1.msra.mxu0 %v4208
    %4224 = vmatprep.subr.mxu0 0.0
    %4225 = vmatpush1.msra.mxu0 %v4207
    %4226 = vmatprep.subr.mxu0 0.0
    %4227 = vmatpush1.msra.mxu0 %v4206
    %4228 = vmatprep.subr.mxu0 0.0
    %4229 = vmatpush1.msra.mxu0 %v4205
    %4230 = vmatprep.subr.mxu0 0.0
    %4231 = vmatpush1.msra.mxu0 %v4204
    %4232 = vmatprep.subr.mxu0 0.0
    %4233 = vmatpush1.msra.mxu0 %v4203
    %4234 = vmatprep.subr.mxu0 0.0
    %4235 = vmatpush1.msra.mxu0 %v4202
    %4236 = vmatprep.subr.mxu0 0.0
    %4237 = vmatpush1.msra.mxu0 %v4201
    %4238 = vmatprep.subr.mxu0 0.0
    %4239 = vmatpush1.msra.mxu0 %v4200
    %4240 = vmatprep.subr.mxu0 0.0
    %4241 = vmatpush1.msra.mxu0 %v4199
    %4242 = vmatprep.subr.mxu0 0.0
    %4243 = vmatpush1.msra.mxu0 %v4198
    %4244 = vmatprep.subr.mxu0 0.0
    %4245 = vmatpush1.msra.mxu0 %v4197
    %4246 = vmatprep.subr.mxu0 0.0
    %4247 = vmatpush1.msra.mxu0 %v4196
    %4248 = vmatprep.subr.mxu0 0.0
    %4249 = vmatpush1.msra.mxu0 %v4195
    %4250 = vmatprep.subr.mxu0 0.0
    %4251 = vmatpush2.msra.mxu0 0.0
    %4252 = vmatprep.subr.mxu0 0.0
    %4253 = vmatpush2.msra.mxu0 0.0
    %4254 = vmatprep.subr.mxu0 0.0
    %4255 = vmatpush2.msra.mxu0 0.0
    %4256 = vmatprep.subr.mxu0 0.0
    %4257 = vmatpush2.msra.mxu0 0.0
    %4258 = vmatprep.subr.mxu0 0.0
    %4259 = vmatpush2.msra.mxu0 0.0
    %4260 = vmatprep.subr.mxu0 0.0
    %4261 = vmatpush2.msra.mxu0 0.0
    %4262 = vmatprep.subr.mxu0 0.0
    %4263 = vmatpush2.msra.mxu0 0.0
    %4264 = vmatprep.subr.mxu0 0.0
    %4265 = vmatpush2.msra.mxu0 0.0
    %4266 = vmatprep.subr.mxu0 0.0
    %4267 = vmatpush2.msra.mxu0 0.0
    %4268 = vmatprep.subr.mxu0 0.0
    %4269 = vmatpush2.msra.mxu0 0.0
    %4270 = vmatprep.subr.mxu0 0.0
    %4271 = vmatpush2.msra.mxu0 0.0
    %4272 = vmatprep.subr.mxu0 0.0
    %4273 = vmatpush2.msra.mxu0 0.0
    %4274 = vmatprep.subr.mxu0 0.0
    %4275 = vmatpush2.msra.mxu0 0.0
    %4276 = vmatprep.subr.mxu0 0.0
    %4277 = vmatpush2.msra.mxu0 0.0
    %4278 = vmatprep.subr.mxu0 0.0
    %4279 = vmatpush2.msra.mxu0 0.0
    %4280 = vmatprep.subr.mxu0 0.0
    %4281 = vmatpush2.msra.mxu0 0.0
    %4282 = vmatprep.mubr.f32.mxu0 0.0
    %4283 = vmatmul.mubr.f32.gmra.mxu0 %v4194
    %v4284 = vpop.f32.mrf.mxu0
    %v4285 = vadd.f32 %v4216, %v4284
    %v4286 = vpop.f32.mrf.mxu0
    %4287 = vdwg.mxu0
    %4288 = vst [vmem:[%s11] sm:$0xff] %v4285
    // Predicated region
    $region62: #{lstm_net_forward.1} parent=1 // pred_check
      _
    $region63: #{lstm_net_forward.1} parent=1 // pred_check_branch
      %4290 = sbr.rel (0) target = $region65
    $region64: #{lstm_net_forward.1} parent=1 // pred_region
      _
    $region65: #{lstm_net_forward.1} parent=1 // pred_fallthru
      _
    // Predicated region
    $region66: #{lstm_net_forward.1} parent=1 // pred_check
      _
    $region67: #{lstm_net_forward.1} parent=1 // pred_check_branch
      %4292 = sbr.rel (0) target = $region69
    $region68: #{lstm_net_forward.1} parent=1 // pred_region
      _
    $region69: #{lstm_net_forward.1} parent=1 // pred_fallthru
      _
    // Predicated region
    $region70: #{lstm_net_forward.1} parent=1 // pred_check
      _
    $region71: #{lstm_net_forward.1} parent=1 // pred_check_branch
      %4294 = sbr.rel (0) target = $region73
    $region72: #{lstm_net_forward.1} parent=1 // pred_region
      _
    $region73: #{lstm_net_forward.1} parent=1 // pred_fallthru
      _
    // Predicated region
    $region74: #{lstm_net_forward.1} parent=1 // pred_check
      _
    $region75: #{lstm_net_forward.1} parent=1 // pred_check_branch
      %4296 = sbr.rel (0) target = $region77
    $region76: #{lstm_net_forward.1} parent=1 // pred_region
      _
    $region77: #{lstm_net_forward.1} parent=1 // pred_fallthru
      _
    // Predicated region
    $region78: #{lstm_net_forward.1} parent=1 // pred_check
      _
    $region79: #{lstm_net_forward.1} parent=1 // pred_check_branch
      %4298 = sbr.rel (0) target = $region81
    $region80: #{lstm_net_forward.1} parent=1 // pred_region
      _
    $region81: #{lstm_net_forward.1} parent=1 // pred_fallthru
      _
    // Predicated region
    $region82: #{lstm_net_forward.1} parent=1 // pred_check
      _
    $region83: #{lstm_net_forward.1} parent=1 // pred_check_branch
      %4300 = sbr.rel (0) target = $region85
    $region84: #{lstm_net_forward.1} parent=1 // pred_region
      _
    $region85: #{lstm_net_forward.1} parent=1 // pred_fallthru
      _
    %4301 = vsyncpa [#allocation5], 1
    %4302 = vsyncpa [#allocation7], 1
    %4303 = vsyncpa [#allocation10], 1

</llo_original>
